<compile_context>
chip_gen: v5e
topology: v5e:2x2
jax: 0.10.0
libtpu: 0.0.40
codegen_flags: <defaults>
</compile_context>

<pallas_src>
import math
import numpy as np

import jax
import jax.numpy as jnp
from jax.experimental import pallas as pl
from jax.experimental.pallas import tpu as pltpu

# -----------------------------------------------------------------------------
# Module hyper-parameters: SelfRouting2d(A, B, C, D, kernel_size=3, stride=1,
#                                        padding=1, pose_out=True)
# -----------------------------------------------------------------------------
A, B, C, D = 4, 4, 4, 4
K = 3
KK = K * K
KKA = KK * A                        # 36 input capsules per output position
KP = ((KKA + 7) // 8) * 8           # 40: rows per plane, 8-aligned
STRIDE = 1
PAD = 1
KC = KKA * C                        # 144 pose contraction columns
KC_PAD = ((KC + 1 + 7) // 8) * 8    # 152: pose cols + ones (bias) row, 8-aligned


def _recip(x):
    """EUP approximate reciprocal + one Newton-Raphson refinement (~1e-7 rel err)."""
    r = pl.reciprocal(x, approx=True)
    return r * (2.0 - x * r)


# -----------------------------------------------------------------------------
# Pallas kernel: two MXU matmuls (logits incl. bias, pose votes), two-pass softmax
# routing, activation-weighted aggregation.  Everything is (rows, TL), lanes = pos.
# -----------------------------------------------------------------------------
def _self_routing_kernel(pose_ref, a_ref, wl_ref, wv_ref, aout_ref, pout_ref):
    pose = pose_ref[...]        # (KC_PAD, TL): 144 pose rows, 1 ones row (bias), 7 zero
    act = a_ref[...]            # (KP, TL): rows 36..39 are explicit zero pad

    # Two MXU matmuls over the same pose tile.  `votes` has no consumer until the
    # per-b loop, so the scheduler can overlap the softmax math with it.
    logits = jnp.dot(wl_ref[...], pose, preferred_element_type=jnp.float32)  # (B*KP, TL)
    votes = jnp.dot(wv_ref[...], pose, preferred_element_type=jnp.float32)   # (B*D*KP, TL)

    planes = [logits[b * KP:(b + 1) * KP, :] for b in range(B)]   # B x (KP, TL) views

    # Pass 1: softmax statistics over the B output capsules (elementwise across planes).
    m = planes[0]
    for b in range(1, B):
        m = jnp.maximum(m, planes[b])
    s = jnp.exp(planes[0] - m)
    for b in range(1, B):
        s = s + jnp.exp(planes[b] - m)

    # NOTE: matches the PyTorch module exactly -- no epsilon in the divisions; the
    # routing assumes strictly positive input activations.
    a_sum = jnp.sum(act, axis=0, keepdims=True)                    # (1, TL)
    inv_a_sum = _recip(a_sum)
    g = act * _recip(s)        # activation with the softmax denominator folded in once

    a_rows = []
    p_rows = []
    # Pass 2: recompute exp(logit_b - m) per capsule and consume it immediately --
    # nothing plane-sized stays live across b iterations.
    for b in range(B):
        ar_b = jnp.exp(planes[b] - m) * g                          # a * r_b, (KP, TL)
        ar_sum_b = jnp.sum(ar_b, axis=0, keepdims=True)            # (1, TL)
        a_rows.append(ar_sum_b * inv_a_sum)
        coeff_b = ar_b * _recip(ar_sum_b)                          # (KP, TL)
        for d in range(D):
            off = (b * D + d) * KP
            p_rows.append(jnp.sum(coeff_b * votes[off:off + KP, :],
                                  axis=0, keepdims=True))
    # Merged stores: one (B, TL) and one (B*D, TL) write per tile.
    aout_ref[...] = jnp.concatenate(a_rows, axis=0).astype(aout_ref.dtype)
    pout_ref[...] = jnp.concatenate(p_rows, axis=0).astype(pout_ref.dtype)


# -----------------------------------------------------------------------------
# Weight prep: block-diagonal per-capsule weights with b2 folded into a bias column.
#   w_logit row b*KP + k        : W2[k, b, :] at cols k*C..k*C+C-1, b2[k, b] at col KC
#   w_vote  row (b*D+d)*KP + k  : W1[k, b*D+d, :] at cols k*C..k*C+C-1
# All other entries (pad rows / pad cols) are zero.
# -----------------------------------------------------------------------------
def _build_weights(w1, w2, b2):
    eye = jnp.eye(KKA, dtype=jnp.float32)
    w2_bd = jnp.einsum('kbc,kj->bkjc', w2.astype(jnp.float32), eye)     # (B, KKA, KKA, C)
    w2_bd = w2_bd.reshape(B, KKA, KC)
    bias_col = jnp.transpose(b2.astype(jnp.float32))[:, :, None]        # (B, KKA, 1)
    w2_bd = jnp.concatenate([w2_bd, bias_col], axis=-1)                 # (B, KKA, KC+1)
    w2_bd = jnp.pad(w2_bd, ((0, 0), (0, KP - KKA), (0, KC_PAD - (KC + 1))))
    w_logit = w2_bd.reshape(B * KP, KC_PAD)

    w1_bd = jnp.einsum('kqc,kj->qkjc', w1.astype(jnp.float32), eye)     # (B*D, KKA, KKA, C)
    w1_bd = w1_bd.reshape(B * D, KKA, KC)
    w1_bd = jnp.pad(w1_bd, ((0, 0), (0, KP - KKA), (0, KC_PAD - KC)))
    w_vote = w1_bd.reshape(B * D * KP, KC_PAD)
    return w_logit, w_vote


# -----------------------------------------------------------------------------
# Glue: im2col matching torch.nn.functional.unfold (NCHW, channel-major patches)
# -----------------------------------------------------------------------------
def _unfold(x, k, stride, pad):
    b, c, h, w = x.shape
    xp = jnp.pad(x, ((0, 0), (0, 0), (pad, pad), (pad, pad)))
    oh = (h + 2 * pad - k) // stride + 1
    ow = (w + 2 * pad - k) // stride + 1
    patches = []
    for ki in range(k):
        for kj in range(k):
            patches.append(xp[:, :, ki:ki + stride * oh:stride,
                                     kj:kj + stride * ow:stride])
    col = jnp.stack(patches, axis=2)               # (b, c, kk, oh, ow)
    return col.reshape(b, c, k * k, oh * ow), oh, ow


def _choose_tile(total):
    """Largest lane-aligned tile <= 2048 dividing `total`, with >=2 grid steps when possible."""
    if total % 128 != 0:
        return total                               # single full-width block (== array dim)
    best = 128
    for cand in range(2048, 127, -128):
        if total % cand == 0:
            best = cand
            break
    if total // best < 2 and best % 256 == 0:      # keep both v7x TensorCores busy
        best //= 2
    return best


@jax.jit
def self_routing2d(a_in, pose_in, w1, w2, b2):
    bsz = a_in.shape[0]

    # --- XLA glue: im2col + capsule re-layout; batch folded into the lane axis so all
    #     kernel tiles are 128-lane dense and outputs come back channel-major.
    pose_col, oh, ow = _unfold(pose_in, K, STRIDE, PAD)          # (b, A*C, kk, L)
    L = oh * ow
    total = bsz * L
    TL = _choose_tile(total)

    pose_u = pose_col.reshape(bsz, A, C, KK, L)
    pose_u = jnp.transpose(pose_u, (0, 3, 1, 2, 4))              # (b, kk, A, C, L)
    pose_u = pose_u.reshape(bsz, KC, L).astype(jnp.float32)
    ones = jnp.ones((bsz, 1, L), jnp.float32)                    # bias row (b2 via MXU)
    pose_u = jnp.concatenate([pose_u, ones], axis=1)             # (b, KC+1, L)
    pose_u = jnp.pad(pose_u, ((0, 0), (0, KC_PAD - (KC + 1)), (0, 0)))
    pose_u = jnp.transpose(pose_u, (1, 0, 2)).reshape(KC_PAD, total)

    a_col, _, _ = _unfold(a_in, K, STRIDE, PAD)                  # (b, A, kk, L)
    a_u = jnp.transpose(a_col, (0, 2, 1, 3)).reshape(bsz, KKA, L).astype(jnp.float32)
    a_u = jnp.pad(a_u, ((0, 0), (0, KP - KKA), (0, 0)))          # pad rows MUST be zero
    a_u = jnp.transpose(a_u, (1, 0, 2)).reshape(KP, total)

    w_logit, w_vote = _build_weights(w1, w2, b2)

    a_out, pose_out = pl.pallas_call(
        _self_routing_kernel,
        out_shape=(
            jax.ShapeDtypeStruct((B, total), jnp.float32),
            jax.ShapeDtypeStruct((B * D, total), jnp.float32),
        ),
        grid_spec=pltpu.PrefetchScalarGridSpec(
            num_scalar_prefetch=0,
            grid=(total // TL,),
            in_specs=[
                pl.BlockSpec((KC_PAD, TL), lambda li: (0, li)),
                pl.BlockSpec((KP, TL), lambda li: (0, li)),
                pl.BlockSpec((B * KP, KC_PAD), lambda li: (0, 0)),
                pl.BlockSpec((B * D * KP, KC_PAD), lambda li: (0, 0)),
            ],
            out_specs=[
                pl.BlockSpec((B, TL), lambda li: (0, li)),
                pl.BlockSpec((B * D, TL), lambda li: (0, li)),
            ],
        ),
        compiler_params=pltpu.CompilerParams(
            dimension_semantics=("parallel",),
            vmem_limit_bytes=32 * 1024 * 1024,
        ),
    )(pose_u, a_u, w_logit, w_vote)

    # --- glue: split batch back out of the lane axis; already channel-major.
    a_out = jnp.transpose(a_out.reshape(B, bsz, L), (1, 0, 2))
    pose_out = jnp.transpose(pose_out.reshape(B * D, bsz, L), (1, 0, 2))
    return a_out.reshape(bsz, B, oh, ow), pose_out.reshape(bsz, B * D, oh, ow)


# -----------------------------------------------------------------------------
# Pure-JAX reference mirroring the PyTorch forward exactly (for validation)
# -----------------------------------------------------------------------------
def reference_forward(a_in, pose_in, w1, w2, b2):
    b, _, h, w = a_in.shape
    pose_col, oh, ow = _unfold(pose_in, K, STRIDE, PAD)
    L = oh * ow
    pose = pose_col.reshape(b, A, C, KK, L)
    pose = jnp.transpose(pose, (0, 4, 3, 1, 2)).reshape(b, L, KKA, C, 1)
    pose_out = jnp.matmul(w1[None, None], pose)[..., 0].reshape(b, L, KKA, B, D)
    logit = jnp.matmul(w2[None, None], pose)[..., 0] + b2.reshape(1, 1, KKA, B)
    r = jax.nn.softmax(logit, axis=3)
    a_col, _, _ = _unfold(a_in, K, STRIDE, PAD)
    a_u = jnp.transpose(a_col, (0, 3, 2, 1)).reshape(b, L, KKA, 1)
    ar = a_u * r
    ar_sum = jnp.sum(ar, axis=2, keepdims=True)
    coeff = (ar / ar_sum)[..., None]
    a_out = ar_sum / jnp.sum(a_u, axis=2, keepdims=True)        # (b, L, 1, B)
    a_out = jnp.transpose(a_out[:, :, 0, :], (0, 2, 1))         # (b, B, L)
    pose_out = jnp.sum(coeff * pose_out, axis=2).reshape(b, L, -1)
    pose_out = jnp.transpose(pose_out, (0, 2, 1))               # (b, B*D, L)
    return a_out.reshape(b, B, oh, ow), pose_out.reshape(b, B * D, oh, ow)


if __name__ == "__main__":
    key = jax.random.PRNGKey(0)
    k_a, k_p, k_w1, k_w2, k_b2 = jax.random.split(key, 5)

    batch, h, w = 2, 16, 16
    # activations are positive (as assumed by the routing's ar_sum/a_sum divisions)
    a_in = jax.random.uniform(k_a, (batch, A, h, w), jnp.float32,
                              minval=0.1, maxval=1.0)
    pose_in = jax.random.normal(k_p, (batch, A * C, h, w), jnp.float32)

    # Parameter shapes from SelfRouting2d.__init__ (pose_out=True):
    #   W1: (kkA, B*D, C) kaiming-normal, W2: (kkA, B, C), b2: (1,1,kkA,B) -> (kkA,B)
    # NOTE: the module initializes W2/b2 to zero; here we use small deterministic
    # random values so the softmax-routing path is exercised non-trivially.
    w1 = jax.random.normal(k_w1, (KKA, B * D, C), jnp.float32) * math.sqrt(2.0 / (B * D * C))
    w2 = jax.random.normal(k_w2, (KKA, B, C), jnp.float32) * 0.1
    b2 = jax.random.normal(k_b2, (KKA, B), jnp.float32) * 0.1

    a_out, pose_out = self_routing2d(a_in, pose_in, w1, w2, b2)
    jax.block_until_ready((a_out, pose_out))

    a_ref, p_ref = reference_forward(a_in, pose_in, w1, w2, b2)
    assert a_out.shape == (batch, B, h, w)
    assert pose_out.shape == (batch, B * D, h, w)
    np.testing.assert_allclose(np.asarray(a_out), np.asarray(a_ref), rtol=2e-5, atol=2e-5)
    np.testing.assert_allclose(np.asarray(pose_out), np.asarray(p_ref), rtol=2e-4, atol=2e-4)

    print("KERNEL_OK")
</pallas_src>

<mosaic_0001>
module attributes {stable_mosaic.version = 11 : i64} {
  func.func @_self_routing_kernel(%arg0: i32, %arg1: memref<152x256xf32, #tpu.memory_space<vmem>>, %arg2: memref<40x256xf32, #tpu.memory_space<vmem>>, %arg3: memref<160x152xf32, #tpu.memory_space<vmem>>, %arg4: memref<640x152xf32, #tpu.memory_space<vmem>>, %arg5: memref<4x256xf32, #tpu.memory_space<vmem>>, %arg6: memref<16x256xf32, #tpu.memory_space<vmem>>) attributes {dimension_semantics = [#tpu.dimension_semantics<parallel>], iteration_bounds = array<i64: 2>, scalar_prefetch = 0 : i64, scratch_operands = 0 : i64, tpu.core_type = #tpu.core_type<tc>, window_params = [{transform_indices = @transform_0, window_bounds = array<i64: 152, 256>}, {transform_indices = @transform_1, window_bounds = array<i64: 40, 256>}, {pipeline_mode = #tpu.pipeline_mode<synchronous>, transform_indices = @transform_2, window_bounds = array<i64: 160, 152>}, {pipeline_mode = #tpu.pipeline_mode<synchronous>, transform_indices = @transform_3, window_bounds = array<i64: 640, 152>}, {transform_indices = @transform_4, window_bounds = array<i64: 4, 256>}, {transform_indices = @transform_5, window_bounds = array<i64: 16, 256>}]} {
    %c0 = arith.constant 0 : index
    %c0_0 = arith.constant 0 : index
    %0 = vector.load %arg1[%c0, %c0_0] : memref<152x256xf32, #tpu.memory_space<vmem>>, vector<152x256xf32>
    %c0_1 = arith.constant 0 : index
    %c0_2 = arith.constant 0 : index
    %1 = vector.load %arg2[%c0_1, %c0_2] : memref<40x256xf32, #tpu.memory_space<vmem>>, vector<40x256xf32>
    %c0_3 = arith.constant 0 : index
    %c0_4 = arith.constant 0 : index
    %2 = vector.load %arg3[%c0_3, %c0_4] : memref<160x152xf32, #tpu.memory_space<vmem>>, vector<160x152xf32>
    %cst = arith.constant dense<0.000000e+00> : vector<160x256xf32>
    %3 = tpu.matmul %2, %0, %cst {dimension_numbers = #tpu.dot_dimension_numbers<[1], [0], [0], [1], [0, 0, 1, 1], [], []>} : vector<160x152xf32>, vector<152x256xf32>, vector<160x256xf32> -> vector<160x256xf32>
    %c0_5 = arith.constant 0 : index
    %c0_6 = arith.constant 0 : index
    %4 = vector.load %arg4[%c0_5, %c0_6] : memref<640x152xf32, #tpu.memory_space<vmem>>, vector<640x152xf32>
    %cst_7 = arith.constant dense<0.000000e+00> : vector<640x256xf32>
    %5 = tpu.matmul %4, %0, %cst_7 {dimension_numbers = #tpu.dot_dimension_numbers<[1], [0], [0], [1], [0, 0, 1, 1], [], []>} : vector<640x152xf32>, vector<152x256xf32>, vector<640x256xf32> -> vector<640x256xf32>
    %6 = vector.extract_strided_slice %3 {offsets = [0, 0], sizes = [40, 256], strides = [1, 1]} : vector<160x256xf32> to vector<40x256xf32>
    %7 = vector.extract_strided_slice %3 {offsets = [40, 0], sizes = [40, 256], strides = [1, 1]} : vector<160x256xf32> to vector<40x256xf32>
    %8 = vector.extract_strided_slice %3 {offsets = [80, 0], sizes = [40, 256], strides = [1, 1]} : vector<160x256xf32> to vector<40x256xf32>
    %9 = vector.extract_strided_slice %3 {offsets = [120, 0], sizes = [40, 256], strides = [1, 1]} : vector<160x256xf32> to vector<40x256xf32>
    %10 = arith.maximumf %6, %7 : vector<40x256xf32>
    %11 = arith.maximumf %10, %8 : vector<40x256xf32>
    %12 = arith.maximumf %11, %9 : vector<40x256xf32>
    %13 = arith.subf %6, %12 : vector<40x256xf32>
    %14 = math.exp %13 : vector<40x256xf32>
    %15 = arith.subf %7, %12 : vector<40x256xf32>
    %16 = math.exp %15 : vector<40x256xf32>
    %17 = arith.addf %14, %16 : vector<40x256xf32>
    %18 = arith.subf %8, %12 : vector<40x256xf32>
    %19 = math.exp %18 : vector<40x256xf32>
    %20 = arith.addf %17, %19 : vector<40x256xf32>
    %21 = arith.subf %9, %12 : vector<40x256xf32>
    %22 = math.exp %21 : vector<40x256xf32>
    %23 = arith.addf %20, %22 : vector<40x256xf32>
    %cst_8 = arith.constant dense<0.000000e+00> : vector<256xf32>
    %24 = vector.multi_reduction <add>, %1, %cst_8 [0] : vector<40x256xf32> to vector<256xf32>
    %25 = vector.shape_cast %24 : vector<256xf32> to vector<1x256xf32>
    %26 = tpu.reciprocal %25 {approx = true} : vector<1x256xf32> -> vector<1x256xf32>
    %27 = arith.mulf %25, %26 : vector<1x256xf32>
    %cst_9 = arith.constant 2.000000e+00 : f32
    %28 = vector.broadcast %cst_9 : f32 to vector<1x256xf32>
    %29 = arith.subf %28, %27 : vector<1x256xf32>
    %30 = arith.mulf %26, %29 : vector<1x256xf32>
    %31 = tpu.reciprocal %23 {approx = true} : vector<40x256xf32> -> vector<40x256xf32>
    %32 = arith.mulf %23, %31 : vector<40x256xf32>
    %cst_10 = arith.constant 2.000000e+00 : f32
    %33 = vector.broadcast %cst_10 : f32 to vector<40x256xf32>
    %34 = arith.subf %33, %32 : vector<40x256xf32>
    %35 = arith.mulf %31, %34 : vector<40x256xf32>
    %36 = arith.mulf %1, %35 : vector<40x256xf32>
    %37 = arith.subf %6, %12 : vector<40x256xf32>
    %38 = math.exp %37 : vector<40x256xf32>
    %39 = arith.mulf %38, %36 : vector<40x256xf32>
    %cst_11 = arith.constant dense<0.000000e+00> : vector<256xf32>
    %40 = vector.multi_reduction <add>, %39, %cst_11 [0] : vector<40x256xf32> to vector<256xf32>
    %41 = vector.shape_cast %40 : vector<256xf32> to vector<1x256xf32>
    %42 = arith.mulf %41, %30 : vector<1x256xf32>
    %43 = tpu.reciprocal %41 {approx = true} : vector<1x256xf32> -> vector<1x256xf32>
    %44 = arith.mulf %41, %43 : vector<1x256xf32>
    %cst_12 = arith.constant 2.000000e+00 : f32
    %45 = vector.broadcast %cst_12 : f32 to vector<1x256xf32>
    %46 = arith.subf %45, %44 : vector<1x256xf32>
    %47 = arith.mulf %43, %46 : vector<1x256xf32>
    %48 = vector.broadcast %47 : vector<1x256xf32> to vector<40x256xf32>
    %49 = arith.mulf %39, %48 : vector<40x256xf32>
    %50 = vector.extract_strided_slice %5 {offsets = [0, 0], sizes = [40, 256], strides = [1, 1]} : vector<640x256xf32> to vector<40x256xf32>
    %51 = arith.mulf %49, %50 : vector<40x256xf32>
    %cst_13 = arith.constant dense<0.000000e+00> : vector<256xf32>
    %52 = vector.multi_reduction <add>, %51, %cst_13 [0] : vector<40x256xf32> to vector<256xf32>
    %53 = vector.shape_cast %52 : vector<256xf32> to vector<1x256xf32>
    %54 = vector.extract_strided_slice %5 {offsets = [40, 0], sizes = [40, 256], strides = [1, 1]} : vector<640x256xf32> to vector<40x256xf32>
    %55 = arith.mulf %49, %54 : vector<40x256xf32>
    %cst_14 = arith.constant dense<0.000000e+00> : vector<256xf32>
    %56 = vector.multi_reduction <add>, %55, %cst_14 [0] : vector<40x256xf32> to vector<256xf32>
    %57 = vector.shape_cast %56 : vector<256xf32> to vector<1x256xf32>
    %58 = vector.extract_strided_slice %5 {offsets = [80, 0], sizes = [40, 256], strides = [1, 1]} : vector<640x256xf32> to vector<40x256xf32>
    %59 = arith.mulf %49, %58 : vector<40x256xf32>
    %cst_15 = arith.constant dense<0.000000e+00> : vector<256xf32>
    %60 = vector.multi_reduction <add>, %59, %cst_15 [0] : vector<40x256xf32> to vector<256xf32>
    %61 = vector.shape_cast %60 : vector<256xf32> to vector<1x256xf32>
    %62 = vector.extract_strided_slice %5 {offsets = [120, 0], sizes = [40, 256], strides = [1, 1]} : vector<640x256xf32> to vector<40x256xf32>
    %63 = arith.mulf %49, %62 : vector<40x256xf32>
    %cst_16 = arith.constant dense<0.000000e+00> : vector<256xf32>
    %64 = vector.multi_reduction <add>, %63, %cst_16 [0] : vector<40x256xf32> to vector<256xf32>
    %65 = vector.shape_cast %64 : vector<256xf32> to vector<1x256xf32>
    %66 = arith.subf %7, %12 : vector<40x256xf32>
    %67 = math.exp %66 : vector<40x256xf32>
    %68 = arith.mulf %67, %36 : vector<40x256xf32>
    %cst_17 = arith.constant dense<0.000000e+00> : vector<256xf32>
    %69 = vector.multi_reduction <add>, %68, %cst_17 [0] : vector<40x256xf32> to vector<256xf32>
    %70 = vector.shape_cast %69 : vector<256xf32> to vector<1x256xf32>
    %71 = arith.mulf %70, %30 : vector<1x256xf32>
    %72 = tpu.reciprocal %70 {approx = true} : vector<1x256xf32> -> vector<1x256xf32>
    %73 = arith.mulf %70, %72 : vector<1x256xf32>
    %cst_18 = arith.constant 2.000000e+00 : f32
    %74 = vector.broadcast %cst_18 : f32 to vector<1x256xf32>
    %75 = arith.subf %74, %73 : vector<1x256xf32>
    %76 = arith.mulf %72, %75 : vector<1x256xf32>
    %77 = vector.broadcast %76 : vector<1x256xf32> to vector<40x256xf32>
    %78 = arith.mulf %68, %77 : vector<40x256xf32>
    %79 = vector.extract_strided_slice %5 {offsets = [160, 0], sizes = [40, 256], strides = [1, 1]} : vector<640x256xf32> to vector<40x256xf32>
    %80 = arith.mulf %78, %79 : vector<40x256xf32>
    %cst_19 = arith.constant dense<0.000000e+00> : vector<256xf32>
    %81 = vector.multi_reduction <add>, %80, %cst_19 [0] : vector<40x256xf32> to vector<256xf32>
    %82 = vector.shape_cast %81 : vector<256xf32> to vector<1x256xf32>
    %83 = vector.extract_strided_slice %5 {offsets = [200, 0], sizes = [40, 256], strides = [1, 1]} : vector<640x256xf32> to vector<40x256xf32>
    %84 = arith.mulf %78, %83 : vector<40x256xf32>
    %cst_20 = arith.constant dense<0.000000e+00> : vector<256xf32>
    %85 = vector.multi_reduction <add>, %84, %cst_20 [0] : vector<40x256xf32> to vector<256xf32>
    %86 = vector.shape_cast %85 : vector<256xf32> to vector<1x256xf32>
    %87 = vector.extract_strided_slice %5 {offsets = [240, 0], sizes = [40, 256], strides = [1, 1]} : vector<640x256xf32> to vector<40x256xf32>
    %88 = arith.mulf %78, %87 : vector<40x256xf32>
    %cst_21 = arith.constant dense<0.000000e+00> : vector<256xf32>
    %89 = vector.multi_reduction <add>, %88, %cst_21 [0] : vector<40x256xf32> to vector<256xf32>
    %90 = vector.shape_cast %89 : vector<256xf32> to vector<1x256xf32>
    %91 = vector.extract_strided_slice %5 {offsets = [280, 0], sizes = [40, 256], strides = [1, 1]} : vector<640x256xf32> to vector<40x256xf32>
    %92 = arith.mulf %78, %91 : vector<40x256xf32>
    %cst_22 = arith.constant dense<0.000000e+00> : vector<256xf32>
    %93 = vector.multi_reduction <add>, %92, %cst_22 [0] : vector<40x256xf32> to vector<256xf32>
    %94 = vector.shape_cast %93 : vector<256xf32> to vector<1x256xf32>
    %95 = arith.subf %8, %12 : vector<40x256xf32>
    %96 = math.exp %95 : vector<40x256xf32>
    %97 = arith.mulf %96, %36 : vector<40x256xf32>
    %cst_23 = arith.constant dense<0.000000e+00> : vector<256xf32>
    %98 = vector.multi_reduction <add>, %97, %cst_23 [0] : vector<40x256xf32> to vector<256xf32>
    %99 = vector.shape_cast %98 : vector<256xf32> to vector<1x256xf32>
    %100 = arith.mulf %99, %30 : vector<1x256xf32>
    %101 = tpu.reciprocal %99 {approx = true} : vector<1x256xf32> -> vector<1x256xf32>
    %102 = arith.mulf %99, %101 : vector<1x256xf32>
    %cst_24 = arith.constant 2.000000e+00 : f32
    %103 = vector.broadcast %cst_24 : f32 to vector<1x256xf32>
    %104 = arith.subf %103, %102 : vector<1x256xf32>
    %105 = arith.mulf %101, %104 : vector<1x256xf32>
    %106 = vector.broadcast %105 : vector<1x256xf32> to vector<40x256xf32>
    %107 = arith.mulf %97, %106 : vector<40x256xf32>
    %108 = vector.extract_strided_slice %5 {offsets = [320, 0], sizes = [40, 256], strides = [1, 1]} : vector<640x256xf32> to vector<40x256xf32>
    %109 = arith.mulf %107, %108 : vector<40x256xf32>
    %cst_25 = arith.constant dense<0.000000e+00> : vector<256xf32>
    %110 = vector.multi_reduction <add>, %109, %cst_25 [0] : vector<40x256xf32> to vector<256xf32>
    %111 = vector.shape_cast %110 : vector<256xf32> to vector<1x256xf32>
    %112 = vector.extract_strided_slice %5 {offsets = [360, 0], sizes = [40, 256], strides = [1, 1]} : vector<640x256xf32> to vector<40x256xf32>
    %113 = arith.mulf %107, %112 : vector<40x256xf32>
    %cst_26 = arith.constant dense<0.000000e+00> : vector<256xf32>
    %114 = vector.multi_reduction <add>, %113, %cst_26 [0] : vector<40x256xf32> to vector<256xf32>
    %115 = vector.shape_cast %114 : vector<256xf32> to vector<1x256xf32>
    %116 = vector.extract_strided_slice %5 {offsets = [400, 0], sizes = [40, 256], strides = [1, 1]} : vector<640x256xf32> to vector<40x256xf32>
    %117 = arith.mulf %107, %116 : vector<40x256xf32>
    %cst_27 = arith.constant dense<0.000000e+00> : vector<256xf32>
    %118 = vector.multi_reduction <add>, %117, %cst_27 [0] : vector<40x256xf32> to vector<256xf32>
    %119 = vector.shape_cast %118 : vector<256xf32> to vector<1x256xf32>
    %120 = vector.extract_strided_slice %5 {offsets = [440, 0], sizes = [40, 256], strides = [1, 1]} : vector<640x256xf32> to vector<40x256xf32>
    %121 = arith.mulf %107, %120 : vector<40x256xf32>
    %cst_28 = arith.constant dense<0.000000e+00> : vector<256xf32>
    %122 = vector.multi_reduction <add>, %121, %cst_28 [0] : vector<40x256xf32> to vector<256xf32>
    %123 = vector.shape_cast %122 : vector<256xf32> to vector<1x256xf32>
    %124 = arith.subf %9, %12 : vector<40x256xf32>
    %125 = math.exp %124 : vector<40x256xf32>
    %126 = arith.mulf %125, %36 : vector<40x256xf32>
    %cst_29 = arith.constant dense<0.000000e+00> : vector<256xf32>
    %127 = vector.multi_reduction <add>, %126, %cst_29 [0] : vector<40x256xf32> to vector<256xf32>
    %128 = vector.shape_cast %127 : vector<256xf32> to vector<1x256xf32>
    %129 = arith.mulf %128, %30 : vector<1x256xf32>
    %130 = tpu.reciprocal %128 {approx = true} : vector<1x256xf32> -> vector<1x256xf32>
    %131 = arith.mulf %128, %130 : vector<1x256xf32>
    %cst_30 = arith.constant 2.000000e+00 : f32
    %132 = vector.broadcast %cst_30 : f32 to vector<1x256xf32>
    %133 = arith.subf %132, %131 : vector<1x256xf32>
    %134 = arith.mulf %130, %133 : vector<1x256xf32>
    %135 = vector.broadcast %134 : vector<1x256xf32> to vector<40x256xf32>
    %136 = arith.mulf %126, %135 : vector<40x256xf32>
    %137 = vector.extract_strided_slice %5 {offsets = [480, 0], sizes = [40, 256], strides = [1, 1]} : vector<640x256xf32> to vector<40x256xf32>
    %138 = arith.mulf %136, %137 : vector<40x256xf32>
    %cst_31 = arith.constant dense<0.000000e+00> : vector<256xf32>
    %139 = vector.multi_reduction <add>, %138, %cst_31 [0] : vector<40x256xf32> to vector<256xf32>
    %140 = vector.shape_cast %139 : vector<256xf32> to vector<1x256xf32>
    %141 = vector.extract_strided_slice %5 {offsets = [520, 0], sizes = [40, 256], strides = [1, 1]} : vector<640x256xf32> to vector<40x256xf32>
    %142 = arith.mulf %136, %141 : vector<40x256xf32>
    %cst_32 = arith.constant dense<0.000000e+00> : vector<256xf32>
    %143 = vector.multi_reduction <add>, %142, %cst_32 [0] : vector<40x256xf32> to vector<256xf32>
    %144 = vector.shape_cast %143 : vector<256xf32> to vector<1x256xf32>
    %145 = vector.extract_strided_slice %5 {offsets = [560, 0], sizes = [40, 256], strides = [1, 1]} : vector<640x256xf32> to vector<40x256xf32>
    %146 = arith.mulf %136, %145 : vector<40x256xf32>
    %cst_33 = arith.constant dense<0.000000e+00> : vector<256xf32>
    %147 = vector.multi_reduction <add>, %146, %cst_33 [0] : vector<40x256xf32> to vector<256xf32>
    %148 = vector.shape_cast %147 : vector<256xf32> to vector<1x256xf32>
    %149 = vector.extract_strided_slice %5 {offsets = [600, 0], sizes = [40, 256], strides = [1, 1]} : vector<640x256xf32> to vector<40x256xf32>
    %150 = arith.mulf %136, %149 : vector<40x256xf32>
    %cst_34 = arith.constant dense<0.000000e+00> : vector<256xf32>
    %151 = vector.multi_reduction <add>, %150, %cst_34 [0] : vector<40x256xf32> to vector<256xf32>
    %152 = vector.shape_cast %151 : vector<256xf32> to vector<1x256xf32>
    %153 = tpu.concatenate %42, %71, %100, %129 in 0 : vector<1x256xf32>, vector<1x256xf32>, vector<1x256xf32>, vector<1x256xf32> -> vector<4x256xf32>
    %c0_35 = arith.constant 0 : index
    %c0_36 = arith.constant 0 : index
    %154 = vector.load %arg5[%c0_35, %c0_36] : memref<4x256xf32, #tpu.memory_space<vmem>>, vector<4x256xf32>
    tpu.vector_store %arg5[%c0_35, %c0_36], %153 {strides = array<i32>} : memref<4x256xf32, #tpu.memory_space<vmem>>, vector<4x256xf32>,
    %155 = tpu.concatenate %53, %57, %61, %65, %82, %86, %90, %94, %111, %115, %119, %123, %140, %144, %148, %152 in 0 : vector<1x256xf32>, vector<1x256xf32>, vector<1x256xf32>, vector<1x256xf32>, vector<1x256xf32>, vector<1x256xf32>, vector<1x256xf32>, vector<1x256xf32>, vector<1x256xf32>, vector<1x256xf32>, vector<1x256xf32>, vector<1x256xf32>, vector<1x256xf32>, vector<1x256xf32>, vector<1x256xf32>, vector<1x256xf32> -> vector<16x256xf32>
    %c0_37 = arith.constant 0 : index
    %c0_38 = arith.constant 0 : index
    %156 = vector.load %arg6[%c0_37, %c0_38] : memref<16x256xf32, #tpu.memory_space<vmem>>, vector<16x256xf32>
    tpu.vector_store %arg6[%c0_37, %c0_38], %155 {strides = array<i32>} : memref<16x256xf32, #tpu.memory_space<vmem>>, vector<16x256xf32>,
    return
  }
  func.func @transform_0(%arg0: i32) -> (i32, i32) {
    %c0_i32 = arith.constant 0 : i32
    %c0_i32_0 = arith.constant 0 : i32
    return %c0_i32, %arg0 : i32, i32
  }
  func.func @transform_1(%arg0: i32) -> (i32, i32) {
    %c0_i32 = arith.constant 0 : i32
    %c0_i32_0 = arith.constant 0 : i32
    return %c0_i32, %arg0 : i32, i32
  }
  func.func @transform_2(%arg0: i32) -> (i32, i32) {
    %c0_i32 = arith.constant 0 : i32
    %c0_i32_0 = arith.constant 0 : i32
    %c0_i32_1 = arith.constant 0 : i32
    return %c0_i32, %c0_i32_0 : i32, i32
  }
  func.func @transform_3(%arg0: i32) -> (i32, i32) {
    %c0_i32 = arith.constant 0 : i32
    %c0_i32_0 = arith.constant 0 : i32
    %c0_i32_1 = arith.constant 0 : i32
    return %c0_i32, %c0_i32_0 : i32, i32
  }
  func.func @transform_4(%arg0: i32) -> (i32, i32) {
    %c0_i32 = arith.constant 0 : i32
    %c0_i32_0 = arith.constant 0 : i32
    return %c0_i32, %arg0 : i32, i32
  }
  func.func @transform_5(%arg0: i32) -> (i32, i32) {
    %c0_i32 = arith.constant 0 : i32
    %c0_i32_0 = arith.constant 0 : i32
    return %c0_i32, %arg0 : i32, i32
  }
}

</mosaic_0001>

<llo_original>
// kernel: self_routing2d.1
$region0: #{self_routing2d.1}
  #allocation0 [shape = 'u32[]', space=smem, size = 0x4, offset = 0x4, fixed_abs, tag = 'smem constant byte address 0x4 - core index']
  #allocation1 [shape = 'u32[72,128]{1,0:T(1,128)}', space=vmem, size = 0x9000, scoped, tag = 'internal scratch']
  %s0 = inlined_call_operand.vmem [shape: f32[152,512], index: 0, kind: input, shape index: {}]
  %s1 = inlined_call_operand.vmem [shape: f32[40,512], index: 1, kind: input, shape index: {}]
  %s2 = inlined_call_operand.vmem [shape: f32[160,152], index: 2, kind: input, shape index: {}]
  %s3 = inlined_call_operand.vmem [shape: f32[640,152], index: 3, kind: input, shape index: {}]
  %s4 = inlined_call_operand.vmem [shape: f32[4,512], index: 4, kind: output, shape index: {0}]
  %s5 = inlined_call_operand.vmem [shape: f32[16,512], index: 5, kind: output, shape index: {1}]
  %6 = xla_tuple %s4, %s5
  %s7 = sld [smem:[#allocation0]]
  $region122: #{self_routing2d.1} parent=0
    _
  %s9 = ssub.s32 1, %s7
  %s10 = scalar_select 0, %s9, %s7
  $region1: #{self_routing2d.1} parent=0
    #allocation2 [shape = 'u8[311296]{0}', space=vmem, size = 0x4c000, scoped, tag = 'input window, operand 0']
    #allocation3 [shape = 'u8[81920]{0}', space=vmem, size = 0x14000, scoped, tag = 'input window, operand 1']
    #allocation4 [shape = 'u8[32768]{0}', space=vmem, size = 0x8000, scoped, tag = 'output window, operand 1']
    loop: start=0, step=1, limit=4
    $region2: #{self_routing2d.1} parent=1 // loop_pre_header
      _
    $region3: #{self_routing2d.1} parent=1 // loop_header
      %s12 = sphi 0, %s16
      %p13 = scmp.ge.s32.totalorder %s12, 4
      %s22 = sphi 0, %s24
      %s25 = sphi 0, %s22
      %s26 = sphi 0, %s25
      %s42 = sphi 0, %s26
      %s48 = sphi 0, %s50
      %s51 = sphi 0, %s48
      %s52 = sphi 0, %s51
      %s68 = sphi 0, %s52
      %s72 = sphi 0, %s72
      %s74 = sphi 0, %s72
      %s75 = sphi 0, %s74
      %s89 = sphi 0, %s75
      %s93 = sphi 0, %s93
      %s95 = sphi 0, %s93
      %s96 = sphi 0, %s95
      %s110 = sphi 0, %s96
      %s116 = sphi 0, %s118
      %s119 = sphi 0, %s116
      %s120 = sphi 0, %s119
      %s136 = sphi 0, %s120
      %s142 = sphi 0, %s144
      %s145 = sphi 0, %s142
      %s146 = sphi 0, %s145
      %s162 = sphi 0, %s146
    $region4: #{self_routing2d.1} parent=1 // loop_header_branch
      %15 = sbr.rel (%p13) target = $region8
    $region5: #{self_routing2d.1} parent=1 // loop_body
      %s17 = ssub.s32 %s12, 1
      %s18 = ssub.s32 %s12, 2
      %s19 = sadd.s32 %s12, 1
      %s20 = ssub.s32 %s12, %s19
      %p21 = scmp.eq.s32.totalorder %s20, 0
      %s23 = sadd.s32 %s22, 1
      %s24 = scalar_select %p21, %s22, %s23
      %p27 = pneg %p21
      %p28 = scmp.eq.s32.totalorder %s12, 1
      %p29 = por %p27, %p28
      %p30 = scmp.ne.s32.totalorder %s22, %s25
      %p31 = scmp.eq.s32.totalorder %s12, 0
      %p32 = por %p30, %p31
      %p33 = scmp.ne.s32.totalorder %s22, %s25
      %p34 = scmp.eq.s32.totalorder %s17, 1
      %p35 = por %p33, %p34
      %p36 = scmp.ne.s32.totalorder %s25, %s26
      %p37 = scmp.eq.s32.totalorder %s17, 0
      %p38 = por %p36, %p37
      %p39 = scmp.ne.s32.totalorder %s25, %s26
      %p40 = scmp.eq.s32.totalorder %s18, 1
      %p41 = por %p39, %p40
      %p43 = scmp.ne.s32.totalorder %s26, %s42
      %p44 = scmp.eq.s32.totalorder %s18, 0
      %p45 = por %p43, %p44
      %s46 = ssub.s32 %s12, %s19
      %p47 = scmp.eq.s32.totalorder %s46, 0
      %s49 = sadd.s32 %s48, 1
      %s50 = scalar_select %p47, %s48, %s49
      %p53 = pneg %p47
      %p54 = scmp.eq.s32.totalorder %s12, 1
      %p55 = por %p53, %p54
      %p56 = scmp.ne.s32.totalorder %s48, %s51
      %p57 = scmp.eq.s32.totalorder %s12, 0
      %p58 = por %p56, %p57
      %p59 = scmp.ne.s32.totalorder %s48, %s51
      %p60 = scmp.eq.s32.totalorder %s17, 1
      %p61 = por %p59, %p60
      %p62 = scmp.ne.s32.totalorder %s51, %s52
      %p63 = scmp.eq.s32.totalorder %s17, 0
      %p64 = por %p62, %p63
      %p65 = scmp.ne.s32.totalorder %s51, %s52
      %p66 = scmp.eq.s32.totalorder %s18, 1
      %p67 = por %p65, %p66
      %p69 = scmp.ne.s32.totalorder %s52, %s68
      %p70 = scmp.eq.s32.totalorder %s18, 0
      %p71 = por %p69, %p70
      %s73 = sadd.s32 %s72, 1
      %p76 = scmp.eq.s32.totalorder %s12, 1
      %p77 = scmp.ne.s32.totalorder %s72, %s74
      %p78 = scmp.eq.s32.totalorder %s12, 0
      %p79 = por %p77, %p78
      %p80 = scmp.ne.s32.totalorder %s72, %s74
      %p81 = scmp.eq.s32.totalorder %s17, 1
      %p82 = por %p80, %p81
      %p83 = scmp.ne.s32.totalorder %s74, %s75
      %p84 = scmp.eq.s32.totalorder %s17, 0
      %p85 = por %p83, %p84
      %p86 = scmp.ne.s32.totalorder %s74, %s75
      %p87 = scmp.eq.s32.totalorder %s18, 1
      %p88 = por %p86, %p87
      %p90 = scmp.ne.s32.totalorder %s75, %s89
      %p91 = scmp.eq.s32.totalorder %s18, 0
      %p92 = por %p90, %p91
      %s94 = sadd.s32 %s93, 1
      %p97 = scmp.eq.s32.totalorder %s12, 1
      %p98 = scmp.ne.s32.totalorder %s93, %s95
      %p99 = scmp.eq.s32.totalorder %s12, 0
      %p100 = por %p98, %p99
      %p101 = scmp.ne.s32.totalorder %s93, %s95
      %p102 = scmp.eq.s32.totalorder %s17, 1
      %p103 = por %p101, %p102
      %p104 = scmp.ne.s32.totalorder %s95, %s96
      %p105 = scmp.eq.s32.totalorder %s17, 0
      %p106 = por %p104, %p105
      %p107 = scmp.ne.s32.totalorder %s95, %s96
      %p108 = scmp.eq.s32.totalorder %s18, 1
      %p109 = por %p107, %p108
      %p111 = scmp.ne.s32.totalorder %s96, %s110
      %p112 = scmp.eq.s32.totalorder %s18, 0
      %p113 = por %p111, %p112
      %s114 = ssub.s32 %s12, %s19
      %p115 = scmp.eq.s32.totalorder %s114, 0
      %s117 = sadd.s32 %s116, 1
      %s118 = scalar_select %p115, %s116, %s117
      %p121 = pneg %p115
      %p122 = scmp.eq.s32.totalorder %s12, 1
      %p123 = por %p121, %p122
      %p124 = scmp.ne.s32.totalorder %s116, %s119
      %p125 = scmp.eq.s32.totalorder %s12, 0
      %p126 = por %p124, %p125
      %p127 = scmp.ne.s32.totalorder %s116, %s119
      %p128 = scmp.eq.s32.totalorder %s17, 1
      %p129 = por %p127, %p128
      %p130 = scmp.ne.s32.totalorder %s119, %s120
      %p131 = scmp.eq.s32.totalorder %s17, 0
      %p132 = por %p130, %p131
      %p133 = scmp.ne.s32.totalorder %s119, %s120
      %p134 = scmp.eq.s32.totalorder %s18, 1
      %p135 = por %p133, %p134
      %p137 = scmp.ne.s32.totalorder %s120, %s136
      %p138 = scmp.eq.s32.totalorder %s18, 0
      %p139 = por %p137, %p138
      %s140 = ssub.s32 %s12, %s19
      %p141 = scmp.eq.s32.totalorder %s140, 0
      %s143 = sadd.s32 %s142, 1
      %s144 = scalar_select %p141, %s142, %s143
      %p147 = pneg %p141
      %p148 = scmp.eq.s32.totalorder %s12, 1
      %p149 = por %p147, %p148
      %p150 = scmp.ne.s32.totalorder %s142, %s145
      %p151 = scmp.eq.s32.totalorder %s12, 0
      %p152 = por %p150, %p151
      %p153 = scmp.ne.s32.totalorder %s142, %s145
      %p154 = scmp.eq.s32.totalorder %s17, 1
      %p155 = por %p153, %p154
      %p156 = scmp.ne.s32.totalorder %s145, %s146
      %p157 = scmp.eq.s32.totalorder %s17, 0
      %p158 = por %p156, %p157
      %p159 = scmp.ne.s32.totalorder %s145, %s146
      %p160 = scmp.eq.s32.totalorder %s18, 1
      %p161 = por %p159, %p160
      %p163 = scmp.ne.s32.totalorder %s146, %s162
      %p164 = scmp.eq.s32.totalorder %s18, 0
      %p165 = por %p163, %p164
      %p166 = scmp.le.s32.totalorder 1, %s12
      %p167 = scmp.lt.s32.totalorder %s12, 3
      %p168 = pnand %p166, %p167
      %p169 = pneg %p168
      // Predicated region
      $region9: #{self_routing2d.1} parent=5 // pred_check
        _
      $region10: #{self_routing2d.1} parent=5 // pred_check_branch
        %171 = sbr.rel (%p168) target = $region12
      $region11: #{self_routing2d.1} parent=5 // pred_region
        %s172 = ssub.s32 %s12, 1
        // Predicated region
        $region13: #{self_routing2d.1} parent=11 // pred_check
          %p173 = pneg %p85
        $region14: #{self_routing2d.1} parent=11 // pred_check_branch
          %175 = sbr.rel (%p173) target = $region16
        $region15: #{self_routing2d.1} parent=11 // pred_region
          _
        $region16: #{self_routing2d.1} parent=11 // pred_fallthru
          _
        // Predicated region
        $region17: #{self_routing2d.1} parent=11 // pred_check
          %p176 = pneg %p106
        $region18: #{self_routing2d.1} parent=11 // pred_check_branch
          %178 = sbr.rel (%p176) target = $region20
        $region19: #{self_routing2d.1} parent=11 // pred_region
          _
        $region20: #{self_routing2d.1} parent=11 // pred_fallthru
          _
      $region12: #{self_routing2d.1} parent=5 // pred_fallthru
        _
      %p179 = scmp.lt.s32.totalorder %s12, 2
      // Predicated region
      $region21: #{self_routing2d.1} parent=5 // pred_check
        %p180 = pneg %p179
      $region22: #{self_routing2d.1} parent=5 // pred_check_branch
        %182 = sbr.rel (%p180) target = $region24
      $region23: #{self_routing2d.1} parent=5 // pred_region
        // Predicated region
        $region25: #{self_routing2d.1} parent=23 // pred_check
          %p183 = pneg %p32
        $region26: #{self_routing2d.1} parent=23 // pred_check_branch
          %185 = sbr.rel (%p183) target = $region28
        $region27: #{self_routing2d.1} parent=23 // pred_region
          %s186 = sand.u32 %s22, 1
          %s187 = sand.u32 %s22, 1
          %s188 = smul.addr %s187, 304
          %s189 = scalar_lea.vmem [#allocation2], %s188
          %s190 = smul.u32 2, %s12
          %s191 = smul.addr %s190, 8
          %s192 = scalar_lea.vmem %s0, %s191
          // Predicated region
          $region29: #{self_routing2d.1} parent=27 // pred_check
            _
          $region30: #{self_routing2d.1} parent=27 // pred_check_branch
            %194 = sbr.rel (0) target = $region32
          $region31: #{self_routing2d.1} parent=27 // pred_region
            // Predicated region
            $region33: #{self_routing2d.1} parent=31 // pred_check
              _
            $region34: #{self_routing2d.1} parent=31 // pred_check_branch
              %196 = sbr.rel (0) target = $region36
            $region35: #{self_routing2d.1} parent=31 // pred_region
              loop: start=0, step=1, limit=1
              $region37: #{self_routing2d.1} parent=35 // loop_pre_header
                _
              $region38: #{self_routing2d.1} parent=35 // loop_header
                %s198 = sphi 0, %s202
                %p199 = scmp.ge.s32.totalorder %s198, 1
                %s203 = sphi %s192, %s192
                %s204 = sphi %s189, %s189
              $region39: #{self_routing2d.1} parent=35 // loop_header_branch
                %201 = sbr.rel (%p199) target = $region43
              $region40: #{self_routing2d.1} parent=35 // loop_body
                %v205 = vld [vmem:[%s203] sm:$0xff]
                %206 = vst [vmem:[%s204] sm:$0xff] %v205
                %v207 = vld [vmem:[%s203 + $0x8] sm:$0xff]
                %208 = vst [vmem:[%s204 + $0x8] sm:$0xff] %v207
                %v209 = vld [vmem:[%s203 + $0x20] sm:$0xff]
                %210 = vst [vmem:[%s204 + $0x10] sm:$0xff] %v209
                %v211 = vld [vmem:[%s203 + $0x28] sm:$0xff]
                %212 = vst [vmem:[%s204 + $0x18] sm:$0xff] %v211
                %v213 = vld [vmem:[%s203 + $0x40] sm:$0xff]
                %214 = vst [vmem:[%s204 + $0x20] sm:$0xff] %v213
                %v215 = vld [vmem:[%s203 + $0x48] sm:$0xff]
                %216 = vst [vmem:[%s204 + $0x28] sm:$0xff] %v215
                %v217 = vld [vmem:[%s203 + $0x60] sm:$0xff]
                %218 = vst [vmem:[%s204 + $0x30] sm:$0xff] %v217
                %v219 = vld [vmem:[%s203 + $0x68] sm:$0xff]
                %220 = vst [vmem:[%s204 + $0x38] sm:$0xff] %v219
                %v221 = vld [vmem:[%s203 + $0x80] sm:$0xff]
                %222 = vst [vmem:[%s204 + $0x40] sm:$0xff] %v221
                %v223 = vld [vmem:[%s203 + $0x88] sm:$0xff]
                %224 = vst [vmem:[%s204 + $0x48] sm:$0xff] %v223
                %v225 = vld [vmem:[%s203 + $0xa0] sm:$0xff]
                %226 = vst [vmem:[%s204 + $0x50] sm:$0xff] %v225
                %v227 = vld [vmem:[%s203 + $0xa8] sm:$0xff]
                %228 = vst [vmem:[%s204 + $0x58] sm:$0xff] %v227
                %v229 = vld [vmem:[%s203 + $0xc0] sm:$0xff]
                %230 = vst [vmem:[%s204 + $0x60] sm:$0xff] %v229
                %v231 = vld [vmem:[%s203 + $0xc8] sm:$0xff]
                %232 = vst [vmem:[%s204 + $0x68] sm:$0xff] %v231
                %v233 = vld [vmem:[%s203 + $0xe0] sm:$0xff]
                %234 = vst [vmem:[%s204 + $0x70] sm:$0xff] %v233
                %v235 = vld [vmem:[%s203 + $0xe8] sm:$0xff]
                %236 = vst [vmem:[%s204 + $0x78] sm:$0xff] %v235
                %v237 = vld [vmem:[%s203 + $0x100] sm:$0xff]
                %238 = vst [vmem:[%s204 + $0x80] sm:$0xff] %v237
                %v239 = vld [vmem:[%s203 + $0x108] sm:$0xff]
                %240 = vst [vmem:[%s204 + $0x88] sm:$0xff] %v239
                %v241 = vld [vmem:[%s203 + $0x120] sm:$0xff]
                %242 = vst [vmem:[%s204 + $0x90] sm:$0xff] %v241
                %v243 = vld [vmem:[%s203 + $0x128] sm:$0xff]
                %244 = vst [vmem:[%s204 + $0x98] sm:$0xff] %v243
                %v245 = vld [vmem:[%s203 + $0x140] sm:$0xff]
                %246 = vst [vmem:[%s204 + $0xa0] sm:$0xff] %v245
                %v247 = vld [vmem:[%s203 + $0x148] sm:$0xff]
                %248 = vst [vmem:[%s204 + $0xa8] sm:$0xff] %v247
                %v249 = vld [vmem:[%s203 + $0x160] sm:$0xff]
                %250 = vst [vmem:[%s204 + $0xb0] sm:$0xff] %v249
                %v251 = vld [vmem:[%s203 + $0x168] sm:$0xff]
                %252 = vst [vmem:[%s204 + $0xb8] sm:$0xff] %v251
                %v253 = vld [vmem:[%s203 + $0x180] sm:$0xff]
                %254 = vst [vmem:[%s204 + $0xc0] sm:$0xff] %v253
                %v255 = vld [vmem:[%s203 + $0x188] sm:$0xff]
                %256 = vst [vmem:[%s204 + $0xc8] sm:$0xff] %v255
                %v257 = vld [vmem:[%s203 + $0x1a0] sm:$0xff]
                %258 = vst [vmem:[%s204 + $0xd0] sm:$0xff] %v257
                %v259 = vld [vmem:[%s203 + $0x1a8] sm:$0xff]
                %260 = vst [vmem:[%s204 + $0xd8] sm:$0xff] %v259
                %v261 = vld [vmem:[%s203 + $0x1c0] sm:$0xff]
                %262 = vst [vmem:[%s204 + $0xe0] sm:$0xff] %v261
                %v263 = vld [vmem:[%s203 + $0x1c8] sm:$0xff]
                %264 = vst [vmem:[%s204 + $0xe8] sm:$0xff] %v263
                %v265 = vld [vmem:[%s203 + $0x1e0] sm:$0xff]
                %266 = vst [vmem:[%s204 + $0xf0] sm:$0xff] %v265
                %v267 = vld [vmem:[%s203 + $0x1e8] sm:$0xff]
                %268 = vst [vmem:[%s204 + $0xf8] sm:$0xff] %v267
                %v269 = vld [vmem:[%s203 + $0x200] sm:$0xff]
                %270 = vst [vmem:[%s204 + $0x100] sm:$0xff] %v269
                %v271 = vld [vmem:[%s203 + $0x208] sm:$0xff]
                %272 = vst [vmem:[%s204 + $0x108] sm:$0xff] %v271
                %v273 = vld [vmem:[%s203 + $0x220] sm:$0xff]
                %274 = vst [vmem:[%s204 + $0x110] sm:$0xff] %v273
                %v275 = vld [vmem:[%s203 + $0x228] sm:$0xff]
                %276 = vst [vmem:[%s204 + $0x118] sm:$0xff] %v275
                %v277 = vld [vmem:[%s203 + $0x240] sm:$0xff]
                %278 = vst [vmem:[%s204 + $0x120] sm:$0xff] %v277
                %v279 = vld [vmem:[%s203 + $0x248] sm:$0xff]
                %280 = vst [vmem:[%s204 + $0x128] sm:$0xff] %v279
              $region41: #{self_routing2d.1} parent=35 // loop_footer
                %s202 = sadd.s32 1, %s198
              $region42: #{self_routing2d.1} parent=35 // loop_footer_branch
                %197 = sbr.rel target = $region38
              $region43: #{self_routing2d.1} parent=35 // loop_exit
                _
            $region36: #{self_routing2d.1} parent=31 // pred_fallthru
              _
            // Predicated region
            $region44: #{self_routing2d.1} parent=31 // pred_check
              _
            $region45: #{self_routing2d.1} parent=31 // pred_check_branch
              %282 = sbr.rel target = $region47
            $region46: #{self_routing2d.1} parent=31 // pred_region
              _
            $region47: #{self_routing2d.1} parent=31 // pred_fallthru
              _
          $region32: #{self_routing2d.1} parent=27 // pred_fallthru
            _
          %283 = vnop
        $region28: #{self_routing2d.1} parent=23 // pred_fallthru
          _
        // Predicated region
        $region48: #{self_routing2d.1} parent=23 // pred_check
          %p284 = pneg %p58
        $region49: #{self_routing2d.1} parent=23 // pred_check_branch
          %286 = sbr.rel (%p284) target = $region51
        $region50: #{self_routing2d.1} parent=23 // pred_region
          %s287 = sand.u32 %s48, 1
          %s288 = sand.u32 %s48, 1
          %s289 = smul.addr %s288, 80
          %s290 = scalar_lea.vmem [#allocation3], %s289
          %s291 = smul.u32 2, %s12
          %s292 = smul.addr %s291, 8
          %s293 = scalar_lea.vmem %s1, %s292
          // Predicated region
          $region52: #{self_routing2d.1} parent=50 // pred_check
            _
          $region53: #{self_routing2d.1} parent=50 // pred_check_branch
            %295 = sbr.rel (0) target = $region55
          $region54: #{self_routing2d.1} parent=50 // pred_region
            // Predicated region
            $region56: #{self_routing2d.1} parent=54 // pred_check
              _
            $region57: #{self_routing2d.1} parent=54 // pred_check_branch
              %297 = sbr.rel (0) target = $region59
            $region58: #{self_routing2d.1} parent=54 // pred_region
              loop: start=0, step=1, limit=1
              $region60: #{self_routing2d.1} parent=58 // loop_pre_header
                _
              $region61: #{self_routing2d.1} parent=58 // loop_header
                %s299 = sphi 0, %s303
                %p300 = scmp.ge.s32.totalorder %s299, 1
                %s304 = sphi %s293, %s293
                %s305 = sphi %s290, %s290
              $region62: #{self_routing2d.1} parent=58 // loop_header_branch
                %302 = sbr.rel (%p300) target = $region66
              $region63: #{self_routing2d.1} parent=58 // loop_body
                %v306 = vld [vmem:[%s304] sm:$0xff]
                %307 = vst [vmem:[%s305] sm:$0xff] %v306
                %v308 = vld [vmem:[%s304 + $0x8] sm:$0xff]
                %309 = vst [vmem:[%s305 + $0x8] sm:$0xff] %v308
                %v310 = vld [vmem:[%s304 + $0x20] sm:$0xff]
                %311 = vst [vmem:[%s305 + $0x10] sm:$0xff] %v310
                %v312 = vld [vmem:[%s304 + $0x28] sm:$0xff]
                %313 = vst [vmem:[%s305 + $0x18] sm:$0xff] %v312
                %v314 = vld [vmem:[%s304 + $0x40] sm:$0xff]
                %315 = vst [vmem:[%s305 + $0x20] sm:$0xff] %v314
                %v316 = vld [vmem:[%s304 + $0x48] sm:$0xff]
                %317 = vst [vmem:[%s305 + $0x28] sm:$0xff] %v316
                %v318 = vld [vmem:[%s304 + $0x60] sm:$0xff]
                %319 = vst [vmem:[%s305 + $0x30] sm:$0xff] %v318
                %v320 = vld [vmem:[%s304 + $0x68] sm:$0xff]
                %321 = vst [vmem:[%s305 + $0x38] sm:$0xff] %v320
                %v322 = vld [vmem:[%s304 + $0x80] sm:$0xff]
                %323 = vst [vmem:[%s305 + $0x40] sm:$0xff] %v322
                %v324 = vld [vmem:[%s304 + $0x88] sm:$0xff]
                %325 = vst [vmem:[%s305 + $0x48] sm:$0xff] %v324
              $region64: #{self_routing2d.1} parent=58 // loop_footer
                %s303 = sadd.s32 1, %s299
              $region65: #{self_routing2d.1} parent=58 // loop_footer_branch
                %298 = sbr.rel target = $region61
              $region66: #{self_routing2d.1} parent=58 // loop_exit
                _
            $region59: #{self_routing2d.1} parent=54 // pred_fallthru
              _
            // Predicated region
            $region67: #{self_routing2d.1} parent=54 // pred_check
              _
            $region68: #{self_routing2d.1} parent=54 // pred_check_branch
              %327 = sbr.rel target = $region70
            $region69: #{self_routing2d.1} parent=54 // pred_region
              _
            $region70: #{self_routing2d.1} parent=54 // pred_fallthru
              _
          $region55: #{self_routing2d.1} parent=50 // pred_fallthru
            _
          %328 = vnop
        $region51: #{self_routing2d.1} parent=23 // pred_fallthru
          _
      $region24: #{self_routing2d.1} parent=5 // pred_fallthru
        _
      %p329 = scmp.le.s32.totalorder 1, %s12
      %p330 = scmp.lt.s32.totalorder %s12, 3
      %p331 = pnand %p329, %p330
      %p332 = pneg %p331
      // Predicated region
      $region71: #{self_routing2d.1} parent=5 // pred_check
        _
      $region72: #{self_routing2d.1} parent=5 // pred_check_branch
        %334 = sbr.rel (%p331) target = $region74
      $region73: #{self_routing2d.1} parent=5 // pred_region
        %s335 = ssub.s32 %s12, 1
        %s336 = sand.u32 %s25, 1
        %s337 = sand.u32 %s25, 1
        %s338 = smul.addr %s337, 304
        %s339 = scalar_lea.vmem [#allocation2], %s338
        // Predicated region
        $region75: #{self_routing2d.1} parent=73 // pred_check
          %p340 = pneg %p38
        $region76: #{self_routing2d.1} parent=73 // pred_check_branch
          %342 = sbr.rel (%p340) target = $region78
        $region77: #{self_routing2d.1} parent=73 // pred_region
          _
        $region78: #{self_routing2d.1} parent=73 // pred_fallthru
          _
        %s343 = sand.u32 %s51, 1
        %s344 = sand.u32 %s51, 1
        %s345 = smul.addr %s344, 80
        %s346 = scalar_lea.vmem [#allocation3], %s345
        // Predicated region
        $region79: #{self_routing2d.1} parent=73 // pred_check
          %p347 = pneg %p64
        $region80: #{self_routing2d.1} parent=73 // pred_check_branch
          %349 = sbr.rel (%p347) target = $region82
        $region81: #{self_routing2d.1} parent=73 // pred_region
          _
        $region82: #{self_routing2d.1} parent=73 // pred_fallthru
          _
        %s350 = sand.u32 %s25, 1
        %s351 = sand.u32 %s25, 1
        %s352 = smul.addr %s351, 304
        %s353 = scalar_lea.vmem [#allocation2], %s352
        %p354 = pneg %p38
        %p355 = pneg %p35
        %s356 = sand.u32 %s51, 1
        %s357 = sand.u32 %s51, 1
        %s358 = smul.addr %s357, 80
        %s359 = scalar_lea.vmem [#allocation3], %s358
        %p360 = pneg %p64
        %p361 = pneg %p61
        %p362 = pneg %p85
        %p363 = pneg %p82
        %p364 = pneg %p106
        %p365 = pneg %p103
        %p366 = pneg %p132
        %p367 = pneg %p129
        %s368 = smul.u32 2, %s17
        %p369 = scmp.lt.s32.totalorder %s368, 3
        %s370 = scalar_select %p369, %s368, 3
        %s371 = smul.addr %s370, 4
        %s372 = scalar_lea.vmem %s4, %s371
        %p373 = pneg %p158
        %p374 = pneg %p155
        %s375 = sand.u32 %s145, 1
        %s376 = sand.u32 %s145, 1
        %s377 = smul.addr %s376, 32
        %s378 = scalar_lea.vmem [#allocation4], %s377
        %s379 = smul.u32 2, %s17
        %s380 = smul.u32 2, %s17
        %s381 = smul.u32 2, %s17
        %p382 = scmp.lt.s32.totalorder %s381, 3
        %s383 = scalar_select %p382, %s381, 3
        %s384 = smul.addr %s383, 4
        %s385 = scalar_lea.vmem %s4, %s384
        %s386 = smul.u32 2, %s17
        %s387 = smul.u32 2, %s17
        %v388 = vld [vmem:[%s339] sm:$0xff]
        %v389 = vld [vmem:[%s339 + $0x8] sm:$0xff]
        %v390 = vld [vmem:[%s339 + $0x10] sm:$0xff]
        %v391 = vld [vmem:[%s339 + $0x18] sm:$0xff]
        %v392 = vld [vmem:[%s339 + $0x20] sm:$0xff]
        %v393 = vld [vmem:[%s339 + $0x28] sm:$0xff]
        %v394 = vld [vmem:[%s339 + $0x30] sm:$0xff]
        %v395 = vld [vmem:[%s339 + $0x38] sm:$0xff]
        %v396 = vld [vmem:[%s339 + $0x40] sm:$0xff]
        %v397 = vld [vmem:[%s339 + $0x48] sm:$0xff]
        %v398 = vld [vmem:[%s339 + $0x50] sm:$0xff]
        %v399 = vld [vmem:[%s339 + $0x58] sm:$0xff]
        %v400 = vld [vmem:[%s339 + $0x60] sm:$0xff]
        %v401 = vld [vmem:[%s339 + $0x68] sm:$0xff]
        %v402 = vld [vmem:[%s339 + $0x70] sm:$0xff]
        %v403 = vld [vmem:[%s339 + $0x78] sm:$0xff]
        %v404 = vld [vmem:[%s339 + $0x80] sm:$0xff]
        %v405 = vld [vmem:[%s339 + $0x88] sm:$0xff]
        %v406 = vld [vmem:[%s339 + $0x90] sm:$0xff]
        %v407 = vld [vmem:[%s339 + $0x98] sm:$0xff]
        %v408 = vld [vmem:[%s339 + $0xa0] sm:$0xff]
        %v409 = vld [vmem:[%s339 + $0xa8] sm:$0xff]
        %v410 = vld [vmem:[%s339 + $0xb0] sm:$0xff]
        %v411 = vld [vmem:[%s339 + $0xb8] sm:$0xff]
        %v412 = vld [vmem:[%s339 + $0xc0] sm:$0xff]
        %v413 = vld [vmem:[%s339 + $0xc8] sm:$0xff]
        %v414 = vld [vmem:[%s339 + $0xd0] sm:$0xff]
        %v415 = vld [vmem:[%s339 + $0xd8] sm:$0xff]
        %v416 = vld [vmem:[%s339 + $0xe0] sm:$0xff]
        %v417 = vld [vmem:[%s339 + $0xe8] sm:$0xff]
        %v418 = vld [vmem:[%s339 + $0xf0] sm:$0xff]
        %v419 = vld [vmem:[%s339 + $0xf8] sm:$0xff]
        %v420 = vld [vmem:[%s339 + $0x100] sm:$0xff]
        %v421 = vld [vmem:[%s339 + $0x108] sm:$0xff]
        %v422 = vld [vmem:[%s339 + $0x110] sm:$0xff]
        %v423 = vld [vmem:[%s339 + $0x118] sm:$0xff]
        %v424 = vld [vmem:[%s339 + $0x120] sm:$0xff]
        %v425 = vld [vmem:[%s339 + $0x128] sm:$0xff]
        %v426 = vld [vmem:[%s346] sm:$0xff]
        %v427 = vld [vmem:[%s346 + $0x8] sm:$0xff]
        %v428 = vld [vmem:[%s346 + $0x10] sm:$0xff]
        %v429 = vld [vmem:[%s346 + $0x18] sm:$0xff]
        %v430 = vld [vmem:[%s346 + $0x20] sm:$0xff]
        %v431 = vld [vmem:[%s346 + $0x28] sm:$0xff]
        %v432 = vld [vmem:[%s346 + $0x30] sm:$0xff]
        %v433 = vld [vmem:[%s346 + $0x38] sm:$0xff]
        %v434 = vld [vmem:[%s346 + $0x40] sm:$0xff]
        %v435 = vld [vmem:[%s346 + $0x48] sm:$0xff]
        %v436 = vld [vmem:[%s2] sm:$0xff]
        %v437 = vld [vmem:[%s2 + $0x8] sm:$0xff]
        %v438 = vld [vmem:[%s2 + $0x10] sm:$0xff]
        %v439 = vld [vmem:[%s2 + $0x18] sm:$0xff]
        %v440 = vld [vmem:[%s2 + $0x20] sm:$0xff]
        %v441 = vld [vmem:[%s2 + $0x28] sm:$0xff]
        %v442 = vld [vmem:[%s2 + $0x30] sm:$0xff]
        %v443 = vld [vmem:[%s2 + $0x38] sm:$0xff]
        %v444 = vld [vmem:[%s2 + $0x40] sm:$0xff]
        %v445 = vld [vmem:[%s2 + $0x48] sm:$0xff]
        %v446 = vld [vmem:[%s2 + $0x50] sm:$0xff]
        %v447 = vld [vmem:[%s2 + $0x58] sm:$0xff]
        %v448 = vld [vmem:[%s2 + $0x60] sm:$0xff]
        %v449 = vld [vmem:[%s2 + $0x68] sm:$0xff]
        %v450 = vld [vmem:[%s2 + $0x70] sm:$0xff]
        %v451 = vld [vmem:[%s2 + $0x78] sm:$0xff]
        %v452 = vld [vmem:[%s2 + $0x80] sm:$0xff]
        %v453 = vld [vmem:[%s2 + $0x88] sm:$0xff]
        %v454 = vld [vmem:[%s2 + $0x90] sm:$0xff]
        %v455 = vld [vmem:[%s2 + $0x98] sm:$0xff]
        %v456 = vld [vmem:[%s2 + $0xa0] sm:$0xff]
        %v457 = vld [vmem:[%s2 + $0xa8] sm:$0xff]
        %v458 = vld [vmem:[%s2 + $0xb0] sm:$0xff]
        %v459 = vld [vmem:[%s2 + $0xb8] sm:$0xff]
        %v460 = vld [vmem:[%s2 + $0xc0] sm:$0xff]
        %v461 = vld [vmem:[%s2 + $0xc8] sm:$0xff]
        %v462 = vld [vmem:[%s2 + $0xd0] sm:$0xff]
        %v463 = vld [vmem:[%s2 + $0xd8] sm:$0xff]
        %v464 = vld [vmem:[%s2 + $0xe0] sm:$0xff]
        %v465 = vld [vmem:[%s2 + $0xe8] sm:$0xff]
        %v466 = vld [vmem:[%s2 + $0xf0] sm:$0xff]
        %v467 = vld [vmem:[%s2 + $0xf8] sm:$0xff]
        %v468 = vld [vmem:[%s2 + $0x100] sm:$0xff]
        %v469 = vld [vmem:[%s2 + $0x108] sm:$0xff]
        %v470 = vld [vmem:[%s2 + $0x110] sm:$0xff]
        %v471 = vld [vmem:[%s2 + $0x118] sm:$0xff]
        %v472 = vld [vmem:[%s2 + $0x120] sm:$0xff]
        %v473 = vld [vmem:[%s2 + $0x128] sm:$0xff]
        %v474 = vld [vmem:[%s2 + $0x130] sm:$0xff]
        %v475 = vld [vmem:[%s2 + $0x138] sm:$0xff]
        %vm476 = vcmask 195584
        %v478 = vsel %vm476, %v437, 0
        %v481 = vsel %vm476, %v439, 0
        %v484 = vsel %vm476, %v441, 0
        %v487 = vsel %vm476, %v443, 0
        %v490 = vsel %vm476, %v445, 0
        %v493 = vsel %vm476, %v447, 0
        %v496 = vsel %vm476, %v449, 0
        %v499 = vsel %vm476, %v451, 0
        %v502 = vsel %vm476, %v453, 0
        %v505 = vsel %vm476, %v455, 0
        %v508 = vsel %vm476, %v457, 0
        %v511 = vsel %vm476, %v459, 0
        %v514 = vsel %vm476, %v461, 0
        %v517 = vsel %vm476, %v463, 0
        %v520 = vsel %vm476, %v465, 0
        %v523 = vsel %vm476, %v467, 0
        %v526 = vsel %vm476, %v469, 0
        %v529 = vsel %vm476, %v471, 0
        %v532 = vsel %vm476, %v473, 0
        %v535 = vsel %vm476, %v475, 0
        %537 = vmatpush.msra.mxu0 %v418
        %538 = vmatpush.msra.mxu0 %v416
        %539 = vmatpush.msra.mxu0 %v414
        %540 = vmatpush.msra.mxu0 %v412
        %541 = vmatpush.msra.mxu0 %v410
        %542 = vmatpush.msra.mxu0 %v408
        %543 = vmatpush.msra.mxu0 %v406
        %544 = vmatpush.msra.mxu0 %v404
        %545 = vmatpush.msra.mxu0 %v402
        %546 = vmatpush.msra.mxu0 %v400
        %547 = vmatpush.msra.mxu0 %v398
        %548 = vmatpush.msra.mxu0 %v396
        %549 = vmatpush.msra.mxu0 %v394
        %550 = vmatpush.msra.mxu0 %v392
        %551 = vmatpush.msra.mxu0 %v390
        %552 = vmatpush.msra.mxu0 %v388
        %553 = vmatmul.f32.gmra.mxu0 %v436
        %v554 = vpop.f32.mrf.mxu0
        %v555 = vadd.f32 0.0, %v554
        %556 = vmatmul.f32.gmra.mxu0 %v438
        %v557 = vpop.f32.mrf.mxu0
        %v558 = vadd.f32 0.0, %v557
        %559 = vmatmul.f32.gmra.mxu0 %v440
        %v560 = vpop.f32.mrf.mxu0
        %v561 = vadd.f32 0.0, %v560
        %562 = vmatmul.f32.gmra.mxu0 %v442
        %v563 = vpop.f32.mrf.mxu0
        %v564 = vadd.f32 0.0, %v563
        %565 = vmatmul.f32.gmra.mxu0 %v444
        %v566 = vpop.f32.mrf.mxu0
        %v567 = vadd.f32 0.0, %v566
        %568 = vmatmul.f32.gmra.mxu0 %v446
        %v569 = vpop.f32.mrf.mxu0
        %v570 = vadd.f32 0.0, %v569
        %571 = vmatmul.f32.gmra.mxu0 %v448
        %v572 = vpop.f32.mrf.mxu0
        %v573 = vadd.f32 0.0, %v572
        %574 = vmatmul.f32.gmra.mxu0 %v450
        %v575 = vpop.f32.mrf.mxu0
        %v576 = vadd.f32 0.0, %v575
        %577 = vmatmul.f32.gmra.mxu0 %v452
        %v578 = vpop.f32.mrf.mxu0
        %v579 = vadd.f32 0.0, %v578
        %580 = vmatmul.f32.gmra.mxu0 %v454
        %v581 = vpop.f32.mrf.mxu0
        %v582 = vadd.f32 0.0, %v581
        %583 = vmatmul.f32.gmra.mxu0 %v456
        %v584 = vpop.f32.mrf.mxu0
        %v585 = vadd.f32 0.0, %v584
        %586 = vmatmul.f32.gmra.mxu0 %v458
        %v587 = vpop.f32.mrf.mxu0
        %v588 = vadd.f32 0.0, %v587
        %589 = vmatmul.f32.gmra.mxu0 %v460
        %v590 = vpop.f32.mrf.mxu0
        %v591 = vadd.f32 0.0, %v590
        %592 = vmatmul.f32.gmra.mxu0 %v462
        %v593 = vpop.f32.mrf.mxu0
        %v594 = vadd.f32 0.0, %v593
        %595 = vmatmul.f32.gmra.mxu0 %v464
        %v596 = vpop.f32.mrf.mxu0
        %v597 = vadd.f32 0.0, %v596
        %598 = vmatmul.f32.gmra.mxu0 %v466
        %v599 = vpop.f32.mrf.mxu0
        %v600 = vadd.f32 0.0, %v599
        %601 = vmatmul.f32.gmra.mxu0 %v468
        %v602 = vpop.f32.mrf.mxu0
        %v603 = vadd.f32 0.0, %v602
        %604 = vmatmul.f32.gmra.mxu0 %v470
        %v605 = vpop.f32.mrf.mxu0
        %v606 = vadd.f32 0.0, %v605
        %607 = vmatmul.f32.gmra.mxu0 %v472
        %v608 = vpop.f32.mrf.mxu0
        %v609 = vadd.f32 0.0, %v608
        %610 = vmatmul.f32.gmra.mxu0 %v474
        %v611 = vpop.f32.mrf.mxu0
        %v612 = vadd.f32 0.0, %v611
        %613 = vdwg.mxu0
        %614 = vmatpush.msra.mxu0 0.0
        %615 = vmatpush.msra.mxu0 0.0
        %616 = vmatpush.msra.mxu0 0.0
        %617 = vmatpush.msra.mxu0 0.0
        %618 = vmatpush.msra.mxu0 0.0
        %619 = vmatpush.msra.mxu0 0.0
        %620 = vmatpush.msra.mxu0 0.0
        %621 = vmatpush.msra.mxu0 0.0
        %622 = vmatpush.msra.mxu0 0.0
        %623 = vmatpush.msra.mxu0 0.0
        %624 = vmatpush.msra.mxu0 0.0
        %625 = vmatpush.msra.mxu0 0.0
        %626 = vmatpush.msra.mxu0 0.0
        %627 = vmatpush.msra.mxu0 %v424
        %628 = vmatpush.msra.mxu0 %v422
        %629 = vmatpush.msra.mxu0 %v420
        %630 = vmatmul.f32.gmra.mxu0 %v478
        %v631 = vpop.f32.mrf.mxu0
        %v632 = vadd.f32 %v555, %v631
        %633 = vmatmul.f32.gmra.mxu0 %v481
        %v634 = vpop.f32.mrf.mxu0
        %v635 = vadd.f32 %v558, %v634
        %636 = vmatmul.f32.gmra.mxu0 %v484
        %v637 = vpop.f32.mrf.mxu0
        %v638 = vadd.f32 %v561, %v637
        %639 = vmatmul.f32.gmra.mxu0 %v487
        %v640 = vpop.f32.mrf.mxu0
        %v641 = vadd.f32 %v564, %v640
        %642 = vmatmul.f32.gmra.mxu0 %v490
        %v643 = vpop.f32.mrf.mxu0
        %v644 = vadd.f32 %v567, %v643
        %645 = vmatmul.f32.gmra.mxu0 %v493
        %v646 = vpop.f32.mrf.mxu0
        %v647 = vadd.f32 %v570, %v646
        %648 = vmatmul.f32.gmra.mxu0 %v496
        %v649 = vpop.f32.mrf.mxu0
        %v650 = vadd.f32 %v573, %v649
        %651 = vmatmul.f32.gmra.mxu0 %v499
        %v652 = vpop.f32.mrf.mxu0
        %v653 = vadd.f32 %v576, %v652
        %654 = vmatmul.f32.gmra.mxu0 %v502
        %v655 = vpop.f32.mrf.mxu0
        %v656 = vadd.f32 %v579, %v655
        %657 = vmatmul.f32.gmra.mxu0 %v505
        %v658 = vpop.f32.mrf.mxu0
        %v659 = vadd.f32 %v582, %v658
        %660 = vmatmul.f32.gmra.mxu0 %v508
        %v661 = vpop.f32.mrf.mxu0
        %v662 = vadd.f32 %v585, %v661
        %663 = vmatmul.f32.gmra.mxu0 %v511
        %v664 = vpop.f32.mrf.mxu0
        %v665 = vadd.f32 %v588, %v664
        %666 = vmatmul.f32.gmra.mxu0 %v514
        %v667 = vpop.f32.mrf.mxu0
        %v668 = vadd.f32 %v591, %v667
        %669 = vmatmul.f32.gmra.mxu0 %v517
        %v670 = vpop.f32.mrf.mxu0
        %v671 = vadd.f32 %v594, %v670
        %672 = vmatmul.f32.gmra.mxu0 %v520
        %v673 = vpop.f32.mrf.mxu0
        %v674 = vadd.f32 %v597, %v673
        %675 = vmatmul.f32.gmra.mxu0 %v523
        %v676 = vpop.f32.mrf.mxu0
        %v677 = vadd.f32 %v600, %v676
        %678 = vmatmul.f32.gmra.mxu0 %v526
        %v679 = vpop.f32.mrf.mxu0
        %v680 = vadd.f32 %v603, %v679
        %681 = vmatmul.f32.gmra.mxu0 %v529
        %v682 = vpop.f32.mrf.mxu0
        %v683 = vadd.f32 %v606, %v682
        %684 = vmatmul.f32.gmra.mxu0 %v532
        %v685 = vpop.f32.mrf.mxu0
        %v686 = vadd.f32 %v609, %v685
        %687 = vmatmul.f32.gmra.mxu0 %v535
        %v688 = vpop.f32.mrf.mxu0
        %v689 = vadd.f32 %v612, %v688
        %690 = vdwg.mxu0
        %691 = vmatpush.msra.mxu0 %v419
        %692 = vmatpush.msra.mxu0 %v417
        %693 = vmatpush.msra.mxu0 %v415
        %694 = vmatpush.msra.mxu0 %v413
        %695 = vmatpush.msra.mxu0 %v411
        %696 = vmatpush.msra.mxu0 %v409
        %697 = vmatpush.msra.mxu0 %v407
        %698 = vmatpush.msra.mxu0 %v405
        %699 = vmatpush.msra.mxu0 %v403
        %700 = vmatpush.msra.mxu0 %v401
        %701 = vmatpush.msra.mxu0 %v399
        %702 = vmatpush.msra.mxu0 %v397
        %703 = vmatpush.msra.mxu0 %v395
        %704 = vmatpush.msra.mxu0 %v393
        %705 = vmatpush.msra.mxu0 %v391
        %706 = vmatpush.msra.mxu0 %v389
        %707 = vmatmul.f32.gmra.mxu0 %v436
        %v708 = vpop.f32.mrf.mxu0
        %v709 = vadd.f32 0.0, %v708
        %710 = vmatmul.f32.gmra.mxu0 %v438
        %v711 = vpop.f32.mrf.mxu0
        %v712 = vadd.f32 0.0, %v711
        %713 = vmatmul.f32.gmra.mxu0 %v440
        %v714 = vpop.f32.mrf.mxu0
        %v715 = vadd.f32 0.0, %v714
        %716 = vmatmul.f32.gmra.mxu0 %v442
        %v717 = vpop.f32.mrf.mxu0
        %v718 = vadd.f32 0.0, %v717
        %719 = vmatmul.f32.gmra.mxu0 %v444
        %v720 = vpop.f32.mrf.mxu0
        %v721 = vadd.f32 0.0, %v720
        %722 = vmatmul.f32.gmra.mxu0 %v446
        %v723 = vpop.f32.mrf.mxu0
        %v724 = vadd.f32 0.0, %v723
        %725 = vmatmul.f32.gmra.mxu0 %v448
        %v726 = vpop.f32.mrf.mxu0
        %v727 = vadd.f32 0.0, %v726
        %728 = vmatmul.f32.gmra.mxu0 %v450
        %v729 = vpop.f32.mrf.mxu0
        %v730 = vadd.f32 0.0, %v729
        %731 = vmatmul.f32.gmra.mxu0 %v452
        %v732 = vpop.f32.mrf.mxu0
        %v733 = vadd.f32 0.0, %v732
        %734 = vmatmul.f32.gmra.mxu0 %v454
        %v735 = vpop.f32.mrf.mxu0
        %v736 = vadd.f32 0.0, %v735
        %737 = vmatmul.f32.gmra.mxu0 %v456
        %v738 = vpop.f32.mrf.mxu0
        %v739 = vadd.f32 0.0, %v738
        %740 = vmatmul.f32.gmra.mxu0 %v458
        %v741 = vpop.f32.mrf.mxu0
        %v742 = vadd.f32 0.0, %v741
        %743 = vmatmul.f32.gmra.mxu0 %v460
        %v744 = vpop.f32.mrf.mxu0
        %v745 = vadd.f32 0.0, %v744
        %746 = vmatmul.f32.gmra.mxu0 %v462
        %v747 = vpop.f32.mrf.mxu0
        %v748 = vadd.f32 0.0, %v747
        %749 = vmatmul.f32.gmra.mxu0 %v464
        %v750 = vpop.f32.mrf.mxu0
        %v751 = vadd.f32 0.0, %v750
        %752 = vmatmul.f32.gmra.mxu0 %v466
        %v753 = vpop.f32.mrf.mxu0
        %v754 = vadd.f32 0.0, %v753
        %755 = vmatmul.f32.gmra.mxu0 %v468
        %v756 = vpop.f32.mrf.mxu0
        %v757 = vadd.f32 0.0, %v756
        %758 = vmatmul.f32.gmra.mxu0 %v470
        %v759 = vpop.f32.mrf.mxu0
        %v760 = vadd.f32 0.0, %v759
        %761 = vmatmul.f32.gmra.mxu0 %v472
        %v762 = vpop.f32.mrf.mxu0
        %v763 = vadd.f32 0.0, %v762
        %764 = vmatmul.f32.gmra.mxu0 %v474
        %v765 = vpop.f32.mrf.mxu0
        %v766 = vadd.f32 0.0, %v765
        %767 = vdwg.mxu0
        %768 = vmatpush.msra.mxu0 0.0
        %769 = vmatpush.msra.mxu0 0.0
        %770 = vmatpush.msra.mxu0 0.0
        %771 = vmatpush.msra.mxu0 0.0
        %772 = vmatpush.msra.mxu0 0.0
        %773 = vmatpush.msra.mxu0 0.0
        %774 = vmatpush.msra.mxu0 0.0
        %775 = vmatpush.msra.mxu0 0.0
        %776 = vmatpush.msra.mxu0 0.0
        %777 = vmatpush.msra.mxu0 0.0
        %778 = vmatpush.msra.mxu0 0.0
        %779 = vmatpush.msra.mxu0 0.0
        %780 = vmatpush.msra.mxu0 0.0
        %781 = vmatpush.msra.mxu0 %v425
        %782 = vmatpush.msra.mxu0 %v423
        %783 = vmatpush.msra.mxu0 %v421
        %784 = vmatmul.f32.gmra.mxu0 %v478
        %v785 = vpop.f32.mrf.mxu0
        %v786 = vadd.f32 %v709, %v785
        %787 = vmatmul.f32.gmra.mxu0 %v481
        %v788 = vpop.f32.mrf.mxu0
        %v789 = vadd.f32 %v712, %v788
        %790 = vmatmul.f32.gmra.mxu0 %v484
        %v791 = vpop.f32.mrf.mxu0
        %v792 = vadd.f32 %v715, %v791
        %793 = vmatmul.f32.gmra.mxu0 %v487
        %v794 = vpop.f32.mrf.mxu0
        %v795 = vadd.f32 %v718, %v794
        %796 = vmatmul.f32.gmra.mxu0 %v490
        %v797 = vpop.f32.mrf.mxu0
        %v798 = vadd.f32 %v721, %v797
        %799 = vmatmul.f32.gmra.mxu0 %v493
        %v800 = vpop.f32.mrf.mxu0
        %v801 = vadd.f32 %v724, %v800
        %802 = vmatmul.f32.gmra.mxu0 %v496
        %v803 = vpop.f32.mrf.mxu0
        %v804 = vadd.f32 %v727, %v803
        %805 = vmatmul.f32.gmra.mxu0 %v499
        %v806 = vpop.f32.mrf.mxu0
        %v807 = vadd.f32 %v730, %v806
        %808 = vmatmul.f32.gmra.mxu0 %v502
        %v809 = vpop.f32.mrf.mxu0
        %v810 = vadd.f32 %v733, %v809
        %811 = vmatmul.f32.gmra.mxu0 %v505
        %v812 = vpop.f32.mrf.mxu0
        %v813 = vadd.f32 %v736, %v812
        %814 = vmatmul.f32.gmra.mxu0 %v508
        %v815 = vpop.f32.mrf.mxu0
        %v816 = vadd.f32 %v739, %v815
        %817 = vmatmul.f32.gmra.mxu0 %v511
        %v818 = vpop.f32.mrf.mxu0
        %v819 = vadd.f32 %v742, %v818
        %820 = vmatmul.f32.gmra.mxu0 %v514
        %v821 = vpop.f32.mrf.mxu0
        %v822 = vadd.f32 %v745, %v821
        %823 = vmatmul.f32.gmra.mxu0 %v517
        %v824 = vpop.f32.mrf.mxu0
        %v825 = vadd.f32 %v748, %v824
        %826 = vmatmul.f32.gmra.mxu0 %v520
        %v827 = vpop.f32.mrf.mxu0
        %v828 = vadd.f32 %v751, %v827
        %829 = vmatmul.f32.gmra.mxu0 %v523
        %v830 = vpop.f32.mrf.mxu0
        %v831 = vadd.f32 %v754, %v830
        %832 = vmatmul.f32.gmra.mxu0 %v526
        %v833 = vpop.f32.mrf.mxu0
        %v834 = vadd.f32 %v757, %v833
        %835 = vmatmul.f32.gmra.mxu0 %v529
        %v836 = vpop.f32.mrf.mxu0
        %v837 = vadd.f32 %v760, %v836
        %838 = vmatmul.f32.gmra.mxu0 %v532
        %v839 = vpop.f32.mrf.mxu0
        %v840 = vadd.f32 %v763, %v839
        %841 = vmatmul.f32.gmra.mxu0 %v535
        %v842 = vpop.f32.mrf.mxu0
        %v843 = vadd.f32 %v766, %v842
        %844 = vdwg.mxu0
        %v845 = vld [vmem:[%s3] sm:$0xff]
        %v846 = vld [vmem:[%s3 + $0x8] sm:$0xff]
        %v847 = vld [vmem:[%s3 + $0x10] sm:$0xff]
        %v848 = vld [vmem:[%s3 + $0x18] sm:$0xff]
        %v849 = vld [vmem:[%s3 + $0x20] sm:$0xff]
        %v850 = vld [vmem:[%s3 + $0x28] sm:$0xff]
        %v851 = vld [vmem:[%s3 + $0x30] sm:$0xff]
        %v852 = vld [vmem:[%s3 + $0x38] sm:$0xff]
        %v853 = vld [vmem:[%s3 + $0x40] sm:$0xff]
        %v854 = vld [vmem:[%s3 + $0x48] sm:$0xff]
        %v855 = vld [vmem:[%s3 + $0x50] sm:$0xff]
        %v856 = vld [vmem:[%s3 + $0x58] sm:$0xff]
        %v857 = vld [vmem:[%s3 + $0x60] sm:$0xff]
        %v858 = vld [vmem:[%s3 + $0x68] sm:$0xff]
        %v859 = vld [vmem:[%s3 + $0x70] sm:$0xff]
        %v860 = vld [vmem:[%s3 + $0x78] sm:$0xff]
        %v861 = vld [vmem:[%s3 + $0x80] sm:$0xff]
        %v862 = vld [vmem:[%s3 + $0x88] sm:$0xff]
        %v863 = vld [vmem:[%s3 + $0x90] sm:$0xff]
        %v864 = vld [vmem:[%s3 + $0x98] sm:$0xff]
        %v865 = vld [vmem:[%s3 + $0xa0] sm:$0xff]
        %v866 = vld [vmem:[%s3 + $0xa8] sm:$0xff]
        %v867 = vld [vmem:[%s3 + $0xb0] sm:$0xff]
        %v868 = vld [vmem:[%s3 + $0xb8] sm:$0xff]
        %v869 = vld [vmem:[%s3 + $0xc0] sm:$0xff]
        %v870 = vld [vmem:[%s3 + $0xc8] sm:$0xff]
        %v871 = vld [vmem:[%s3 + $0xd0] sm:$0xff]
        %v872 = vld [vmem:[%s3 + $0xd8] sm:$0xff]
        %v873 = vld [vmem:[%s3 + $0xe0] sm:$0xff]
        %v874 = vld [vmem:[%s3 + $0xe8] sm:$0xff]
        %v875 = vld [vmem:[%s3 + $0xf0] sm:$0xff]
        %v876 = vld [vmem:[%s3 + $0xf8] sm:$0xff]
        %v877 = vld [vmem:[%s3 + $0x100] sm:$0xff]
        %v878 = vld [vmem:[%s3 + $0x108] sm:$0xff]
        %v879 = vld [vmem:[%s3 + $0x110] sm:$0xff]
        %v880 = vld [vmem:[%s3 + $0x118] sm:$0xff]
        %v881 = vld [vmem:[%s3 + $0x120] sm:$0xff]
        %v882 = vld [vmem:[%s3 + $0x128] sm:$0xff]
        %v883 = vld [vmem:[%s3 + $0x130] sm:$0xff]
        %v884 = vld [vmem:[%s3 + $0x138] sm:$0xff]
        %v885 = vld [vmem:[%s3 + $0x140] sm:$0xff]
        %v886 = vld [vmem:[%s3 + $0x148] sm:$0xff]
        %v887 = vld [vmem:[%s3 + $0x150] sm:$0xff]
        %v888 = vld [vmem:[%s3 + $0x158] sm:$0xff]
        %v889 = vld [vmem:[%s3 + $0x160] sm:$0xff]
        %v890 = vld [vmem:[%s3 + $0x168] sm:$0xff]
        %v891 = vld [vmem:[%s3 + $0x170] sm:$0xff]
        %v892 = vld [vmem:[%s3 + $0x178] sm:$0xff]
        %v893 = vld [vmem:[%s3 + $0x180] sm:$0xff]
        %v894 = vld [vmem:[%s3 + $0x188] sm:$0xff]
        %v895 = vld [vmem:[%s3 + $0x190] sm:$0xff]
        %v896 = vld [vmem:[%s3 + $0x198] sm:$0xff]
        %v897 = vld [vmem:[%s3 + $0x1a0] sm:$0xff]
        %v898 = vld [vmem:[%s3 + $0x1a8] sm:$0xff]
        %v899 = vld [vmem:[%s3 + $0x1b0] sm:$0xff]
        %v900 = vld [vmem:[%s3 + $0x1b8] sm:$0xff]
        %v901 = vld [vmem:[%s3 + $0x1c0] sm:$0xff]
        %v902 = vld [vmem:[%s3 + $0x1c8] sm:$0xff]
        %v903 = vld [vmem:[%s3 + $0x1d0] sm:$0xff]
        %v904 = vld [vmem:[%s3 + $0x1d8] sm:$0xff]
        %v905 = vld [vmem:[%s3 + $0x1e0] sm:$0xff]
        %v906 = vld [vmem:[%s3 + $0x1e8] sm:$0xff]
        %v907 = vld [vmem:[%s3 + $0x1f0] sm:$0xff]
        %v908 = vld [vmem:[%s3 + $0x1f8] sm:$0xff]
        %v909 = vld [vmem:[%s3 + $0x200] sm:$0xff]
        %v910 = vld [vmem:[%s3 + $0x208] sm:$0xff]
        %v911 = vld [vmem:[%s3 + $0x210] sm:$0xff]
        %v912 = vld [vmem:[%s3 + $0x218] sm:$0xff]
        %v913 = vld [vmem:[%s3 + $0x220] sm:$0xff]
        %v914 = vld [vmem:[%s3 + $0x228] sm:$0xff]
        %v915 = vld [vmem:[%s3 + $0x230] sm:$0xff]
        %v916 = vld [vmem:[%s3 + $0x238] sm:$0xff]
        %v917 = vld [vmem:[%s3 + $0x240] sm:$0xff]
        %v918 = vld [vmem:[%s3 + $0x248] sm:$0xff]
        %v919 = vld [vmem:[%s3 + $0x250] sm:$0xff]
        %v920 = vld [vmem:[%s3 + $0x258] sm:$0xff]
        %v921 = vld [vmem:[%s3 + $0x260] sm:$0xff]
        %v922 = vld [vmem:[%s3 + $0x268] sm:$0xff]
        %v923 = vld [vmem:[%s3 + $0x270] sm:$0xff]
        %v924 = vld [vmem:[%s3 + $0x278] sm:$0xff]
        %v925 = vld [vmem:[%s3 + $0x280] sm:$0xff]
        %v926 = vld [vmem:[%s3 + $0x288] sm:$0xff]
        %v927 = vld [vmem:[%s3 + $0x290] sm:$0xff]
        %v928 = vld [vmem:[%s3 + $0x298] sm:$0xff]
        %v929 = vld [vmem:[%s3 + $0x2a0] sm:$0xff]
        %v930 = vld [vmem:[%s3 + $0x2a8] sm:$0xff]
        %v931 = vld [vmem:[%s3 + $0x2b0] sm:$0xff]
        %v932 = vld [vmem:[%s3 + $0x2b8] sm:$0xff]
        %v933 = vld [vmem:[%s3 + $0x2c0] sm:$0xff]
        %v934 = vld [vmem:[%s3 + $0x2c8] sm:$0xff]
        %v935 = vld [vmem:[%s3 + $0x2d0] sm:$0xff]
        %v936 = vld [vmem:[%s3 + $0x2d8] sm:$0xff]
        %v937 = vld [vmem:[%s3 + $0x2e0] sm:$0xff]
        %v938 = vld [vmem:[%s3 + $0x2e8] sm:$0xff]
        %v939 = vld [vmem:[%s3 + $0x2f0] sm:$0xff]
        %v940 = vld [vmem:[%s3 + $0x2f8] sm:$0xff]
        %v941 = vld [vmem:[%s3 + $0x300] sm:$0xff]
        %v942 = vld [vmem:[%s3 + $0x308] sm:$0xff]
        %v943 = vld [vmem:[%s3 + $0x310] sm:$0xff]
        %v944 = vld [vmem:[%s3 + $0x318] sm:$0xff]
        %v945 = vld [vmem:[%s3 + $0x320] sm:$0xff]
        %v946 = vld [vmem:[%s3 + $0x328] sm:$0xff]
        %v947 = vld [vmem:[%s3 + $0x330] sm:$0xff]
        %v948 = vld [vmem:[%s3 + $0x338] sm:$0xff]
        %v949 = vld [vmem:[%s3 + $0x340] sm:$0xff]
        %v950 = vld [vmem:[%s3 + $0x348] sm:$0xff]
        %v951 = vld [vmem:[%s3 + $0x350] sm:$0xff]
        %v952 = vld [vmem:[%s3 + $0x358] sm:$0xff]
        %v953 = vld [vmem:[%s3 + $0x360] sm:$0xff]
        %v954 = vld [vmem:[%s3 + $0x368] sm:$0xff]
        %v955 = vld [vmem:[%s3 + $0x370] sm:$0xff]
        %v956 = vld [vmem:[%s3 + $0x378] sm:$0xff]
        %v957 = vld [vmem:[%s3 + $0x380] sm:$0xff]
        %v958 = vld [vmem:[%s3 + $0x388] sm:$0xff]
        %v959 = vld [vmem:[%s3 + $0x390] sm:$0xff]
        %v960 = vld [vmem:[%s3 + $0x398] sm:$0xff]
        %v961 = vld [vmem:[%s3 + $0x3a0] sm:$0xff]
        %v962 = vld [vmem:[%s3 + $0x3a8] sm:$0xff]
        %v963 = vld [vmem:[%s3 + $0x3b0] sm:$0xff]
        %v964 = vld [vmem:[%s3 + $0x3b8] sm:$0xff]
        %v965 = vld [vmem:[%s3 + $0x3c0] sm:$0xff]
        %v966 = vld [vmem:[%s3 + $0x3c8] sm:$0xff]
        %v967 = vld [vmem:[%s3 + $0x3d0] sm:$0xff]
        %v968 = vld [vmem:[%s3 + $0x3d8] sm:$0xff]
        %v969 = vld [vmem:[%s3 + $0x3e0] sm:$0xff]
        %v970 = vld [vmem:[%s3 + $0x3e8] sm:$0xff]
        %v971 = vld [vmem:[%s3 + $0x3f0] sm:$0xff]
        %v972 = vld [vmem:[%s3 + $0x3f8] sm:$0xff]
        %v973 = vld [vmem:[%s3 + $0x400] sm:$0xff]
        %v974 = vld [vmem:[%s3 + $0x408] sm:$0xff]
        %v975 = vld [vmem:[%s3 + $0x410] sm:$0xff]
        %v976 = vld [vmem:[%s3 + $0x418] sm:$0xff]
        %v977 = vld [vmem:[%s3 + $0x420] sm:$0xff]
        %v978 = vld [vmem:[%s3 + $0x428] sm:$0xff]
        %v979 = vld [vmem:[%s3 + $0x430] sm:$0xff]
        %v980 = vld [vmem:[%s3 + $0x438] sm:$0xff]
        %v981 = vld [vmem:[%s3 + $0x440] sm:$0xff]
        %v982 = vld [vmem:[%s3 + $0x448] sm:$0xff]
        %v983 = vld [vmem:[%s3 + $0x450] sm:$0xff]
        %v984 = vld [vmem:[%s3 + $0x458] sm:$0xff]
        %v985 = vld [vmem:[%s3 + $0x460] sm:$0xff]
        %v986 = vld [vmem:[%s3 + $0x468] sm:$0xff]
        %v987 = vld [vmem:[%s3 + $0x470] sm:$0xff]
        %v988 = vld [vmem:[%s3 + $0x478] sm:$0xff]
        %v989 = vld [vmem:[%s3 + $0x480] sm:$0xff]
        %v990 = vld [vmem:[%s3 + $0x488] sm:$0xff]
        %v991 = vld [vmem:[%s3 + $0x490] sm:$0xff]
        %v992 = vld [vmem:[%s3 + $0x498] sm:$0xff]
        %v993 = vld [vmem:[%s3 + $0x4a0] sm:$0xff]
        %v994 = vld [vmem:[%s3 + $0x4a8] sm:$0xff]
        %v995 = vld [vmem:[%s3 + $0x4b0] sm:$0xff]
        %v996 = vld [vmem:[%s3 + $0x4b8] sm:$0xff]
        %v997 = vld [vmem:[%s3 + $0x4c0] sm:$0xff]
        %v998 = vld [vmem:[%s3 + $0x4c8] sm:$0xff]
        %v999 = vld [vmem:[%s3 + $0x4d0] sm:$0xff]
        %v1000 = vld [vmem:[%s3 + $0x4d8] sm:$0xff]
        %v1001 = vld [vmem:[%s3 + $0x4e0] sm:$0xff]
        %v1002 = vld [vmem:[%s3 + $0x4e8] sm:$0xff]
        %v1003 = vld [vmem:[%s3 + $0x4f0] sm:$0xff]
        %v1004 = vld [vmem:[%s3 + $0x4f8] sm:$0xff]
        %v1006 = vsel %vm476, %v846, 0
        %v1009 = vsel %vm476, %v848, 0
        %v1012 = vsel %vm476, %v850, 0
        %v1015 = vsel %vm476, %v852, 0
        %v1018 = vsel %vm476, %v854, 0
        %v1021 = vsel %vm476, %v856, 0
        %v1024 = vsel %vm476, %v858, 0
        %v1027 = vsel %vm476, %v860, 0
        %v1030 = vsel %vm476, %v862, 0
        %v1033 = vsel %vm476, %v864, 0
        %v1036 = vsel %vm476, %v866, 0
        %v1039 = vsel %vm476, %v868, 0
        %v1042 = vsel %vm476, %v870, 0
        %v1045 = vsel %vm476, %v872, 0
        %v1048 = vsel %vm476, %v874, 0
        %v1051 = vsel %vm476, %v876, 0
        %v1054 = vsel %vm476, %v878, 0
        %v1057 = vsel %vm476, %v880, 0
        %v1060 = vsel %vm476, %v882, 0
        %v1063 = vsel %vm476, %v884, 0
        %v1066 = vsel %vm476, %v886, 0
        %v1069 = vsel %vm476, %v888, 0
        %v1072 = vsel %vm476, %v890, 0
        %v1075 = vsel %vm476, %v892, 0
        %v1078 = vsel %vm476, %v894, 0
        %v1081 = vsel %vm476, %v896, 0
        %v1084 = vsel %vm476, %v898, 0
        %v1087 = vsel %vm476, %v900, 0
        %v1090 = vsel %vm476, %v902, 0
        %v1093 = vsel %vm476, %v904, 0
        %v1096 = vsel %vm476, %v906, 0
        %v1099 = vsel %vm476, %v908, 0
        %v1102 = vsel %vm476, %v910, 0
        %v1105 = vsel %vm476, %v912, 0
        %v1108 = vsel %vm476, %v914, 0
        %v1111 = vsel %vm476, %v916, 0
        %v1114 = vsel %vm476, %v918, 0
        %v1117 = vsel %vm476, %v920, 0
        %v1120 = vsel %vm476, %v922, 0
        %v1123 = vsel %vm476, %v924, 0
        %v1126 = vsel %vm476, %v926, 0
        %v1129 = vsel %vm476, %v928, 0
        %v1132 = vsel %vm476, %v930, 0
        %v1135 = vsel %vm476, %v932, 0
        %v1138 = vsel %vm476, %v934, 0
        %v1141 = vsel %vm476, %v936, 0
        %v1144 = vsel %vm476, %v938, 0
        %v1147 = vsel %vm476, %v940, 0
        %v1150 = vsel %vm476, %v942, 0
        %v1153 = vsel %vm476, %v944, 0
        %v1156 = vsel %vm476, %v946, 0
        %v1159 = vsel %vm476, %v948, 0
        %v1162 = vsel %vm476, %v950, 0
        %v1165 = vsel %vm476, %v952, 0
        %v1168 = vsel %vm476, %v954, 0
        %v1171 = vsel %vm476, %v956, 0
        %v1174 = vsel %vm476, %v958, 0
        %v1177 = vsel %vm476, %v960, 0
        %v1180 = vsel %vm476, %v962, 0
        %v1183 = vsel %vm476, %v964, 0
        %v1186 = vsel %vm476, %v966, 0
        %v1189 = vsel %vm476, %v968, 0
        %v1192 = vsel %vm476, %v970, 0
        %v1195 = vsel %vm476, %v972, 0
        %v1198 = vsel %vm476, %v974, 0
        %v1201 = vsel %vm476, %v976, 0
        %v1204 = vsel %vm476, %v978, 0
        %v1207 = vsel %vm476, %v980, 0
        %v1210 = vsel %vm476, %v982, 0
        %v1213 = vsel %vm476, %v984, 0
        %v1216 = vsel %vm476, %v986, 0
        %v1219 = vsel %vm476, %v988, 0
        %v1222 = vsel %vm476, %v990, 0
        %v1225 = vsel %vm476, %v992, 0
        %v1228 = vsel %vm476, %v994, 0
        %v1231 = vsel %vm476, %v996, 0
        %v1234 = vsel %vm476, %v998, 0
        %v1237 = vsel %vm476, %v1000, 0
        %v1240 = vsel %vm476, %v1002, 0
        %v1243 = vsel %vm476, %v1004, 0
        %1245 = vmatpush.msra.mxu0 %v418
        %1246 = vmatpush.msra.mxu0 %v416
        %1247 = vmatpush.msra.mxu0 %v414
        %1248 = vmatpush.msra.mxu0 %v412
        %1249 = vmatpush.msra.mxu0 %v410
        %1250 = vmatpush.msra.mxu0 %v408
        %1251 = vmatpush.msra.mxu0 %v406
        %1252 = vmatpush.msra.mxu0 %v404
        %1253 = vmatpush.msra.mxu0 %v402
        %1254 = vmatpush.msra.mxu0 %v400
        %1255 = vmatpush.msra.mxu0 %v398
        %1256 = vmatpush.msra.mxu0 %v396
        %1257 = vmatpush.msra.mxu0 %v394
        %1258 = vmatpush.msra.mxu0 %v392
        %1259 = vmatpush.msra.mxu0 %v390
        %1260 = vmatpush.msra.mxu0 %v388
        %1261 = vmatmul.f32.gmra.mxu0 %v845
        %v1262 = vpop.f32.mrf.mxu0
        %v1263 = vadd.f32 0.0, %v1262
        %1264 = vmatmul.f32.gmra.mxu0 %v847
        %v1265 = vpop.f32.mrf.mxu0
        %v1266 = vadd.f32 0.0, %v1265
        %1267 = vmatmul.f32.gmra.mxu0 %v849
        %v1268 = vpop.f32.mrf.mxu0
        %v1269 = vadd.f32 0.0, %v1268
        %1270 = vmatmul.f32.gmra.mxu0 %v851
        %v1271 = vpop.f32.mrf.mxu0
        %v1272 = vadd.f32 0.0, %v1271
        %1273 = vmatmul.f32.gmra.mxu0 %v853
        %v1274 = vpop.f32.mrf.mxu0
        %v1275 = vadd.f32 0.0, %v1274
        %1276 = vmatmul.f32.gmra.mxu0 %v855
        %v1277 = vpop.f32.mrf.mxu0
        %v1278 = vadd.f32 0.0, %v1277
        %1279 = vmatmul.f32.gmra.mxu0 %v857
        %v1280 = vpop.f32.mrf.mxu0
        %v1281 = vadd.f32 0.0, %v1280
        %1282 = vmatmul.f32.gmra.mxu0 %v859
        %v1283 = vpop.f32.mrf.mxu0
        %v1284 = vadd.f32 0.0, %v1283
        %1285 = vmatmul.f32.gmra.mxu0 %v861
        %v1286 = vpop.f32.mrf.mxu0
        %v1287 = vadd.f32 0.0, %v1286
        %1288 = vmatmul.f32.gmra.mxu0 %v863
        %v1289 = vpop.f32.mrf.mxu0
        %v1290 = vadd.f32 0.0, %v1289
        %1291 = vmatmul.f32.gmra.mxu0 %v865
        %v1292 = vpop.f32.mrf.mxu0
        %v1293 = vadd.f32 0.0, %v1292
        %1294 = vmatmul.f32.gmra.mxu0 %v867
        %v1295 = vpop.f32.mrf.mxu0
        %v1296 = vadd.f32 0.0, %v1295
        %1297 = vmatmul.f32.gmra.mxu0 %v869
        %v1298 = vpop.f32.mrf.mxu0
        %v1299 = vadd.f32 0.0, %v1298
        %1300 = vmatmul.f32.gmra.mxu0 %v871
        %v1301 = vpop.f32.mrf.mxu0
        %v1302 = vadd.f32 0.0, %v1301
        %1303 = vmatmul.f32.gmra.mxu0 %v873
        %v1304 = vpop.f32.mrf.mxu0
        %v1305 = vadd.f32 0.0, %v1304
        %1306 = vmatmul.f32.gmra.mxu0 %v875
        %v1307 = vpop.f32.mrf.mxu0
        %v1308 = vadd.f32 0.0, %v1307
        %1309 = vmatmul.f32.gmra.mxu0 %v877
        %v1310 = vpop.f32.mrf.mxu0
        %v1311 = vadd.f32 0.0, %v1310
        %1312 = vmatmul.f32.gmra.mxu0 %v879
        %v1313 = vpop.f32.mrf.mxu0
        %v1314 = vadd.f32 0.0, %v1313
        %1315 = vmatmul.f32.gmra.mxu0 %v881
        %v1316 = vpop.f32.mrf.mxu0
        %v1317 = vadd.f32 0.0, %v1316
        %1318 = vmatmul.f32.gmra.mxu0 %v883
        %v1319 = vpop.f32.mrf.mxu0
        %v1320 = vadd.f32 0.0, %v1319
        %1321 = vmatmul.f32.gmra.mxu0 %v885
        %v1322 = vpop.f32.mrf.mxu0
        %v1323 = vadd.f32 0.0, %v1322
        %1324 = vmatmul.f32.gmra.mxu0 %v887
        %v1325 = vpop.f32.mrf.mxu0
        %v1326 = vadd.f32 0.0, %v1325
        %1327 = vmatmul.f32.gmra.mxu0 %v889
        %v1328 = vpop.f32.mrf.mxu0
        %v1329 = vadd.f32 0.0, %v1328
        %1330 = vmatmul.f32.gmra.mxu0 %v891
        %v1331 = vpop.f32.mrf.mxu0
        %v1332 = vadd.f32 0.0, %v1331
        %1333 = vmatmul.f32.gmra.mxu0 %v893
        %v1334 = vpop.f32.mrf.mxu0
        %v1335 = vadd.f32 0.0, %v1334
        %1336 = vmatmul.f32.gmra.mxu0 %v895
        %v1337 = vpop.f32.mrf.mxu0
        %v1338 = vadd.f32 0.0, %v1337
        %1339 = vmatmul.f32.gmra.mxu0 %v897
        %v1340 = vpop.f32.mrf.mxu0
        %v1341 = vadd.f32 0.0, %v1340
        %1342 = vmatmul.f32.gmra.mxu0 %v899
        %v1343 = vpop.f32.mrf.mxu0
        %v1344 = vadd.f32 0.0, %v1343
        %1345 = vmatmul.f32.gmra.mxu0 %v901
        %v1346 = vpop.f32.mrf.mxu0
        %v1347 = vadd.f32 0.0, %v1346
        %1348 = vmatmul.f32.gmra.mxu0 %v903
        %v1349 = vpop.f32.mrf.mxu0
        %v1350 = vadd.f32 0.0, %v1349
        %1351 = vmatmul.f32.gmra.mxu0 %v905
        %v1352 = vpop.f32.mrf.mxu0
        %v1353 = vadd.f32 0.0, %v1352
        %1354 = vmatmul.f32.gmra.mxu0 %v907
        %v1355 = vpop.f32.mrf.mxu0
        %v1356 = vadd.f32 0.0, %v1355
        %1357 = vmatmul.f32.gmra.mxu0 %v909
        %v1358 = vpop.f32.mrf.mxu0
        %v1359 = vadd.f32 0.0, %v1358
        %1360 = vmatmul.f32.gmra.mxu0 %v911
        %v1361 = vpop.f32.mrf.mxu0
        %v1362 = vadd.f32 0.0, %v1361
        %1363 = vmatmul.f32.gmra.mxu0 %v913
        %v1364 = vpop.f32.mrf.mxu0
        %v1365 = vadd.f32 0.0, %v1364
        %1366 = vmatmul.f32.gmra.mxu0 %v915
        %v1367 = vpop.f32.mrf.mxu0
        %v1368 = vadd.f32 0.0, %v1367
        %1369 = vmatmul.f32.gmra.mxu0 %v917
        %v1370 = vpop.f32.mrf.mxu0
        %v1371 = vadd.f32 0.0, %v1370
        %1372 = vmatmul.f32.gmra.mxu0 %v919
        %v1373 = vpop.f32.mrf.mxu0
        %v1374 = vadd.f32 0.0, %v1373
        %1375 = vmatmul.f32.gmra.mxu0 %v921
        %v1376 = vpop.f32.mrf.mxu0
        %v1377 = vadd.f32 0.0, %v1376
        %1378 = vmatmul.f32.gmra.mxu0 %v923
        %v1379 = vpop.f32.mrf.mxu0
        %v1380 = vadd.f32 0.0, %v1379
        %1381 = vmatmul.f32.gmra.mxu0 %v925
        %v1382 = vpop.f32.mrf.mxu0
        %v1383 = vadd.f32 0.0, %v1382
        %1384 = vmatmul.f32.gmra.mxu0 %v927
        %v1385 = vpop.f32.mrf.mxu0
        %v1386 = vadd.f32 0.0, %v1385
        %1387 = vmatmul.f32.gmra.mxu0 %v929
        %v1388 = vpop.f32.mrf.mxu0
        %v1389 = vadd.f32 0.0, %v1388
        %1390 = vmatmul.f32.gmra.mxu0 %v931
        %v1391 = vpop.f32.mrf.mxu0
        %v1392 = vadd.f32 0.0, %v1391
        %1393 = vmatmul.f32.gmra.mxu0 %v933
        %v1394 = vpop.f32.mrf.mxu0
        %v1395 = vadd.f32 0.0, %v1394
        %1396 = vmatmul.f32.gmra.mxu0 %v935
        %v1397 = vpop.f32.mrf.mxu0
        %v1398 = vadd.f32 0.0, %v1397
        %1399 = vmatmul.f32.gmra.mxu0 %v937
        %v1400 = vpop.f32.mrf.mxu0
        %v1401 = vadd.f32 0.0, %v1400
        %1402 = vmatmul.f32.gmra.mxu0 %v939
        %v1403 = vpop.f32.mrf.mxu0
        %v1404 = vadd.f32 0.0, %v1403
        %1405 = vmatmul.f32.gmra.mxu0 %v941
        %v1406 = vpop.f32.mrf.mxu0
        %v1407 = vadd.f32 0.0, %v1406
        %1408 = vmatmul.f32.gmra.mxu0 %v943
        %v1409 = vpop.f32.mrf.mxu0
        %v1410 = vadd.f32 0.0, %v1409
        %1411 = vmatmul.f32.gmra.mxu0 %v945
        %v1412 = vpop.f32.mrf.mxu0
        %v1413 = vadd.f32 0.0, %v1412
        %1414 = vmatmul.f32.gmra.mxu0 %v947
        %v1415 = vpop.f32.mrf.mxu0
        %v1416 = vadd.f32 0.0, %v1415
        %1417 = vmatmul.f32.gmra.mxu0 %v949
        %v1418 = vpop.f32.mrf.mxu0
        %v1419 = vadd.f32 0.0, %v1418
        %1420 = vmatmul.f32.gmra.mxu0 %v951
        %v1421 = vpop.f32.mrf.mxu0
        %v1422 = vadd.f32 0.0, %v1421
        %1423 = vmatmul.f32.gmra.mxu0 %v953
        %v1424 = vpop.f32.mrf.mxu0
        %v1425 = vadd.f32 0.0, %v1424
        %1426 = vmatmul.f32.gmra.mxu0 %v955
        %v1427 = vpop.f32.mrf.mxu0
        %v1428 = vadd.f32 0.0, %v1427
        %1429 = vmatmul.f32.gmra.mxu0 %v957
        %v1430 = vpop.f32.mrf.mxu0
        %v1431 = vadd.f32 0.0, %v1430
        %1432 = vmatmul.f32.gmra.mxu0 %v959
        %v1433 = vpop.f32.mrf.mxu0
        %v1434 = vadd.f32 0.0, %v1433
        %1435 = vmatmul.f32.gmra.mxu0 %v961
        %v1436 = vpop.f32.mrf.mxu0
        %v1437 = vadd.f32 0.0, %v1436
        %1438 = vmatmul.f32.gmra.mxu0 %v963
        %v1439 = vpop.f32.mrf.mxu0
        %v1440 = vadd.f32 0.0, %v1439
        %1441 = vmatmul.f32.gmra.mxu0 %v965
        %v1442 = vpop.f32.mrf.mxu0
        %v1443 = vadd.f32 0.0, %v1442
        %1444 = vmatmul.f32.gmra.mxu0 %v967
        %v1445 = vpop.f32.mrf.mxu0
        %v1446 = vadd.f32 0.0, %v1445
        %1447 = vmatmul.f32.gmra.mxu0 %v969
        %v1448 = vpop.f32.mrf.mxu0
        %v1449 = vadd.f32 0.0, %v1448
        %1450 = vmatmul.f32.gmra.mxu0 %v971
        %v1451 = vpop.f32.mrf.mxu0
        %v1452 = vadd.f32 0.0, %v1451
        %1453 = vmatmul.f32.gmra.mxu0 %v973
        %v1454 = vpop.f32.mrf.mxu0
        %v1455 = vadd.f32 0.0, %v1454
        %1456 = vmatmul.f32.gmra.mxu0 %v975
        %v1457 = vpop.f32.mrf.mxu0
        %v1458 = vadd.f32 0.0, %v1457
        %1459 = vmatmul.f32.gmra.mxu0 %v977
        %v1460 = vpop.f32.mrf.mxu0
        %v1461 = vadd.f32 0.0, %v1460
        %1462 = vmatmul.f32.gmra.mxu0 %v979
        %v1463 = vpop.f32.mrf.mxu0
        %v1464 = vadd.f32 0.0, %v1463
        %1465 = vmatmul.f32.gmra.mxu0 %v981
        %v1466 = vpop.f32.mrf.mxu0
        %v1467 = vadd.f32 0.0, %v1466
        %1468 = vmatmul.f32.gmra.mxu0 %v983
        %v1469 = vpop.f32.mrf.mxu0
        %v1470 = vadd.f32 0.0, %v1469
        %1471 = vmatmul.f32.gmra.mxu0 %v985
        %v1472 = vpop.f32.mrf.mxu0
        %v1473 = vadd.f32 0.0, %v1472
        %1474 = vmatmul.f32.gmra.mxu0 %v987
        %v1475 = vpop.f32.mrf.mxu0
        %v1476 = vadd.f32 0.0, %v1475
        %1477 = vmatmul.f32.gmra.mxu0 %v989
        %v1478 = vpop.f32.mrf.mxu0
        %v1479 = vadd.f32 0.0, %v1478
        %1480 = vmatmul.f32.gmra.mxu0 %v991
        %v1481 = vpop.f32.mrf.mxu0
        %v1482 = vadd.f32 0.0, %v1481
        %1483 = vmatmul.f32.gmra.mxu0 %v993
        %v1484 = vpop.f32.mrf.mxu0
        %v1485 = vadd.f32 0.0, %v1484
        %1486 = vmatmul.f32.gmra.mxu0 %v995
        %v1487 = vpop.f32.mrf.mxu0
        %v1488 = vadd.f32 0.0, %v1487
        %1489 = vmatmul.f32.gmra.mxu0 %v997
        %v1490 = vpop.f32.mrf.mxu0
        %v1491 = vadd.f32 0.0, %v1490
        %1492 = vmatmul.f32.gmra.mxu0 %v999
        %v1493 = vpop.f32.mrf.mxu0
        %v1494 = vadd.f32 0.0, %v1493
        %1495 = vmatmul.f32.gmra.mxu0 %v1001
        %v1496 = vpop.f32.mrf.mxu0
        %v1497 = vadd.f32 0.0, %v1496
        %1498 = vmatmul.f32.gmra.mxu0 %v1003
        %v1499 = vpop.f32.mrf.mxu0
        %v1500 = vadd.f32 0.0, %v1499
        %1501 = vdwg.mxu0
        %1502 = vmatpush.msra.mxu0 0.0
        %1503 = vmatpush.msra.mxu0 0.0
        %1504 = vmatpush.msra.mxu0 0.0
        %1505 = vmatpush.msra.mxu0 0.0
        %1506 = vmatpush.msra.mxu0 0.0
        %1507 = vmatpush.msra.mxu0 0.0
        %1508 = vmatpush.msra.mxu0 0.0
        %1509 = vmatpush.msra.mxu0 0.0
        %1510 = vmatpush.msra.mxu0 0.0
        %1511 = vmatpush.msra.mxu0 0.0
        %1512 = vmatpush.msra.mxu0 0.0
        %1513 = vmatpush.msra.mxu0 0.0
        %1514 = vmatpush.msra.mxu0 0.0
        %1515 = vmatpush.msra.mxu0 %v424
        %1516 = vmatpush.msra.mxu0 %v422
        %1517 = vmatpush.msra.mxu0 %v420
        %1518 = vmatmul.f32.gmra.mxu0 %v1006
        %v1519 = vpop.f32.mrf.mxu0
        %v1520 = vadd.f32 %v1263, %v1519
        %1521 = vmatmul.f32.gmra.mxu0 %v1009
        %v1522 = vpop.f32.mrf.mxu0
        %v1523 = vadd.f32 %v1266, %v1522
        %1524 = vmatmul.f32.gmra.mxu0 %v1012
        %v1525 = vpop.f32.mrf.mxu0
        %v1526 = vadd.f32 %v1269, %v1525
        %1527 = vmatmul.f32.gmra.mxu0 %v1015
        %v1528 = vpop.f32.mrf.mxu0
        %v1529 = vadd.f32 %v1272, %v1528
        %1530 = vmatmul.f32.gmra.mxu0 %v1018
        %v1531 = vpop.f32.mrf.mxu0
        %v1532 = vadd.f32 %v1275, %v1531
        %1533 = vmatmul.f32.gmra.mxu0 %v1021
        %v1534 = vpop.f32.mrf.mxu0
        %v1535 = vadd.f32 %v1278, %v1534
        %1536 = vmatmul.f32.gmra.mxu0 %v1024
        %v1537 = vpop.f32.mrf.mxu0
        %v1538 = vadd.f32 %v1281, %v1537
        %1539 = vmatmul.f32.gmra.mxu0 %v1027
        %v1540 = vpop.f32.mrf.mxu0
        %v1541 = vadd.f32 %v1284, %v1540
        %1542 = vmatmul.f32.gmra.mxu0 %v1030
        %v1543 = vpop.f32.mrf.mxu0
        %v1544 = vadd.f32 %v1287, %v1543
        %1545 = vmatmul.f32.gmra.mxu0 %v1033
        %v1546 = vpop.f32.mrf.mxu0
        %v1547 = vadd.f32 %v1290, %v1546
        %1548 = vmatmul.f32.gmra.mxu0 %v1036
        %v1549 = vpop.f32.mrf.mxu0
        %v1550 = vadd.f32 %v1293, %v1549
        %1551 = vmatmul.f32.gmra.mxu0 %v1039
        %v1552 = vpop.f32.mrf.mxu0
        %v1553 = vadd.f32 %v1296, %v1552
        %1554 = vmatmul.f32.gmra.mxu0 %v1042
        %v1555 = vpop.f32.mrf.mxu0
        %v1556 = vadd.f32 %v1299, %v1555
        %1557 = vmatmul.f32.gmra.mxu0 %v1045
        %v1558 = vpop.f32.mrf.mxu0
        %v1559 = vadd.f32 %v1302, %v1558
        %1560 = vmatmul.f32.gmra.mxu0 %v1048
        %v1561 = vpop.f32.mrf.mxu0
        %v1562 = vadd.f32 %v1305, %v1561
        %1563 = vmatmul.f32.gmra.mxu0 %v1051
        %v1564 = vpop.f32.mrf.mxu0
        %v1565 = vadd.f32 %v1308, %v1564
        %1566 = vmatmul.f32.gmra.mxu0 %v1054
        %v1567 = vpop.f32.mrf.mxu0
        %v1568 = vadd.f32 %v1311, %v1567
        %1569 = vmatmul.f32.gmra.mxu0 %v1057
        %v1570 = vpop.f32.mrf.mxu0
        %v1571 = vadd.f32 %v1314, %v1570
        %1572 = vmatmul.f32.gmra.mxu0 %v1060
        %v1573 = vpop.f32.mrf.mxu0
        %v1574 = vadd.f32 %v1317, %v1573
        %1575 = vmatmul.f32.gmra.mxu0 %v1063
        %v1576 = vpop.f32.mrf.mxu0
        %v1577 = vadd.f32 %v1320, %v1576
        %1578 = vmatmul.f32.gmra.mxu0 %v1066
        %v1579 = vpop.f32.mrf.mxu0
        %v1580 = vadd.f32 %v1323, %v1579
        %1581 = vmatmul.f32.gmra.mxu0 %v1069
        %v1582 = vpop.f32.mrf.mxu0
        %v1583 = vadd.f32 %v1326, %v1582
        %1584 = vmatmul.f32.gmra.mxu0 %v1072
        %v1585 = vpop.f32.mrf.mxu0
        %v1586 = vadd.f32 %v1329, %v1585
        %1587 = vmatmul.f32.gmra.mxu0 %v1075
        %v1588 = vpop.f32.mrf.mxu0
        %v1589 = vadd.f32 %v1332, %v1588
        %1590 = vmatmul.f32.gmra.mxu0 %v1078
        %v1591 = vpop.f32.mrf.mxu0
        %v1592 = vadd.f32 %v1335, %v1591
        %1593 = vmatmul.f32.gmra.mxu0 %v1081
        %v1594 = vpop.f32.mrf.mxu0
        %v1595 = vadd.f32 %v1338, %v1594
        %1596 = vmatmul.f32.gmra.mxu0 %v1084
        %v1597 = vpop.f32.mrf.mxu0
        %v1598 = vadd.f32 %v1341, %v1597
        %1599 = vmatmul.f32.gmra.mxu0 %v1087
        %v1600 = vpop.f32.mrf.mxu0
        %v1601 = vadd.f32 %v1344, %v1600
        %1602 = vmatmul.f32.gmra.mxu0 %v1090
        %v1603 = vpop.f32.mrf.mxu0
        %v1604 = vadd.f32 %v1347, %v1603
        %1605 = vmatmul.f32.gmra.mxu0 %v1093
        %v1606 = vpop.f32.mrf.mxu0
        %v1607 = vadd.f32 %v1350, %v1606
        %1608 = vmatmul.f32.gmra.mxu0 %v1096
        %v1609 = vpop.f32.mrf.mxu0
        %v1610 = vadd.f32 %v1353, %v1609
        %1611 = vmatmul.f32.gmra.mxu0 %v1099
        %v1612 = vpop.f32.mrf.mxu0
        %v1613 = vadd.f32 %v1356, %v1612
        %1614 = vmatmul.f32.gmra.mxu0 %v1102
        %v1615 = vpop.f32.mrf.mxu0
        %v1616 = vadd.f32 %v1359, %v1615
        %1617 = vmatmul.f32.gmra.mxu0 %v1105
        %v1618 = vpop.f32.mrf.mxu0
        %v1619 = vadd.f32 %v1362, %v1618
        %1620 = vmatmul.f32.gmra.mxu0 %v1108
        %v1621 = vpop.f32.mrf.mxu0
        %v1622 = vadd.f32 %v1365, %v1621
        %1623 = vmatmul.f32.gmra.mxu0 %v1111
        %v1624 = vpop.f32.mrf.mxu0
        %v1625 = vadd.f32 %v1368, %v1624
        %1626 = vmatmul.f32.gmra.mxu0 %v1114
        %v1627 = vpop.f32.mrf.mxu0
        %v1628 = vadd.f32 %v1371, %v1627
        %1629 = vmatmul.f32.gmra.mxu0 %v1117
        %v1630 = vpop.f32.mrf.mxu0
        %v1631 = vadd.f32 %v1374, %v1630
        %1632 = vmatmul.f32.gmra.mxu0 %v1120
        %v1633 = vpop.f32.mrf.mxu0
        %v1634 = vadd.f32 %v1377, %v1633
        %1635 = vmatmul.f32.gmra.mxu0 %v1123
        %v1636 = vpop.f32.mrf.mxu0
        %v1637 = vadd.f32 %v1380, %v1636
        %1638 = vmatmul.f32.gmra.mxu0 %v1126
        %v1639 = vpop.f32.mrf.mxu0
        %v1640 = vadd.f32 %v1383, %v1639
        %1641 = vmatmul.f32.gmra.mxu0 %v1129
        %v1642 = vpop.f32.mrf.mxu0
        %v1643 = vadd.f32 %v1386, %v1642
        %1644 = vmatmul.f32.gmra.mxu0 %v1132
        %v1645 = vpop.f32.mrf.mxu0
        %v1646 = vadd.f32 %v1389, %v1645
        %1647 = vmatmul.f32.gmra.mxu0 %v1135
        %v1648 = vpop.f32.mrf.mxu0
        %v1649 = vadd.f32 %v1392, %v1648
        %1650 = vmatmul.f32.gmra.mxu0 %v1138
        %v1651 = vpop.f32.mrf.mxu0
        %v1652 = vadd.f32 %v1395, %v1651
        %1653 = vmatmul.f32.gmra.mxu0 %v1141
        %v1654 = vpop.f32.mrf.mxu0
        %v1655 = vadd.f32 %v1398, %v1654
        %1656 = vmatmul.f32.gmra.mxu0 %v1144
        %v1657 = vpop.f32.mrf.mxu0
        %v1658 = vadd.f32 %v1401, %v1657
        %1659 = vmatmul.f32.gmra.mxu0 %v1147
        %v1660 = vpop.f32.mrf.mxu0
        %v1661 = vadd.f32 %v1404, %v1660
        %1662 = vmatmul.f32.gmra.mxu0 %v1150
        %v1663 = vpop.f32.mrf.mxu0
        %v1664 = vadd.f32 %v1407, %v1663
        %1665 = vmatmul.f32.gmra.mxu0 %v1153
        %v1666 = vpop.f32.mrf.mxu0
        %v1667 = vadd.f32 %v1410, %v1666
        %1668 = vmatmul.f32.gmra.mxu0 %v1156
        %v1669 = vpop.f32.mrf.mxu0
        %v1670 = vadd.f32 %v1413, %v1669
        %1671 = vmatmul.f32.gmra.mxu0 %v1159
        %v1672 = vpop.f32.mrf.mxu0
        %v1673 = vadd.f32 %v1416, %v1672
        %1674 = vmatmul.f32.gmra.mxu0 %v1162
        %v1675 = vpop.f32.mrf.mxu0
        %v1676 = vadd.f32 %v1419, %v1675
        %1677 = vmatmul.f32.gmra.mxu0 %v1165
        %v1678 = vpop.f32.mrf.mxu0
        %v1679 = vadd.f32 %v1422, %v1678
        %1680 = vmatmul.f32.gmra.mxu0 %v1168
        %v1681 = vpop.f32.mrf.mxu0
        %v1682 = vadd.f32 %v1425, %v1681
        %1683 = vmatmul.f32.gmra.mxu0 %v1171
        %v1684 = vpop.f32.mrf.mxu0
        %v1685 = vadd.f32 %v1428, %v1684
        %1686 = vmatmul.f32.gmra.mxu0 %v1174
        %v1687 = vpop.f32.mrf.mxu0
        %v1688 = vadd.f32 %v1431, %v1687
        %1689 = vmatmul.f32.gmra.mxu0 %v1177
        %v1690 = vpop.f32.mrf.mxu0
        %v1691 = vadd.f32 %v1434, %v1690
        %1692 = vmatmul.f32.gmra.mxu0 %v1180
        %v1693 = vpop.f32.mrf.mxu0
        %v1694 = vadd.f32 %v1437, %v1693
        %1695 = vmatmul.f32.gmra.mxu0 %v1183
        %v1696 = vpop.f32.mrf.mxu0
        %v1697 = vadd.f32 %v1440, %v1696
        %1698 = vmatmul.f32.gmra.mxu0 %v1186
        %v1699 = vpop.f32.mrf.mxu0
        %v1700 = vadd.f32 %v1443, %v1699
        %1701 = vmatmul.f32.gmra.mxu0 %v1189
        %v1702 = vpop.f32.mrf.mxu0
        %v1703 = vadd.f32 %v1446, %v1702
        %1704 = vmatmul.f32.gmra.mxu0 %v1192
        %v1705 = vpop.f32.mrf.mxu0
        %v1706 = vadd.f32 %v1449, %v1705
        %1707 = vmatmul.f32.gmra.mxu0 %v1195
        %v1708 = vpop.f32.mrf.mxu0
        %v1709 = vadd.f32 %v1452, %v1708
        %1710 = vmatmul.f32.gmra.mxu0 %v1198
        %v1711 = vpop.f32.mrf.mxu0
        %v1712 = vadd.f32 %v1455, %v1711
        %1713 = vmatmul.f32.gmra.mxu0 %v1201
        %v1714 = vpop.f32.mrf.mxu0
        %v1715 = vadd.f32 %v1458, %v1714
        %1716 = vmatmul.f32.gmra.mxu0 %v1204
        %v1717 = vpop.f32.mrf.mxu0
        %v1718 = vadd.f32 %v1461, %v1717
        %1719 = vmatmul.f32.gmra.mxu0 %v1207
        %v1720 = vpop.f32.mrf.mxu0
        %v1721 = vadd.f32 %v1464, %v1720
        %1722 = vmatmul.f32.gmra.mxu0 %v1210
        %v1723 = vpop.f32.mrf.mxu0
        %v1724 = vadd.f32 %v1467, %v1723
        %1725 = vmatmul.f32.gmra.mxu0 %v1213
        %v1726 = vpop.f32.mrf.mxu0
        %v1727 = vadd.f32 %v1470, %v1726
        %1728 = vmatmul.f32.gmra.mxu0 %v1216
        %v1729 = vpop.f32.mrf.mxu0
        %v1730 = vadd.f32 %v1473, %v1729
        %1731 = vmatmul.f32.gmra.mxu0 %v1219
        %v1732 = vpop.f32.mrf.mxu0
        %v1733 = vadd.f32 %v1476, %v1732
        %1734 = vmatmul.f32.gmra.mxu0 %v1222
        %v1735 = vpop.f32.mrf.mxu0
        %v1736 = vadd.f32 %v1479, %v1735
        %1737 = vmatmul.f32.gmra.mxu0 %v1225
        %v1738 = vpop.f32.mrf.mxu0
        %v1739 = vadd.f32 %v1482, %v1738
        %1740 = vmatmul.f32.gmra.mxu0 %v1228
        %v1741 = vpop.f32.mrf.mxu0
        %v1742 = vadd.f32 %v1485, %v1741
        %1743 = vmatmul.f32.gmra.mxu0 %v1231
        %v1744 = vpop.f32.mrf.mxu0
        %v1745 = vadd.f32 %v1488, %v1744
        %1746 = vmatmul.f32.gmra.mxu0 %v1234
        %v1747 = vpop.f32.mrf.mxu0
        %v1748 = vadd.f32 %v1491, %v1747
        %1749 = vmatmul.f32.gmra.mxu0 %v1237
        %v1750 = vpop.f32.mrf.mxu0
        %v1751 = vadd.f32 %v1494, %v1750
        %1752 = vmatmul.f32.gmra.mxu0 %v1240
        %v1753 = vpop.f32.mrf.mxu0
        %v1754 = vadd.f32 %v1497, %v1753
        %1755 = vmatmul.f32.gmra.mxu0 %v1243
        %v1756 = vpop.f32.mrf.mxu0
        %v1757 = vadd.f32 %v1500, %v1756
        %1758 = vdwg.mxu0
        %1759 = vmatpush.msra.mxu0 %v419
        %1760 = vmatpush.msra.mxu0 %v417
        %1761 = vmatpush.msra.mxu0 %v415
        %1762 = vmatpush.msra.mxu0 %v413
        %1763 = vmatpush.msra.mxu0 %v411
        %1764 = vmatpush.msra.mxu0 %v409
        %1765 = vmatpush.msra.mxu0 %v407
        %1766 = vmatpush.msra.mxu0 %v405
        %1767 = vmatpush.msra.mxu0 %v403
        %1768 = vmatpush.msra.mxu0 %v401
        %1769 = vmatpush.msra.mxu0 %v399
        %1770 = vmatpush.msra.mxu0 %v397
        %1771 = vmatpush.msra.mxu0 %v395
        %1772 = vmatpush.msra.mxu0 %v393
        %1773 = vmatpush.msra.mxu0 %v391
        %1774 = vmatpush.msra.mxu0 %v389
        %1775 = vmatmul.f32.gmra.mxu0 %v845
        %v1776 = vpop.f32.mrf.mxu0
        %v1777 = vadd.f32 0.0, %v1776
        %1778 = vmatmul.f32.gmra.mxu0 %v847
        %v1779 = vpop.f32.mrf.mxu0
        %v1780 = vadd.f32 0.0, %v1779
        %1781 = vmatmul.f32.gmra.mxu0 %v849
        %v1782 = vpop.f32.mrf.mxu0
        %v1783 = vadd.f32 0.0, %v1782
        %1784 = vmatmul.f32.gmra.mxu0 %v851
        %v1785 = vpop.f32.mrf.mxu0
        %v1786 = vadd.f32 0.0, %v1785
        %1787 = vmatmul.f32.gmra.mxu0 %v853
        %v1788 = vpop.f32.mrf.mxu0
        %v1789 = vadd.f32 0.0, %v1788
        %1790 = vmatmul.f32.gmra.mxu0 %v855
        %v1791 = vpop.f32.mrf.mxu0
        %v1792 = vadd.f32 0.0, %v1791
        %1793 = vmatmul.f32.gmra.mxu0 %v857
        %v1794 = vpop.f32.mrf.mxu0
        %v1795 = vadd.f32 0.0, %v1794
        %1796 = vmatmul.f32.gmra.mxu0 %v859
        %v1797 = vpop.f32.mrf.mxu0
        %v1798 = vadd.f32 0.0, %v1797
        %1799 = vmatmul.f32.gmra.mxu0 %v861
        %v1800 = vpop.f32.mrf.mxu0
        %v1801 = vadd.f32 0.0, %v1800
        %1802 = vmatmul.f32.gmra.mxu0 %v863
        %v1803 = vpop.f32.mrf.mxu0
        %v1804 = vadd.f32 0.0, %v1803
        %1805 = vmatmul.f32.gmra.mxu0 %v865
        %v1806 = vpop.f32.mrf.mxu0
        %v1807 = vadd.f32 0.0, %v1806
        %1808 = vmatmul.f32.gmra.mxu0 %v867
        %v1809 = vpop.f32.mrf.mxu0
        %v1810 = vadd.f32 0.0, %v1809
        %1811 = vmatmul.f32.gmra.mxu0 %v869
        %v1812 = vpop.f32.mrf.mxu0
        %v1813 = vadd.f32 0.0, %v1812
        %1814 = vmatmul.f32.gmra.mxu0 %v871
        %v1815 = vpop.f32.mrf.mxu0
        %v1816 = vadd.f32 0.0, %v1815
        %1817 = vmatmul.f32.gmra.mxu0 %v873
        %v1818 = vpop.f32.mrf.mxu0
        %v1819 = vadd.f32 0.0, %v1818
        %1820 = vmatmul.f32.gmra.mxu0 %v875
        %v1821 = vpop.f32.mrf.mxu0
        %v1822 = vadd.f32 0.0, %v1821
        %1823 = vmatmul.f32.gmra.mxu0 %v877
        %v1824 = vpop.f32.mrf.mxu0
        %v1825 = vadd.f32 0.0, %v1824
        %1826 = vmatmul.f32.gmra.mxu0 %v879
        %v1827 = vpop.f32.mrf.mxu0
        %v1828 = vadd.f32 0.0, %v1827
        %1829 = vmatmul.f32.gmra.mxu0 %v881
        %v1830 = vpop.f32.mrf.mxu0
        %v1831 = vadd.f32 0.0, %v1830
        %1832 = vmatmul.f32.gmra.mxu0 %v883
        %v1833 = vpop.f32.mrf.mxu0
        %v1834 = vadd.f32 0.0, %v1833
        %1835 = vmatmul.f32.gmra.mxu0 %v885
        %v1836 = vpop.f32.mrf.mxu0
        %v1837 = vadd.f32 0.0, %v1836
        %1838 = vmatmul.f32.gmra.mxu0 %v887
        %v1839 = vpop.f32.mrf.mxu0
        %v1840 = vadd.f32 0.0, %v1839
        %1841 = vmatmul.f32.gmra.mxu0 %v889
        %v1842 = vpop.f32.mrf.mxu0
        %v1843 = vadd.f32 0.0, %v1842
        %1844 = vmatmul.f32.gmra.mxu0 %v891
        %v1845 = vpop.f32.mrf.mxu0
        %v1846 = vadd.f32 0.0, %v1845
        %1847 = vmatmul.f32.gmra.mxu0 %v893
        %v1848 = vpop.f32.mrf.mxu0
        %v1849 = vadd.f32 0.0, %v1848
        %1850 = vmatmul.f32.gmra.mxu0 %v895
        %v1851 = vpop.f32.mrf.mxu0
        %v1852 = vadd.f32 0.0, %v1851
        %1853 = vmatmul.f32.gmra.mxu0 %v897
        %v1854 = vpop.f32.mrf.mxu0
        %v1855 = vadd.f32 0.0, %v1854
        %1856 = vmatmul.f32.gmra.mxu0 %v899
        %v1857 = vpop.f32.mrf.mxu0
        %v1858 = vadd.f32 0.0, %v1857
        %1859 = vmatmul.f32.gmra.mxu0 %v901
        %v1860 = vpop.f32.mrf.mxu0
        %v1861 = vadd.f32 0.0, %v1860
        %1862 = vmatmul.f32.gmra.mxu0 %v903
        %v1863 = vpop.f32.mrf.mxu0
        %v1864 = vadd.f32 0.0, %v1863
        %1865 = vmatmul.f32.gmra.mxu0 %v905
        %v1866 = vpop.f32.mrf.mxu0
        %v1867 = vadd.f32 0.0, %v1866
        %1868 = vmatmul.f32.gmra.mxu0 %v907
        %v1869 = vpop.f32.mrf.mxu0
        %v1870 = vadd.f32 0.0, %v1869
        %1871 = vmatmul.f32.gmra.mxu0 %v909
        %v1872 = vpop.f32.mrf.mxu0
        %v1873 = vadd.f32 0.0, %v1872
        %1874 = vmatmul.f32.gmra.mxu0 %v911
        %v1875 = vpop.f32.mrf.mxu0
        %v1876 = vadd.f32 0.0, %v1875
        %1877 = vmatmul.f32.gmra.mxu0 %v913
        %v1878 = vpop.f32.mrf.mxu0
        %v1879 = vadd.f32 0.0, %v1878
        %1880 = vmatmul.f32.gmra.mxu0 %v915
        %v1881 = vpop.f32.mrf.mxu0
        %v1882 = vadd.f32 0.0, %v1881
        %1883 = vmatmul.f32.gmra.mxu0 %v917
        %v1884 = vpop.f32.mrf.mxu0
        %v1885 = vadd.f32 0.0, %v1884
        %1886 = vmatmul.f32.gmra.mxu0 %v919
        %v1887 = vpop.f32.mrf.mxu0
        %v1888 = vadd.f32 0.0, %v1887
        %1889 = vmatmul.f32.gmra.mxu0 %v921
        %v1890 = vpop.f32.mrf.mxu0
        %v1891 = vadd.f32 0.0, %v1890
        %1892 = vmatmul.f32.gmra.mxu0 %v923
        %v1893 = vpop.f32.mrf.mxu0
        %v1894 = vadd.f32 0.0, %v1893
        %1895 = vmatmul.f32.gmra.mxu0 %v925
        %v1896 = vpop.f32.mrf.mxu0
        %v1897 = vadd.f32 0.0, %v1896
        %1898 = vmatmul.f32.gmra.mxu0 %v927
        %v1899 = vpop.f32.mrf.mxu0
        %v1900 = vadd.f32 0.0, %v1899
        %1901 = vmatmul.f32.gmra.mxu0 %v929
        %v1902 = vpop.f32.mrf.mxu0
        %v1903 = vadd.f32 0.0, %v1902
        %1904 = vmatmul.f32.gmra.mxu0 %v931
        %v1905 = vpop.f32.mrf.mxu0
        %v1906 = vadd.f32 0.0, %v1905
        %1907 = vmatmul.f32.gmra.mxu0 %v933
        %v1908 = vpop.f32.mrf.mxu0
        %v1909 = vadd.f32 0.0, %v1908
        %1910 = vmatmul.f32.gmra.mxu0 %v935
        %v1911 = vpop.f32.mrf.mxu0
        %v1912 = vadd.f32 0.0, %v1911
        %1913 = vmatmul.f32.gmra.mxu0 %v937
        %v1914 = vpop.f32.mrf.mxu0
        %v1915 = vadd.f32 0.0, %v1914
        %1916 = vmatmul.f32.gmra.mxu0 %v939
        %v1917 = vpop.f32.mrf.mxu0
        %v1918 = vadd.f32 0.0, %v1917
        %1919 = vmatmul.f32.gmra.mxu0 %v941
        %v1920 = vpop.f32.mrf.mxu0
        %v1921 = vadd.f32 0.0, %v1920
        %1922 = vmatmul.f32.gmra.mxu0 %v943
        %v1923 = vpop.f32.mrf.mxu0
        %v1924 = vadd.f32 0.0, %v1923
        %1925 = vmatmul.f32.gmra.mxu0 %v945
        %v1926 = vpop.f32.mrf.mxu0
        %v1927 = vadd.f32 0.0, %v1926
        %1928 = vmatmul.f32.gmra.mxu0 %v947
        %v1929 = vpop.f32.mrf.mxu0
        %v1930 = vadd.f32 0.0, %v1929
        %1931 = vmatmul.f32.gmra.mxu0 %v949
        %v1932 = vpop.f32.mrf.mxu0
        %v1933 = vadd.f32 0.0, %v1932
        %1934 = vmatmul.f32.gmra.mxu0 %v951
        %v1935 = vpop.f32.mrf.mxu0
        %v1936 = vadd.f32 0.0, %v1935
        %1937 = vmatmul.f32.gmra.mxu0 %v953
        %v1938 = vpop.f32.mrf.mxu0
        %v1939 = vadd.f32 0.0, %v1938
        %1940 = vmatmul.f32.gmra.mxu0 %v955
        %v1941 = vpop.f32.mrf.mxu0
        %v1942 = vadd.f32 0.0, %v1941
        %1943 = vmatmul.f32.gmra.mxu0 %v957
        %v1944 = vpop.f32.mrf.mxu0
        %v1945 = vadd.f32 0.0, %v1944
        %1946 = vmatmul.f32.gmra.mxu0 %v959
        %v1947 = vpop.f32.mrf.mxu0
        %v1948 = vadd.f32 0.0, %v1947
        %1949 = vmatmul.f32.gmra.mxu0 %v961
        %v1950 = vpop.f32.mrf.mxu0
        %v1951 = vadd.f32 0.0, %v1950
        %1952 = vmatmul.f32.gmra.mxu0 %v963
        %v1953 = vpop.f32.mrf.mxu0
        %v1954 = vadd.f32 0.0, %v1953
        %1955 = vmatmul.f32.gmra.mxu0 %v965
        %v1956 = vpop.f32.mrf.mxu0
        %v1957 = vadd.f32 0.0, %v1956
        %1958 = vmatmul.f32.gmra.mxu0 %v967
        %v1959 = vpop.f32.mrf.mxu0
        %v1960 = vadd.f32 0.0, %v1959
        %1961 = vmatmul.f32.gmra.mxu0 %v969
        %v1962 = vpop.f32.mrf.mxu0
        %v1963 = vadd.f32 0.0, %v1962
        %1964 = vmatmul.f32.gmra.mxu0 %v971
        %v1965 = vpop.f32.mrf.mxu0
        %v1966 = vadd.f32 0.0, %v1965
        %1967 = vmatmul.f32.gmra.mxu0 %v973
        %v1968 = vpop.f32.mrf.mxu0
        %v1969 = vadd.f32 0.0, %v1968
        %1970 = vmatmul.f32.gmra.mxu0 %v975
        %v1971 = vpop.f32.mrf.mxu0
        %v1972 = vadd.f32 0.0, %v1971
        %1973 = vmatmul.f32.gmra.mxu0 %v977
        %v1974 = vpop.f32.mrf.mxu0
        %v1975 = vadd.f32 0.0, %v1974
        %1976 = vmatmul.f32.gmra.mxu0 %v979
        %v1977 = vpop.f32.mrf.mxu0
        %v1978 = vadd.f32 0.0, %v1977
        %1979 = vmatmul.f32.gmra.mxu0 %v981
        %v1980 = vpop.f32.mrf.mxu0
        %v1981 = vadd.f32 0.0, %v1980
        %1982 = vmatmul.f32.gmra.mxu0 %v983
        %v1983 = vpop.f32.mrf.mxu0
        %v1984 = vadd.f32 0.0, %v1983
        %1985 = vmatmul.f32.gmra.mxu0 %v985
        %v1986 = vpop.f32.mrf.mxu0
        %v1987 = vadd.f32 0.0, %v1986
        %1988 = vmatmul.f32.gmra.mxu0 %v987
        %v1989 = vpop.f32.mrf.mxu0
        %v1990 = vadd.f32 0.0, %v1989
        %1991 = vmatmul.f32.gmra.mxu0 %v989
        %v1992 = vpop.f32.mrf.mxu0
        %v1993 = vadd.f32 0.0, %v1992
        %1994 = vmatmul.f32.gmra.mxu0 %v991
        %v1995 = vpop.f32.mrf.mxu0
        %v1996 = vadd.f32 0.0, %v1995
        %1997 = vmatmul.f32.gmra.mxu0 %v993
        %v1998 = vpop.f32.mrf.mxu0
        %v1999 = vadd.f32 0.0, %v1998
        %2000 = vmatmul.f32.gmra.mxu0 %v995
        %v2001 = vpop.f32.mrf.mxu0
        %v2002 = vadd.f32 0.0, %v2001
        %2003 = vmatmul.f32.gmra.mxu0 %v997
        %v2004 = vpop.f32.mrf.mxu0
        %v2005 = vadd.f32 0.0, %v2004
        %2006 = vmatmul.f32.gmra.mxu0 %v999
        %v2007 = vpop.f32.mrf.mxu0
        %v2008 = vadd.f32 0.0, %v2007
        %2009 = vmatmul.f32.gmra.mxu0 %v1001
        %v2010 = vpop.f32.mrf.mxu0
        %v2011 = vadd.f32 0.0, %v2010
        %2012 = vmatmul.f32.gmra.mxu0 %v1003
        %v2013 = vpop.f32.mrf.mxu0
        %v2014 = vadd.f32 0.0, %v2013
        %2015 = vdwg.mxu0
        %2016 = vmatpush.msra.mxu0 0.0
        %2017 = vmatpush.msra.mxu0 0.0
        %2018 = vmatpush.msra.mxu0 0.0
        %2019 = vmatpush.msra.mxu0 0.0
        %2020 = vmatpush.msra.mxu0 0.0
        %2021 = vmatpush.msra.mxu0 0.0
        %2022 = vmatpush.msra.mxu0 0.0
        %2023 = vmatpush.msra.mxu0 0.0
        %2024 = vmatpush.msra.mxu0 0.0
        %2025 = vmatpush.msra.mxu0 0.0
        %2026 = vmatpush.msra.mxu0 0.0
        %2027 = vmatpush.msra.mxu0 0.0
        %2028 = vmatpush.msra.mxu0 0.0
        %2029 = vmatpush.msra.mxu0 %v425
        %2030 = vmatpush.msra.mxu0 %v423
        %2031 = vmatpush.msra.mxu0 %v421
        %2032 = vmatmul.f32.gmra.mxu0 %v1006
        %v2033 = vpop.f32.mrf.mxu0
        %v2034 = vadd.f32 %v1777, %v2033
        %2035 = vmatmul.f32.gmra.mxu0 %v1009
        %v2036 = vpop.f32.mrf.mxu0
        %v2037 = vadd.f32 %v1780, %v2036
        %2038 = vmatmul.f32.gmra.mxu0 %v1012
        %v2039 = vpop.f32.mrf.mxu0
        %v2040 = vadd.f32 %v1783, %v2039
        %2041 = vmatmul.f32.gmra.mxu0 %v1015
        %v2042 = vpop.f32.mrf.mxu0
        %v2043 = vadd.f32 %v1786, %v2042
        %2044 = vmatmul.f32.gmra.mxu0 %v1018
        %v2045 = vpop.f32.mrf.mxu0
        %v2046 = vadd.f32 %v1789, %v2045
        %2047 = vmatmul.f32.gmra.mxu0 %v1021
        %v2048 = vpop.f32.mrf.mxu0
        %v2049 = vadd.f32 %v1792, %v2048
        %2050 = vmatmul.f32.gmra.mxu0 %v1024
        %v2051 = vpop.f32.mrf.mxu0
        %v2052 = vadd.f32 %v1795, %v2051
        %2053 = vmatmul.f32.gmra.mxu0 %v1027
        %v2054 = vpop.f32.mrf.mxu0
        %v2055 = vadd.f32 %v1798, %v2054
        %2056 = vmatmul.f32.gmra.mxu0 %v1030
        %v2057 = vpop.f32.mrf.mxu0
        %v2058 = vadd.f32 %v1801, %v2057
        %2059 = vmatmul.f32.gmra.mxu0 %v1033
        %v2060 = vpop.f32.mrf.mxu0
        %v2061 = vadd.f32 %v1804, %v2060
        %2062 = vmatmul.f32.gmra.mxu0 %v1036
        %v2063 = vpop.f32.mrf.mxu0
        %v2064 = vadd.f32 %v1807, %v2063
        %2065 = vmatmul.f32.gmra.mxu0 %v1039
        %v2066 = vpop.f32.mrf.mxu0
        %v2067 = vadd.f32 %v1810, %v2066
        %2068 = vmatmul.f32.gmra.mxu0 %v1042
        %v2069 = vpop.f32.mrf.mxu0
        %v2070 = vadd.f32 %v1813, %v2069
        %2071 = vmatmul.f32.gmra.mxu0 %v1045
        %v2072 = vpop.f32.mrf.mxu0
        %v2073 = vadd.f32 %v1816, %v2072
        %2074 = vmatmul.f32.gmra.mxu0 %v1048
        %v2075 = vpop.f32.mrf.mxu0
        %v2076 = vadd.f32 %v1819, %v2075
        %2077 = vmatmul.f32.gmra.mxu0 %v1051
        %v2078 = vpop.f32.mrf.mxu0
        %v2079 = vadd.f32 %v1822, %v2078
        %2080 = vmatmul.f32.gmra.mxu0 %v1054
        %v2081 = vpop.f32.mrf.mxu0
        %v2082 = vadd.f32 %v1825, %v2081
        %2083 = vmatmul.f32.gmra.mxu0 %v1057
        %v2084 = vpop.f32.mrf.mxu0
        %v2085 = vadd.f32 %v1828, %v2084
        %2086 = vmatmul.f32.gmra.mxu0 %v1060
        %v2087 = vpop.f32.mrf.mxu0
        %v2088 = vadd.f32 %v1831, %v2087
        %2089 = vmatmul.f32.gmra.mxu0 %v1063
        %v2090 = vpop.f32.mrf.mxu0
        %v2091 = vadd.f32 %v1834, %v2090
        %2092 = vmatmul.f32.gmra.mxu0 %v1066
        %v2093 = vpop.f32.mrf.mxu0
        %v2094 = vadd.f32 %v1837, %v2093
        %2095 = vmatmul.f32.gmra.mxu0 %v1069
        %v2096 = vpop.f32.mrf.mxu0
        %v2097 = vadd.f32 %v1840, %v2096
        %2098 = vmatmul.f32.gmra.mxu0 %v1072
        %v2099 = vpop.f32.mrf.mxu0
        %v2100 = vadd.f32 %v1843, %v2099
        %2101 = vmatmul.f32.gmra.mxu0 %v1075
        %v2102 = vpop.f32.mrf.mxu0
        %v2103 = vadd.f32 %v1846, %v2102
        %2104 = vmatmul.f32.gmra.mxu0 %v1078
        %v2105 = vpop.f32.mrf.mxu0
        %v2106 = vadd.f32 %v1849, %v2105
        %2107 = vmatmul.f32.gmra.mxu0 %v1081
        %v2108 = vpop.f32.mrf.mxu0
        %v2109 = vadd.f32 %v1852, %v2108
        %2110 = vmatmul.f32.gmra.mxu0 %v1084
        %v2111 = vpop.f32.mrf.mxu0
        %v2112 = vadd.f32 %v1855, %v2111
        %2113 = vmatmul.f32.gmra.mxu0 %v1087
        %v2114 = vpop.f32.mrf.mxu0
        %v2115 = vadd.f32 %v1858, %v2114
        %2116 = vmatmul.f32.gmra.mxu0 %v1090
        %v2117 = vpop.f32.mrf.mxu0
        %v2118 = vadd.f32 %v1861, %v2117
        %2119 = vmatmul.f32.gmra.mxu0 %v1093
        %v2120 = vpop.f32.mrf.mxu0
        %v2121 = vadd.f32 %v1864, %v2120
        %2122 = vmatmul.f32.gmra.mxu0 %v1096
        %v2123 = vpop.f32.mrf.mxu0
        %v2124 = vadd.f32 %v1867, %v2123
        %2125 = vmatmul.f32.gmra.mxu0 %v1099
        %v2126 = vpop.f32.mrf.mxu0
        %v2127 = vadd.f32 %v1870, %v2126
        %2128 = vmatmul.f32.gmra.mxu0 %v1102
        %v2129 = vpop.f32.mrf.mxu0
        %v2130 = vadd.f32 %v1873, %v2129
        %2131 = vmatmul.f32.gmra.mxu0 %v1105
        %v2132 = vpop.f32.mrf.mxu0
        %v2133 = vadd.f32 %v1876, %v2132
        %2134 = vmatmul.f32.gmra.mxu0 %v1108
        %v2135 = vpop.f32.mrf.mxu0
        %v2136 = vadd.f32 %v1879, %v2135
        %2137 = vmatmul.f32.gmra.mxu0 %v1111
        %v2138 = vpop.f32.mrf.mxu0
        %v2139 = vadd.f32 %v1882, %v2138
        %2140 = vmatmul.f32.gmra.mxu0 %v1114
        %v2141 = vpop.f32.mrf.mxu0
        %v2142 = vadd.f32 %v1885, %v2141
        %2143 = vmatmul.f32.gmra.mxu0 %v1117
        %v2144 = vpop.f32.mrf.mxu0
        %v2145 = vadd.f32 %v1888, %v2144
        %2146 = vmatmul.f32.gmra.mxu0 %v1120
        %v2147 = vpop.f32.mrf.mxu0
        %v2148 = vadd.f32 %v1891, %v2147
        %2149 = vmatmul.f32.gmra.mxu0 %v1123
        %v2150 = vpop.f32.mrf.mxu0
        %v2151 = vadd.f32 %v1894, %v2150
        %2152 = vmatmul.f32.gmra.mxu0 %v1126
        %v2153 = vpop.f32.mrf.mxu0
        %v2154 = vadd.f32 %v1897, %v2153
        %2155 = vmatmul.f32.gmra.mxu0 %v1129
        %v2156 = vpop.f32.mrf.mxu0
        %v2157 = vadd.f32 %v1900, %v2156
        %2158 = vmatmul.f32.gmra.mxu0 %v1132
        %v2159 = vpop.f32.mrf.mxu0
        %v2160 = vadd.f32 %v1903, %v2159
        %2161 = vmatmul.f32.gmra.mxu0 %v1135
        %v2162 = vpop.f32.mrf.mxu0
        %v2163 = vadd.f32 %v1906, %v2162
        %2164 = vmatmul.f32.gmra.mxu0 %v1138
        %v2165 = vpop.f32.mrf.mxu0
        %v2166 = vadd.f32 %v1909, %v2165
        %2167 = vmatmul.f32.gmra.mxu0 %v1141
        %v2168 = vpop.f32.mrf.mxu0
        %v2169 = vadd.f32 %v1912, %v2168
        %2170 = vmatmul.f32.gmra.mxu0 %v1144
        %v2171 = vpop.f32.mrf.mxu0
        %v2172 = vadd.f32 %v1915, %v2171
        %2173 = vmatmul.f32.gmra.mxu0 %v1147
        %v2174 = vpop.f32.mrf.mxu0
        %v2175 = vadd.f32 %v1918, %v2174
        %2176 = vmatmul.f32.gmra.mxu0 %v1150
        %v2177 = vpop.f32.mrf.mxu0
        %v2178 = vadd.f32 %v1921, %v2177
        %2179 = vmatmul.f32.gmra.mxu0 %v1153
        %v2180 = vpop.f32.mrf.mxu0
        %v2181 = vadd.f32 %v1924, %v2180
        %2182 = vmatmul.f32.gmra.mxu0 %v1156
        %v2183 = vpop.f32.mrf.mxu0
        %v2184 = vadd.f32 %v1927, %v2183
        %2185 = vmatmul.f32.gmra.mxu0 %v1159
        %v2186 = vpop.f32.mrf.mxu0
        %v2187 = vadd.f32 %v1930, %v2186
        %2188 = vmatmul.f32.gmra.mxu0 %v1162
        %v2189 = vpop.f32.mrf.mxu0
        %v2190 = vadd.f32 %v1933, %v2189
        %2191 = vmatmul.f32.gmra.mxu0 %v1165
        %v2192 = vpop.f32.mrf.mxu0
        %v2193 = vadd.f32 %v1936, %v2192
        %2194 = vmatmul.f32.gmra.mxu0 %v1168
        %v2195 = vpop.f32.mrf.mxu0
        %v2196 = vadd.f32 %v1939, %v2195
        %2197 = vmatmul.f32.gmra.mxu0 %v1171
        %v2198 = vpop.f32.mrf.mxu0
        %v2199 = vadd.f32 %v1942, %v2198
        %2200 = vmatmul.f32.gmra.mxu0 %v1174
        %v2201 = vpop.f32.mrf.mxu0
        %v2202 = vadd.f32 %v1945, %v2201
        %2203 = vmatmul.f32.gmra.mxu0 %v1177
        %v2204 = vpop.f32.mrf.mxu0
        %v2205 = vadd.f32 %v1948, %v2204
        %2206 = vmatmul.f32.gmra.mxu0 %v1180
        %v2207 = vpop.f32.mrf.mxu0
        %v2208 = vadd.f32 %v1951, %v2207
        %2209 = vmatmul.f32.gmra.mxu0 %v1183
        %v2210 = vpop.f32.mrf.mxu0
        %v2211 = vadd.f32 %v1954, %v2210
        %2212 = vmatmul.f32.gmra.mxu0 %v1186
        %v2213 = vpop.f32.mrf.mxu0
        %v2214 = vadd.f32 %v1957, %v2213
        %2215 = vmatmul.f32.gmra.mxu0 %v1189
        %v2216 = vpop.f32.mrf.mxu0
        %v2217 = vadd.f32 %v1960, %v2216
        %2218 = vmatmul.f32.gmra.mxu0 %v1192
        %v2219 = vpop.f32.mrf.mxu0
        %v2220 = vadd.f32 %v1963, %v2219
        %2221 = vmatmul.f32.gmra.mxu0 %v1195
        %v2222 = vpop.f32.mrf.mxu0
        %v2223 = vadd.f32 %v1966, %v2222
        %2224 = vmatmul.f32.gmra.mxu0 %v1198
        %v2225 = vpop.f32.mrf.mxu0
        %v2226 = vadd.f32 %v1969, %v2225
        %2227 = vmatmul.f32.gmra.mxu0 %v1201
        %v2228 = vpop.f32.mrf.mxu0
        %v2229 = vadd.f32 %v1972, %v2228
        %2230 = vmatmul.f32.gmra.mxu0 %v1204
        %v2231 = vpop.f32.mrf.mxu0
        %v2232 = vadd.f32 %v1975, %v2231
        %2233 = vmatmul.f32.gmra.mxu0 %v1207
        %v2234 = vpop.f32.mrf.mxu0
        %v2235 = vadd.f32 %v1978, %v2234
        %2236 = vmatmul.f32.gmra.mxu0 %v1210
        %v2237 = vpop.f32.mrf.mxu0
        %v2238 = vadd.f32 %v1981, %v2237
        %2239 = vmatmul.f32.gmra.mxu0 %v1213
        %v2240 = vpop.f32.mrf.mxu0
        %v2241 = vadd.f32 %v1984, %v2240
        %2242 = vmatmul.f32.gmra.mxu0 %v1216
        %v2243 = vpop.f32.mrf.mxu0
        %v2244 = vadd.f32 %v1987, %v2243
        %2245 = vmatmul.f32.gmra.mxu0 %v1219
        %v2246 = vpop.f32.mrf.mxu0
        %v2247 = vadd.f32 %v1990, %v2246
        %2248 = vmatmul.f32.gmra.mxu0 %v1222
        %v2249 = vpop.f32.mrf.mxu0
        %v2250 = vadd.f32 %v1993, %v2249
        %2251 = vmatmul.f32.gmra.mxu0 %v1225
        %v2252 = vpop.f32.mrf.mxu0
        %v2253 = vadd.f32 %v1996, %v2252
        %2254 = vmatmul.f32.gmra.mxu0 %v1228
        %v2255 = vpop.f32.mrf.mxu0
        %v2256 = vadd.f32 %v1999, %v2255
        %2257 = vmatmul.f32.gmra.mxu0 %v1231
        %v2258 = vpop.f32.mrf.mxu0
        %v2259 = vadd.f32 %v2002, %v2258
        %2260 = vmatmul.f32.gmra.mxu0 %v1234
        %v2261 = vpop.f32.mrf.mxu0
        %v2262 = vadd.f32 %v2005, %v2261
        %2263 = vmatmul.f32.gmra.mxu0 %v1237
        %v2264 = vpop.f32.mrf.mxu0
        %v2265 = vadd.f32 %v2008, %v2264
        %2266 = vmatmul.f32.gmra.mxu0 %v1240
        %v2267 = vpop.f32.mrf.mxu0
        %v2268 = vadd.f32 %v2011, %v2267
        %2269 = vmatmul.f32.gmra.mxu0 %v1243
        %v2270 = vpop.f32.mrf.mxu0
        %v2271 = vadd.f32 %v2014, %v2270
        %2272 = vdwg.mxu0
        %v2273 = vmax.f32 %v632, %v647
        %v2274 = vmax.f32 %v786, %v801
        %v2275 = vmax.f32 %v635, %v650
        %v2276 = vmax.f32 %v789, %v804
        %v2277 = vmax.f32 %v638, %v653
        %v2278 = vmax.f32 %v792, %v807
        %v2279 = vmax.f32 %v641, %v656
        %v2280 = vmax.f32 %v795, %v810
        %v2281 = vmax.f32 %v644, %v659
        %v2282 = vmax.f32 %v798, %v813
        %v2283 = vmax.f32 %v2273, %v662
        %v2284 = vmax.f32 %v2274, %v816
        %v2285 = vmax.f32 %v2275, %v665
        %v2286 = vmax.f32 %v2276, %v819
        %v2287 = vmax.f32 %v2277, %v668
        %v2288 = vmax.f32 %v2278, %v822
        %v2289 = vmax.f32 %v2279, %v671
        %v2290 = vmax.f32 %v2280, %v825
        %v2291 = vmax.f32 %v2281, %v674
        %v2292 = vmax.f32 %v2282, %v828
        %v2293 = vmax.f32 %v2283, %v677
        %v2294 = vmax.f32 %v2284, %v831
        %v2295 = vmax.f32 %v2285, %v680
        %v2296 = vmax.f32 %v2286, %v834
        %v2297 = vmax.f32 %v2287, %v683
        %v2298 = vmax.f32 %v2288, %v837
        %v2299 = vmax.f32 %v2289, %v686
        %v2300 = vmax.f32 %v2290, %v840
        %v2301 = vmax.f32 %v2291, %v689
        %v2302 = vmax.f32 %v2292, %v843
        %v2303 = vsub.f32 %v632, %v2293
        %v2304 = vsub.f32 %v786, %v2294
        %v2305 = vsub.f32 %v635, %v2295
        %v2306 = vsub.f32 %v789, %v2296
        %v2307 = vsub.f32 %v638, %v2297
        %v2308 = vsub.f32 %v792, %v2298
        %v2309 = vsub.f32 %v641, %v2299
        %v2310 = vsub.f32 %v795, %v2300
        %v2311 = vsub.f32 %v644, %v2301
        %v2312 = vsub.f32 %v798, %v2302
        %v2313 = vmul.f32 %v2303, 1.442695
        %v2314 = vpow.pop %v2313
        %v2315 = vmul.f32 %v2304, 1.442695
        %v2316 = vpow.pop %v2315
        %v2317 = vmul.f32 %v2305, 1.442695
        %v2318 = vpow.pop %v2317
        %v2319 = vmul.f32 %v2306, 1.442695
        %v2320 = vpow.pop %v2319
        %v2321 = vmul.f32 %v2307, 1.442695
        %v2322 = vpow.pop %v2321
        %v2323 = vmul.f32 %v2308, 1.442695
        %v2324 = vpow.pop %v2323
        %v2325 = vmul.f32 %v2309, 1.442695
        %v2326 = vpow.pop %v2325
        %v2327 = vmul.f32 %v2310, 1.442695
        %v2328 = vpow.pop %v2327
        %v2329 = vmul.f32 %v2311, 1.442695
        %v2330 = vpow.pop %v2329
        %v2331 = vmul.f32 %v2312, 1.442695
        %v2332 = vpow.pop %v2331
        %v2333 = vsub.f32 %v647, %v2293
        %v2334 = vsub.f32 %v801, %v2294
        %v2335 = vsub.f32 %v650, %v2295
        %v2336 = vsub.f32 %v804, %v2296
        %v2337 = vsub.f32 %v653, %v2297
        %v2338 = vsub.f32 %v807, %v2298
        %v2339 = vsub.f32 %v656, %v2299
        %v2340 = vsub.f32 %v810, %v2300
        %v2341 = vsub.f32 %v659, %v2301
        %v2342 = vsub.f32 %v813, %v2302
        %v2343 = vmul.f32 %v2333, 1.442695
        %v2344 = vpow.pop %v2343
        %v2345 = vmul.f32 %v2334, 1.442695
        %v2346 = vpow.pop %v2345
        %v2347 = vmul.f32 %v2335, 1.442695
        %v2348 = vpow.pop %v2347
        %v2349 = vmul.f32 %v2336, 1.442695
        %v2350 = vpow.pop %v2349
        %v2351 = vmul.f32 %v2337, 1.442695
        %v2352 = vpow.pop %v2351
        %v2353 = vmul.f32 %v2338, 1.442695
        %v2354 = vpow.pop %v2353
        %v2355 = vmul.f32 %v2339, 1.442695
        %v2356 = vpow.pop %v2355
        %v2357 = vmul.f32 %v2340, 1.442695
        %v2358 = vpow.pop %v2357
        %v2359 = vmul.f32 %v2341, 1.442695
        %v2360 = vpow.pop %v2359
        %v2361 = vmul.f32 %v2342, 1.442695
        %v2362 = vpow.pop %v2361
        %v2363 = vadd.f32 %v2314, %v2344
        %v2364 = vadd.f32 %v2316, %v2346
        %v2365 = vadd.f32 %v2318, %v2348
        %v2366 = vadd.f32 %v2320, %v2350
        %v2367 = vadd.f32 %v2322, %v2352
        %v2368 = vadd.f32 %v2324, %v2354
        %v2369 = vadd.f32 %v2326, %v2356
        %v2370 = vadd.f32 %v2328, %v2358
        %v2371 = vadd.f32 %v2330, %v2360
        %v2372 = vadd.f32 %v2332, %v2362
        %v2373 = vsub.f32 %v662, %v2293
        %v2374 = vsub.f32 %v816, %v2294
        %v2375 = vsub.f32 %v665, %v2295
        %v2376 = vsub.f32 %v819, %v2296
        %v2377 = vsub.f32 %v668, %v2297
        %v2378 = vsub.f32 %v822, %v2298
        %v2379 = vsub.f32 %v671, %v2299
        %v2380 = vsub.f32 %v825, %v2300
        %v2381 = vsub.f32 %v674, %v2301
        %v2382 = vsub.f32 %v828, %v2302
        %v2383 = vmul.f32 %v2373, 1.442695
        %v2384 = vpow.pop %v2383
        %v2385 = vmul.f32 %v2374, 1.442695
        %v2386 = vpow.pop %v2385
        %v2387 = vmul.f32 %v2375, 1.442695
        %v2388 = vpow.pop %v2387
        %v2389 = vmul.f32 %v2376, 1.442695
        %v2390 = vpow.pop %v2389
        %v2391 = vmul.f32 %v2377, 1.442695
        %v2392 = vpow.pop %v2391
        %v2393 = vmul.f32 %v2378, 1.442695
        %v2394 = vpow.pop %v2393
        %v2395 = vmul.f32 %v2379, 1.442695
        %v2396 = vpow.pop %v2395
        %v2397 = vmul.f32 %v2380, 1.442695
        %v2398 = vpow.pop %v2397
        %v2399 = vmul.f32 %v2381, 1.442695
        %v2400 = vpow.pop %v2399
        %v2401 = vmul.f32 %v2382, 1.442695
        %v2402 = vpow.pop %v2401
        %v2403 = vadd.f32 %v2363, %v2384
        %v2404 = vadd.f32 %v2364, %v2386
        %v2405 = vadd.f32 %v2365, %v2388
        %v2406 = vadd.f32 %v2366, %v2390
        %v2407 = vadd.f32 %v2367, %v2392
        %v2408 = vadd.f32 %v2368, %v2394
        %v2409 = vadd.f32 %v2369, %v2396
        %v2410 = vadd.f32 %v2370, %v2398
        %v2411 = vadd.f32 %v2371, %v2400
        %v2412 = vadd.f32 %v2372, %v2402
        %v2413 = vsub.f32 %v677, %v2293
        %v2414 = vsub.f32 %v831, %v2294
        %v2415 = vsub.f32 %v680, %v2295
        %v2416 = vsub.f32 %v834, %v2296
        %v2417 = vsub.f32 %v683, %v2297
        %v2418 = vsub.f32 %v837, %v2298
        %v2419 = vsub.f32 %v686, %v2299
        %v2420 = vsub.f32 %v840, %v2300
        %v2421 = vsub.f32 %v689, %v2301
        %v2422 = vsub.f32 %v843, %v2302
        %v2423 = vmul.f32 %v2413, 1.442695
        %v2424 = vpow.pop %v2423
        %v2425 = vmul.f32 %v2414, 1.442695
        %v2426 = vpow.pop %v2425
        %v2427 = vmul.f32 %v2415, 1.442695
        %v2428 = vpow.pop %v2427
        %v2429 = vmul.f32 %v2416, 1.442695
        %v2430 = vpow.pop %v2429
        %v2431 = vmul.f32 %v2417, 1.442695
        %v2432 = vpow.pop %v2431
        %v2433 = vmul.f32 %v2418, 1.442695
        %v2434 = vpow.pop %v2433
        %v2435 = vmul.f32 %v2419, 1.442695
        %v2436 = vpow.pop %v2435
        %v2437 = vmul.f32 %v2420, 1.442695
        %v2438 = vpow.pop %v2437
        %v2439 = vmul.f32 %v2421, 1.442695
        %v2440 = vpow.pop %v2439
        %v2441 = vmul.f32 %v2422, 1.442695
        %v2442 = vpow.pop %v2441
        %v2443 = vadd.f32 %v2403, %v2424
        %v2444 = vadd.f32 %v2404, %v2426
        %v2445 = vadd.f32 %v2405, %v2428
        %v2446 = vadd.f32 %v2406, %v2430
        %v2447 = vadd.f32 %v2407, %v2432
        %v2448 = vadd.f32 %v2408, %v2434
        %v2449 = vadd.f32 %v2409, %v2436
        %v2450 = vadd.f32 %v2410, %v2438
        %v2451 = vadd.f32 %v2411, %v2440
        %v2452 = vadd.f32 %v2412, %v2442
        %v2453 = vadd.f32 %v426, %v428
        %v2454 = vadd.f32 %v2453, %v430
        %v2455 = vadd.f32 %v2454, %v432
        %v2456 = vadd.f32 %v2455, %v434
        %v2457 = vrot.slane %v2456, 4
        %v2458 = vadd.f32 %v2456, %v2457
        %v2459 = vrot.slane %v2458, 2
        %v2460 = vadd.f32 %v2458, %v2459
        %v2461 = vrot.slane %v2460, 1
        %v2462 = vadd.f32 %v2460, %v2461
        %v2463 = vadd.f32 %v427, %v429
        %v2464 = vadd.f32 %v2463, %v431
        %v2465 = vadd.f32 %v2464, %v433
        %v2466 = vadd.f32 %v2465, %v435
        %v2467 = vrot.slane %v2466, 4
        %v2468 = vadd.f32 %v2466, %v2467
        %v2469 = vrot.slane %v2468, 2
        %v2470 = vadd.f32 %v2468, %v2469
        %v2471 = vrot.slane %v2470, 1
        %v2472 = vadd.f32 %v2470, %v2471
        %v2473 = vrcp.pop %v2462
        %v2474 = vrcp.pop %v2472
        %v2475 = vmul.f32 %v2462, %v2473
        %v2476 = vmul.f32 %v2472, %v2474
        %v2477 = vsub.f32 2.0, %v2475
        %v2478 = vsub.f32 2.0, %v2476
        %v2479 = vmul.f32 %v2473, %v2477
        %v2480 = vmul.f32 %v2474, %v2478
        %v2481 = vrcp.pop %v2443
        %v2482 = vrcp.pop %v2444
        %v2483 = vrcp.pop %v2445
        %v2484 = vrcp.pop %v2446
        %v2485 = vrcp.pop %v2447
        %v2486 = vrcp.pop %v2448
        %v2487 = vrcp.pop %v2449
        %v2488 = vrcp.pop %v2450
        %v2489 = vrcp.pop %v2451
        %v2490 = vrcp.pop %v2452
        %v2491 = vmul.f32 %v2443, %v2481
        %v2492 = vmul.f32 %v2444, %v2482
        %v2493 = vmul.f32 %v2445, %v2483
        %v2494 = vmul.f32 %v2446, %v2484
        %v2495 = vmul.f32 %v2447, %v2485
        %v2496 = vmul.f32 %v2448, %v2486
        %v2497 = vmul.f32 %v2449, %v2487
        %v2498 = vmul.f32 %v2450, %v2488
        %v2499 = vmul.f32 %v2451, %v2489
        %v2500 = vmul.f32 %v2452, %v2490
        %v2501 = vsub.f32 2.0, %v2491
        %v2502 = vsub.f32 2.0, %v2492
        %v2503 = vsub.f32 2.0, %v2493
        %v2504 = vsub.f32 2.0, %v2494
        %v2505 = vsub.f32 2.0, %v2495
        %v2506 = vsub.f32 2.0, %v2496
        %v2507 = vsub.f32 2.0, %v2497
        %v2508 = vsub.f32 2.0, %v2498
        %v2509 = vsub.f32 2.0, %v2499
        %v2510 = vsub.f32 2.0, %v2500
        %v2511 = vmul.f32 %v2481, %v2501
        %v2512 = vmul.f32 %v2482, %v2502
        %v2513 = vmul.f32 %v2483, %v2503
        %v2514 = vmul.f32 %v2484, %v2504
        %v2515 = vmul.f32 %v2485, %v2505
        %v2516 = vmul.f32 %v2486, %v2506
        %v2517 = vmul.f32 %v2487, %v2507
        %v2518 = vmul.f32 %v2488, %v2508
        %v2519 = vmul.f32 %v2489, %v2509
        %v2520 = vmul.f32 %v2490, %v2510
        %v2521 = vmul.f32 %v426, %v2511
        %v2522 = vmul.f32 %v427, %v2512
        %v2523 = vmul.f32 %v428, %v2513
        %v2524 = vmul.f32 %v429, %v2514
        %v2525 = vmul.f32 %v430, %v2515
        %v2526 = vmul.f32 %v431, %v2516
        %v2527 = vmul.f32 %v432, %v2517
        %v2528 = vmul.f32 %v433, %v2518
        %v2529 = vmul.f32 %v434, %v2519
        %v2530 = vmul.f32 %v435, %v2520
        %v2531 = vmul.f32 %v2314, %v2521
        %v2532 = vmul.f32 %v2316, %v2522
        %v2533 = vmul.f32 %v2318, %v2523
        %v2534 = vmul.f32 %v2320, %v2524
        %v2535 = vmul.f32 %v2322, %v2525
        %v2536 = vmul.f32 %v2324, %v2526
        %v2537 = vmul.f32 %v2326, %v2527
        %v2538 = vmul.f32 %v2328, %v2528
        %v2539 = vmul.f32 %v2330, %v2529
        %v2540 = vmul.f32 %v2332, %v2530
        %v2541 = vadd.f32 %v2531, %v2533
        %v2542 = vadd.f32 %v2541, %v2535
        %v2543 = vadd.f32 %v2542, %v2537
        %v2544 = vadd.f32 %v2543, %v2539
        %v2545 = vrot.slane %v2544, 4
        %v2546 = vadd.f32 %v2544, %v2545
        %v2547 = vrot.slane %v2546, 2
        %v2548 = vadd.f32 %v2546, %v2547
        %v2549 = vrot.slane %v2548, 1
        %v2550 = vadd.f32 %v2548, %v2549
        %v2551 = vadd.f32 %v2532, %v2534
        %v2552 = vadd.f32 %v2551, %v2536
        %v2553 = vadd.f32 %v2552, %v2538
        %v2554 = vadd.f32 %v2553, %v2540
        %v2555 = vrot.slane %v2554, 4
        %v2556 = vadd.f32 %v2554, %v2555
        %v2557 = vrot.slane %v2556, 2
        %v2558 = vadd.f32 %v2556, %v2557
        %v2559 = vrot.slane %v2558, 1
        %v2560 = vadd.f32 %v2558, %v2559
        %v2561 = vmul.f32 %v2550, %v2479
        %v2562 = vmul.f32 %v2560, %v2480
        %v2563 = vrcp.pop %v2550
        %v2564 = vrcp.pop %v2560
        %v2565 = vmul.f32 %v2550, %v2563
        %v2566 = vmul.f32 %v2560, %v2564
        %v2567 = vsub.f32 2.0, %v2565
        %v2568 = vsub.f32 2.0, %v2566
        %v2569 = vmul.f32 %v2563, %v2567
        %v2570 = vmul.f32 %v2564, %v2568
        %v2571 = vmul.f32 %v2531, %v2569
        %v2572 = vmul.f32 %v2532, %v2570
        %v2573 = vmul.f32 %v2533, %v2569
        %v2574 = vmul.f32 %v2534, %v2570
        %v2575 = vmul.f32 %v2535, %v2569
        %v2576 = vmul.f32 %v2536, %v2570
        %v2577 = vmul.f32 %v2537, %v2569
        %v2578 = vmul.f32 %v2538, %v2570
        %v2579 = vmul.f32 %v2539, %v2569
        %v2580 = vmul.f32 %v2540, %v2570
        %v2581 = vmul.f32 %v2571, %v1520
        %v2582 = vmul.f32 %v2572, %v2034
        %v2583 = vmul.f32 %v2573, %v1523
        %v2584 = vmul.f32 %v2574, %v2037
        %v2585 = vmul.f32 %v2575, %v1526
        %v2586 = vmul.f32 %v2576, %v2040
        %v2587 = vmul.f32 %v2577, %v1529
        %v2588 = vmul.f32 %v2578, %v2043
        %v2589 = vmul.f32 %v2579, %v1532
        %v2590 = vmul.f32 %v2580, %v2046
        %v2591 = vadd.f32 %v2581, %v2583
        %v2592 = vadd.f32 %v2591, %v2585
        %v2593 = vadd.f32 %v2592, %v2587
        %v2594 = vadd.f32 %v2593, %v2589
        %v2595 = vrot.slane %v2594, 4
        %v2596 = vadd.f32 %v2594, %v2595
        %v2597 = vrot.slane %v2596, 2
        %v2598 = vadd.f32 %v2596, %v2597
        %v2599 = vrot.slane %v2598, 1
        %v2600 = vadd.f32 %v2598, %v2599
        %v2601 = vadd.f32 %v2582, %v2584
        %v2602 = vadd.f32 %v2601, %v2586
        %v2603 = vadd.f32 %v2602, %v2588
        %v2604 = vadd.f32 %v2603, %v2590
        %v2605 = vrot.slane %v2604, 4
        %v2606 = vadd.f32 %v2604, %v2605
        %v2607 = vrot.slane %v2606, 2
        %v2608 = vadd.f32 %v2606, %v2607
        %v2609 = vrot.slane %v2608, 1
        %v2610 = vadd.f32 %v2608, %v2609
        %v2611 = vmul.f32 %v2571, %v1535
        %v2612 = vmul.f32 %v2572, %v2049
        %v2613 = vmul.f32 %v2573, %v1538
        %v2614 = vmul.f32 %v2574, %v2052
        %v2615 = vmul.f32 %v2575, %v1541
        %v2616 = vmul.f32 %v2576, %v2055
        %v2617 = vmul.f32 %v2577, %v1544
        %v2618 = vmul.f32 %v2578, %v2058
        %v2619 = vmul.f32 %v2579, %v1547
        %v2620 = vmul.f32 %v2580, %v2061
        %v2621 = vadd.f32 %v2611, %v2613
        %v2622 = vadd.f32 %v2621, %v2615
        %v2623 = vadd.f32 %v2622, %v2617
        %v2624 = vadd.f32 %v2623, %v2619
        %v2625 = vrot.slane %v2624, 4
        %v2626 = vadd.f32 %v2624, %v2625
        %v2627 = vrot.slane %v2626, 2
        %v2628 = vadd.f32 %v2626, %v2627
        %v2629 = vrot.slane %v2628, 1
        %v2630 = vadd.f32 %v2628, %v2629
        %v2631 = vadd.f32 %v2612, %v2614
        %v2632 = vadd.f32 %v2631, %v2616
        %v2633 = vadd.f32 %v2632, %v2618
        %v2634 = vadd.f32 %v2633, %v2620
        %v2635 = vrot.slane %v2634, 4
        %v2636 = vadd.f32 %v2634, %v2635
        %v2637 = vrot.slane %v2636, 2
        %v2638 = vadd.f32 %v2636, %v2637
        %v2639 = vrot.slane %v2638, 1
        %v2640 = vadd.f32 %v2638, %v2639
        %v2641 = vmul.f32 %v2571, %v1550
        %v2642 = vmul.f32 %v2572, %v2064
        %v2643 = vmul.f32 %v2573, %v1553
        %v2644 = vmul.f32 %v2574, %v2067
        %v2645 = vmul.f32 %v2575, %v1556
        %v2646 = vmul.f32 %v2576, %v2070
        %v2647 = vmul.f32 %v2577, %v1559
        %v2648 = vmul.f32 %v2578, %v2073
        %v2649 = vmul.f32 %v2579, %v1562
        %v2650 = vmul.f32 %v2580, %v2076
        %v2651 = vadd.f32 %v2641, %v2643
        %v2652 = vadd.f32 %v2651, %v2645
        %v2653 = vadd.f32 %v2652, %v2647
        %v2654 = vadd.f32 %v2653, %v2649
        %v2655 = vrot.slane %v2654, 4
        %v2656 = vadd.f32 %v2654, %v2655
        %v2657 = vrot.slane %v2656, 2
        %v2658 = vadd.f32 %v2656, %v2657
        %v2659 = vrot.slane %v2658, 1
        %v2660 = vadd.f32 %v2658, %v2659
        %v2661 = vadd.f32 %v2642, %v2644
        %v2662 = vadd.f32 %v2661, %v2646
        %v2663 = vadd.f32 %v2662, %v2648
        %v2664 = vadd.f32 %v2663, %v2650
        %v2665 = vrot.slane %v2664, 4
        %v2666 = vadd.f32 %v2664, %v2665
        %v2667 = vrot.slane %v2666, 2
        %v2668 = vadd.f32 %v2666, %v2667
        %v2669 = vrot.slane %v2668, 1
        %v2670 = vadd.f32 %v2668, %v2669
        %v2671 = vmul.f32 %v2571, %v1565
        %v2672 = vmul.f32 %v2572, %v2079
        %v2673 = vmul.f32 %v2573, %v1568
        %v2674 = vmul.f32 %v2574, %v2082
        %v2675 = vmul.f32 %v2575, %v1571
        %v2676 = vmul.f32 %v2576, %v2085
        %v2677 = vmul.f32 %v2577, %v1574
        %v2678 = vmul.f32 %v2578, %v2088
        %v2679 = vmul.f32 %v2579, %v1577
        %v2680 = vmul.f32 %v2580, %v2091
        %v2681 = vadd.f32 %v2671, %v2673
        %v2682 = vadd.f32 %v2681, %v2675
        %v2683 = vadd.f32 %v2682, %v2677
        %v2684 = vadd.f32 %v2683, %v2679
        %v2685 = vrot.slane %v2684, 4
        %v2686 = vadd.f32 %v2684, %v2685
        %v2687 = vrot.slane %v2686, 2
        %v2688 = vadd.f32 %v2686, %v2687
        %v2689 = vrot.slane %v2688, 1
        %v2690 = vadd.f32 %v2688, %v2689
        %v2691 = vadd.f32 %v2672, %v2674
        %v2692 = vadd.f32 %v2691, %v2676
        %v2693 = vadd.f32 %v2692, %v2678
        %v2694 = vadd.f32 %v2693, %v2680
        %v2695 = vrot.slane %v2694, 4
        %v2696 = vadd.f32 %v2694, %v2695
        %v2697 = vrot.slane %v2696, 2
        %v2698 = vadd.f32 %v2696, %v2697
        %v2699 = vrot.slane %v2698, 1
        %v2700 = vadd.f32 %v2698, %v2699
        %v2701 = vmul.f32 %v2344, %v2521
        %v2702 = vmul.f32 %v2346, %v2522
        %v2703 = vmul.f32 %v2348, %v2523
        %v2704 = vmul.f32 %v2350, %v2524
        %v2705 = vmul.f32 %v2352, %v2525
        %v2706 = vmul.f32 %v2354, %v2526
        %v2707 = vmul.f32 %v2356, %v2527
        %v2708 = vmul.f32 %v2358, %v2528
        %v2709 = vmul.f32 %v2360, %v2529
        %v2710 = vmul.f32 %v2362, %v2530
        %v2711 = vadd.f32 %v2701, %v2703
        %v2712 = vadd.f32 %v2711, %v2705
        %v2713 = vadd.f32 %v2712, %v2707
        %v2714 = vadd.f32 %v2713, %v2709
        %v2715 = vrot.slane %v2714, 4
        %v2716 = vadd.f32 %v2714, %v2715
        %v2717 = vrot.slane %v2716, 2
        %v2718 = vadd.f32 %v2716, %v2717
        %v2719 = vrot.slane %v2718, 1
        %v2720 = vadd.f32 %v2718, %v2719
        %v2721 = vadd.f32 %v2702, %v2704
        %v2722 = vadd.f32 %v2721, %v2706
        %v2723 = vadd.f32 %v2722, %v2708
        %v2724 = vadd.f32 %v2723, %v2710
        %v2725 = vrot.slane %v2724, 4
        %v2726 = vadd.f32 %v2724, %v2725
        %v2727 = vrot.slane %v2726, 2
        %v2728 = vadd.f32 %v2726, %v2727
        %v2729 = vrot.slane %v2728, 1
        %v2730 = vadd.f32 %v2728, %v2729
        %v2731 = vmul.f32 %v2720, %v2479
        %v2732 = vmul.f32 %v2730, %v2480
        %v2733 = vrcp.pop %v2720
        %v2734 = vrcp.pop %v2730
        %v2735 = vmul.f32 %v2720, %v2733
        %v2736 = vmul.f32 %v2730, %v2734
        %v2737 = vsub.f32 2.0, %v2735
        %v2738 = vsub.f32 2.0, %v2736
        %v2739 = vmul.f32 %v2733, %v2737
        %v2740 = vmul.f32 %v2734, %v2738
        %v2741 = vmul.f32 %v2701, %v2739
        %v2742 = vmul.f32 %v2702, %v2740
        %v2743 = vmul.f32 %v2703, %v2739
        %v2744 = vmul.f32 %v2704, %v2740
        %v2745 = vmul.f32 %v2705, %v2739
        %v2746 = vmul.f32 %v2706, %v2740
        %v2747 = vmul.f32 %v2707, %v2739
        %v2748 = vmul.f32 %v2708, %v2740
        %v2749 = vmul.f32 %v2709, %v2739
        %v2750 = vmul.f32 %v2710, %v2740
        %v2751 = vmul.f32 %v2741, %v1580
        %v2752 = vmul.f32 %v2742, %v2094
        %v2753 = vmul.f32 %v2743, %v1583
        %v2754 = vmul.f32 %v2744, %v2097
        %v2755 = vmul.f32 %v2745, %v1586
        %v2756 = vmul.f32 %v2746, %v2100
        %v2757 = vmul.f32 %v2747, %v1589
        %v2758 = vmul.f32 %v2748, %v2103
        %v2759 = vmul.f32 %v2749, %v1592
        %v2760 = vmul.f32 %v2750, %v2106
        %v2761 = vadd.f32 %v2751, %v2753
        %v2762 = vadd.f32 %v2761, %v2755
        %v2763 = vadd.f32 %v2762, %v2757
        %v2764 = vadd.f32 %v2763, %v2759
        %v2765 = vrot.slane %v2764, 4
        %v2766 = vadd.f32 %v2764, %v2765
        %v2767 = vrot.slane %v2766, 2
        %v2768 = vadd.f32 %v2766, %v2767
        %v2769 = vrot.slane %v2768, 1
        %v2770 = vadd.f32 %v2768, %v2769
        %v2771 = vadd.f32 %v2752, %v2754
        %v2772 = vadd.f32 %v2771, %v2756
        %v2773 = vadd.f32 %v2772, %v2758
        %v2774 = vadd.f32 %v2773, %v2760
        %v2775 = vrot.slane %v2774, 4
        %v2776 = vadd.f32 %v2774, %v2775
        %v2777 = vrot.slane %v2776, 2
        %v2778 = vadd.f32 %v2776, %v2777
        %v2779 = vrot.slane %v2778, 1
        %v2780 = vadd.f32 %v2778, %v2779
        %v2781 = vmul.f32 %v2741, %v1595
        %v2782 = vmul.f32 %v2742, %v2109
        %v2783 = vmul.f32 %v2743, %v1598
        %v2784 = vmul.f32 %v2744, %v2112
        %v2785 = vmul.f32 %v2745, %v1601
        %v2786 = vmul.f32 %v2746, %v2115
        %v2787 = vmul.f32 %v2747, %v1604
        %v2788 = vmul.f32 %v2748, %v2118
        %v2789 = vmul.f32 %v2749, %v1607
        %v2790 = vmul.f32 %v2750, %v2121
        %v2791 = vadd.f32 %v2781, %v2783
        %v2792 = vadd.f32 %v2791, %v2785
        %v2793 = vadd.f32 %v2792, %v2787
        %v2794 = vadd.f32 %v2793, %v2789
        %v2795 = vrot.slane %v2794, 4
        %v2796 = vadd.f32 %v2794, %v2795
        %v2797 = vrot.slane %v2796, 2
        %v2798 = vadd.f32 %v2796, %v2797
        %v2799 = vrot.slane %v2798, 1
        %v2800 = vadd.f32 %v2798, %v2799
        %v2801 = vadd.f32 %v2782, %v2784
        %v2802 = vadd.f32 %v2801, %v2786
        %v2803 = vadd.f32 %v2802, %v2788
        %v2804 = vadd.f32 %v2803, %v2790
        %v2805 = vrot.slane %v2804, 4
        %v2806 = vadd.f32 %v2804, %v2805
        %v2807 = vrot.slane %v2806, 2
        %v2808 = vadd.f32 %v2806, %v2807
        %v2809 = vrot.slane %v2808, 1
        %v2810 = vadd.f32 %v2808, %v2809
        %v2811 = vmul.f32 %v2741, %v1610
        %v2812 = vmul.f32 %v2742, %v2124
        %v2813 = vmul.f32 %v2743, %v1613
        %v2814 = vmul.f32 %v2744, %v2127
        %v2815 = vmul.f32 %v2745, %v1616
        %v2816 = vmul.f32 %v2746, %v2130
        %v2817 = vmul.f32 %v2747, %v1619
        %v2818 = vmul.f32 %v2748, %v2133
        %v2819 = vmul.f32 %v2749, %v1622
        %v2820 = vmul.f32 %v2750, %v2136
        %v2821 = vadd.f32 %v2811, %v2813
        %v2822 = vadd.f32 %v2821, %v2815
        %v2823 = vadd.f32 %v2822, %v2817
        %v2824 = vadd.f32 %v2823, %v2819
        %v2825 = vrot.slane %v2824, 4
        %v2826 = vadd.f32 %v2824, %v2825
        %v2827 = vrot.slane %v2826, 2
        %v2828 = vadd.f32 %v2826, %v2827
        %v2829 = vrot.slane %v2828, 1
        %v2830 = vadd.f32 %v2828, %v2829
        %v2831 = vadd.f32 %v2812, %v2814
        %v2832 = vadd.f32 %v2831, %v2816
        %v2833 = vadd.f32 %v2832, %v2818
        %v2834 = vadd.f32 %v2833, %v2820
        %v2835 = vrot.slane %v2834, 4
        %v2836 = vadd.f32 %v2834, %v2835
        %v2837 = vrot.slane %v2836, 2
        %v2838 = vadd.f32 %v2836, %v2837
        %v2839 = vrot.slane %v2838, 1
        %v2840 = vadd.f32 %v2838, %v2839
        %v2841 = vmul.f32 %v2741, %v1625
        %v2842 = vmul.f32 %v2742, %v2139
        %v2843 = vmul.f32 %v2743, %v1628
        %v2844 = vmul.f32 %v2744, %v2142
        %v2845 = vmul.f32 %v2745, %v1631
        %v2846 = vmul.f32 %v2746, %v2145
        %v2847 = vmul.f32 %v2747, %v1634
        %v2848 = vmul.f32 %v2748, %v2148
        %v2849 = vmul.f32 %v2749, %v1637
        %v2850 = vmul.f32 %v2750, %v2151
        %v2851 = vadd.f32 %v2841, %v2843
        %v2852 = vadd.f32 %v2851, %v2845
        %v2853 = vadd.f32 %v2852, %v2847
        %v2854 = vadd.f32 %v2853, %v2849
        %v2855 = vrot.slane %v2854, 4
        %v2856 = vadd.f32 %v2854, %v2855
        %v2857 = vrot.slane %v2856, 2
        %v2858 = vadd.f32 %v2856, %v2857
        %v2859 = vrot.slane %v2858, 1
        %v2860 = vadd.f32 %v2858, %v2859
        %v2861 = vadd.f32 %v2842, %v2844
        %v2862 = vadd.f32 %v2861, %v2846
        %v2863 = vadd.f32 %v2862, %v2848
        %v2864 = vadd.f32 %v2863, %v2850
        %v2865 = vrot.slane %v2864, 4
        %v2866 = vadd.f32 %v2864, %v2865
        %v2867 = vrot.slane %v2866, 2
        %v2868 = vadd.f32 %v2866, %v2867
        %v2869 = vrot.slane %v2868, 1
        %v2870 = vadd.f32 %v2868, %v2869
        %v2871 = vmul.f32 %v2384, %v2521
        %v2872 = vmul.f32 %v2386, %v2522
        %v2873 = vmul.f32 %v2388, %v2523
        %v2874 = vmul.f32 %v2390, %v2524
        %v2875 = vmul.f32 %v2392, %v2525
        %v2876 = vmul.f32 %v2394, %v2526
        %v2877 = vmul.f32 %v2396, %v2527
        %v2878 = vmul.f32 %v2398, %v2528
        %v2879 = vmul.f32 %v2400, %v2529
        %v2880 = vmul.f32 %v2402, %v2530
        %v2881 = vadd.f32 %v2871, %v2873
        %v2882 = vadd.f32 %v2881, %v2875
        %v2883 = vadd.f32 %v2882, %v2877
        %v2884 = vadd.f32 %v2883, %v2879
        %v2885 = vrot.slane %v2884, 4
        %v2886 = vadd.f32 %v2884, %v2885
        %v2887 = vrot.slane %v2886, 2
        %v2888 = vadd.f32 %v2886, %v2887
        %v2889 = vrot.slane %v2888, 1
        %v2890 = vadd.f32 %v2888, %v2889
        %v2891 = vadd.f32 %v2872, %v2874
        %v2892 = vadd.f32 %v2891, %v2876
        %v2893 = vadd.f32 %v2892, %v2878
        %v2894 = vadd.f32 %v2893, %v2880
        %v2895 = vrot.slane %v2894, 4
        %v2896 = vadd.f32 %v2894, %v2895
        %v2897 = vrot.slane %v2896, 2
        %v2898 = vadd.f32 %v2896, %v2897
        %v2899 = vrot.slane %v2898, 1
        %v2900 = vadd.f32 %v2898, %v2899
        %v2901 = vmul.f32 %v2890, %v2479
        %v2902 = vmul.f32 %v2900, %v2480
        %v2903 = vrcp.pop %v2890
        %v2904 = vrcp.pop %v2900
        %v2905 = vmul.f32 %v2890, %v2903
        %v2906 = vmul.f32 %v2900, %v2904
        %v2907 = vsub.f32 2.0, %v2905
        %v2908 = vsub.f32 2.0, %v2906
        %v2909 = vmul.f32 %v2903, %v2907
        %v2910 = vmul.f32 %v2904, %v2908
        %v2911 = vmul.f32 %v2871, %v2909
        %v2912 = vmul.f32 %v2872, %v2910
        %v2913 = vmul.f32 %v2873, %v2909
        %v2914 = vmul.f32 %v2874, %v2910
        %v2915 = vmul.f32 %v2875, %v2909
        %v2916 = vmul.f32 %v2876, %v2910
        %v2917 = vmul.f32 %v2877, %v2909
        %v2918 = vmul.f32 %v2878, %v2910
        %v2919 = vmul.f32 %v2879, %v2909
        %v2920 = vmul.f32 %v2880, %v2910
        %v2921 = vmul.f32 %v2911, %v1640
        %v2922 = vmul.f32 %v2912, %v2154
        %v2923 = vmul.f32 %v2913, %v1643
        %v2924 = vmul.f32 %v2914, %v2157
        %v2925 = vmul.f32 %v2915, %v1646
        %v2926 = vmul.f32 %v2916, %v2160
        %v2927 = vmul.f32 %v2917, %v1649
        %v2928 = vmul.f32 %v2918, %v2163
        %v2929 = vmul.f32 %v2919, %v1652
        %v2930 = vmul.f32 %v2920, %v2166
        %v2931 = vadd.f32 %v2921, %v2923
        %v2932 = vadd.f32 %v2931, %v2925
        %v2933 = vadd.f32 %v2932, %v2927
        %v2934 = vadd.f32 %v2933, %v2929
        %v2935 = vrot.slane %v2934, 4
        %v2936 = vadd.f32 %v2934, %v2935
        %v2937 = vrot.slane %v2936, 2
        %v2938 = vadd.f32 %v2936, %v2937
        %v2939 = vrot.slane %v2938, 1
        %v2940 = vadd.f32 %v2938, %v2939
        %v2941 = vadd.f32 %v2922, %v2924
        %v2942 = vadd.f32 %v2941, %v2926
        %v2943 = vadd.f32 %v2942, %v2928
        %v2944 = vadd.f32 %v2943, %v2930
        %v2945 = vrot.slane %v2944, 4
        %v2946 = vadd.f32 %v2944, %v2945
        %v2947 = vrot.slane %v2946, 2
        %v2948 = vadd.f32 %v2946, %v2947
        %v2949 = vrot.slane %v2948, 1
        %v2950 = vadd.f32 %v2948, %v2949
        %v2951 = vmul.f32 %v2911, %v1655
        %v2952 = vmul.f32 %v2912, %v2169
        %v2953 = vmul.f32 %v2913, %v1658
        %v2954 = vmul.f32 %v2914, %v2172
        %v2955 = vmul.f32 %v2915, %v1661
        %v2956 = vmul.f32 %v2916, %v2175
        %v2957 = vmul.f32 %v2917, %v1664
        %v2958 = vmul.f32 %v2918, %v2178
        %v2959 = vmul.f32 %v2919, %v1667
        %v2960 = vmul.f32 %v2920, %v2181
        %v2961 = vadd.f32 %v2951, %v2953
        %v2962 = vadd.f32 %v2961, %v2955
        %v2963 = vadd.f32 %v2962, %v2957
        %v2964 = vadd.f32 %v2963, %v2959
        %v2965 = vrot.slane %v2964, 4
        %v2966 = vadd.f32 %v2964, %v2965
        %v2967 = vrot.slane %v2966, 2
        %v2968 = vadd.f32 %v2966, %v2967
        %v2969 = vrot.slane %v2968, 1
        %v2970 = vadd.f32 %v2968, %v2969
        %v2971 = vadd.f32 %v2952, %v2954
        %v2972 = vadd.f32 %v2971, %v2956
        %v2973 = vadd.f32 %v2972, %v2958
        %v2974 = vadd.f32 %v2973, %v2960
        %v2975 = vrot.slane %v2974, 4
        %v2976 = vadd.f32 %v2974, %v2975
        %v2977 = vrot.slane %v2976, 2
        %v2978 = vadd.f32 %v2976, %v2977
        %v2979 = vrot.slane %v2978, 1
        %v2980 = vadd.f32 %v2978, %v2979
        %v2981 = vmul.f32 %v2911, %v1670
        %v2982 = vmul.f32 %v2912, %v2184
        %v2983 = vmul.f32 %v2913, %v1673
        %v2984 = vmul.f32 %v2914, %v2187
        %v2985 = vmul.f32 %v2915, %v1676
        %v2986 = vmul.f32 %v2916, %v2190
        %v2987 = vmul.f32 %v2917, %v1679
        %v2988 = vmul.f32 %v2918, %v2193
        %v2989 = vmul.f32 %v2919, %v1682
        %v2990 = vmul.f32 %v2920, %v2196
        %v2991 = vadd.f32 %v2981, %v2983
        %v2992 = vadd.f32 %v2991, %v2985
        %v2993 = vadd.f32 %v2992, %v2987
        %v2994 = vadd.f32 %v2993, %v2989
        %v2995 = vrot.slane %v2994, 4
        %v2996 = vadd.f32 %v2994, %v2995
        %v2997 = vrot.slane %v2996, 2
        %v2998 = vadd.f32 %v2996, %v2997
        %v2999 = vrot.slane %v2998, 1
        %v3000 = vadd.f32 %v2998, %v2999
        %v3001 = vadd.f32 %v2982, %v2984
        %v3002 = vadd.f32 %v3001, %v2986
        %v3003 = vadd.f32 %v3002, %v2988
        %v3004 = vadd.f32 %v3003, %v2990
        %v3005 = vrot.slane %v3004, 4
        %v3006 = vadd.f32 %v3004, %v3005
        %v3007 = vrot.slane %v3006, 2
        %v3008 = vadd.f32 %v3006, %v3007
        %v3009 = vrot.slane %v3008, 1
        %v3010 = vadd.f32 %v3008, %v3009
        %v3011 = vmul.f32 %v2911, %v1685
        %v3012 = vmul.f32 %v2912, %v2199
        %v3013 = vmul.f32 %v2913, %v1688
        %v3014 = vmul.f32 %v2914, %v2202
        %v3015 = vmul.f32 %v2915, %v1691
        %v3016 = vmul.f32 %v2916, %v2205
        %v3017 = vmul.f32 %v2917, %v1694
        %v3018 = vmul.f32 %v2918, %v2208
        %v3019 = vmul.f32 %v2919, %v1697
        %v3020 = vmul.f32 %v2920, %v2211
        %v3021 = vadd.f32 %v3011, %v3013
        %v3022 = vadd.f32 %v3021, %v3015
        %v3023 = vadd.f32 %v3022, %v3017
        %v3024 = vadd.f32 %v3023, %v3019
        %v3025 = vrot.slane %v3024, 4
        %v3026 = vadd.f32 %v3024, %v3025
        %v3027 = vrot.slane %v3026, 2
        %v3028 = vadd.f32 %v3026, %v3027
        %v3029 = vrot.slane %v3028, 1
        %v3030 = vadd.f32 %v3028, %v3029
        %v3031 = vadd.f32 %v3012, %v3014
        %v3032 = vadd.f32 %v3031, %v3016
        %v3033 = vadd.f32 %v3032, %v3018
        %v3034 = vadd.f32 %v3033, %v3020
        %v3035 = vrot.slane %v3034, 4
        %v3036 = vadd.f32 %v3034, %v3035
        %v3037 = vrot.slane %v3036, 2
        %v3038 = vadd.f32 %v3036, %v3037
        %v3039 = vrot.slane %v3038, 1
        %v3040 = vadd.f32 %v3038, %v3039
        %v3041 = vmul.f32 %v2424, %v2521
        %v3042 = vmul.f32 %v2426, %v2522
        %v3043 = vmul.f32 %v2428, %v2523
        %v3044 = vmul.f32 %v2430, %v2524
        %v3045 = vmul.f32 %v2432, %v2525
        %v3046 = vmul.f32 %v2434, %v2526
        %v3047 = vmul.f32 %v2436, %v2527
        %v3048 = vmul.f32 %v2438, %v2528
        %v3049 = vmul.f32 %v2440, %v2529
        %v3050 = vmul.f32 %v2442, %v2530
        %v3051 = vadd.f32 %v3041, %v3043
        %v3052 = vadd.f32 %v3051, %v3045
        %v3053 = vadd.f32 %v3052, %v3047
        %v3054 = vadd.f32 %v3053, %v3049
        %v3055 = vrot.slane %v3054, 4
        %v3056 = vadd.f32 %v3054, %v3055
        %v3057 = vrot.slane %v3056, 2
        %v3058 = vadd.f32 %v3056, %v3057
        %v3059 = vrot.slane %v3058, 1
        %v3060 = vadd.f32 %v3058, %v3059
        %v3061 = vadd.f32 %v3042, %v3044
        %v3062 = vadd.f32 %v3061, %v3046
        %v3063 = vadd.f32 %v3062, %v3048
        %v3064 = vadd.f32 %v3063, %v3050
        %v3065 = vrot.slane %v3064, 4
        %v3066 = vadd.f32 %v3064, %v3065
        %v3067 = vrot.slane %v3066, 2
        %v3068 = vadd.f32 %v3066, %v3067
        %v3069 = vrot.slane %v3068, 1
        %v3070 = vadd.f32 %v3068, %v3069
        %v3071 = vmul.f32 %v3060, %v2479
        %v3072 = vmul.f32 %v3070, %v2480
        %v3073 = vrcp.pop %v3060
        %v3074 = vrcp.pop %v3070
        %v3075 = vmul.f32 %v3060, %v3073
        %v3076 = vmul.f32 %v3070, %v3074
        %v3077 = vsub.f32 2.0, %v3075
        %v3078 = vsub.f32 2.0, %v3076
        %v3079 = vmul.f32 %v3073, %v3077
        %v3080 = vmul.f32 %v3074, %v3078
        %v3081 = vmul.f32 %v3041, %v3079
        %v3082 = vmul.f32 %v3042, %v3080
        %v3083 = vmul.f32 %v3043, %v3079
        %v3084 = vmul.f32 %v3044, %v3080
        %v3085 = vmul.f32 %v3045, %v3079
        %v3086 = vmul.f32 %v3046, %v3080
        %v3087 = vmul.f32 %v3047, %v3079
        %v3088 = vmul.f32 %v3048, %v3080
        %v3089 = vmul.f32 %v3049, %v3079
        %v3090 = vmul.f32 %v3050, %v3080
        %v3091 = vmul.f32 %v3081, %v1700
        %v3092 = vmul.f32 %v3082, %v2214
        %v3093 = vmul.f32 %v3083, %v1703
        %v3094 = vmul.f32 %v3084, %v2217
        %v3095 = vmul.f32 %v3085, %v1706
        %v3096 = vmul.f32 %v3086, %v2220
        %v3097 = vmul.f32 %v3087, %v1709
        %v3098 = vmul.f32 %v3088, %v2223
        %v3099 = vmul.f32 %v3089, %v1712
        %v3100 = vmul.f32 %v3090, %v2226
        %v3101 = vadd.f32 %v3091, %v3093
        %v3102 = vadd.f32 %v3101, %v3095
        %v3103 = vadd.f32 %v3102, %v3097
        %v3104 = vadd.f32 %v3103, %v3099
        %v3105 = vrot.slane %v3104, 4
        %v3106 = vadd.f32 %v3104, %v3105
        %v3107 = vrot.slane %v3106, 2
        %v3108 = vadd.f32 %v3106, %v3107
        %v3109 = vrot.slane %v3108, 1
        %v3110 = vadd.f32 %v3108, %v3109
        %v3111 = vadd.f32 %v3092, %v3094
        %v3112 = vadd.f32 %v3111, %v3096
        %v3113 = vadd.f32 %v3112, %v3098
        %v3114 = vadd.f32 %v3113, %v3100
        %v3115 = vrot.slane %v3114, 4
        %v3116 = vadd.f32 %v3114, %v3115
        %v3117 = vrot.slane %v3116, 2
        %v3118 = vadd.f32 %v3116, %v3117
        %v3119 = vrot.slane %v3118, 1
        %v3120 = vadd.f32 %v3118, %v3119
        %v3121 = vmul.f32 %v3081, %v1715
        %v3122 = vmul.f32 %v3082, %v2229
        %v3123 = vmul.f32 %v3083, %v1718
        %v3124 = vmul.f32 %v3084, %v2232
        %v3125 = vmul.f32 %v3085, %v1721
        %v3126 = vmul.f32 %v3086, %v2235
        %v3127 = vmul.f32 %v3087, %v1724
        %v3128 = vmul.f32 %v3088, %v2238
        %v3129 = vmul.f32 %v3089, %v1727
        %v3130 = vmul.f32 %v3090, %v2241
        %v3131 = vadd.f32 %v3121, %v3123
        %v3132 = vadd.f32 %v3131, %v3125
        %v3133 = vadd.f32 %v3132, %v3127
        %v3134 = vadd.f32 %v3133, %v3129
        %v3135 = vrot.slane %v3134, 4
        %v3136 = vadd.f32 %v3134, %v3135
        %v3137 = vrot.slane %v3136, 2
        %v3138 = vadd.f32 %v3136, %v3137
        %v3139 = vrot.slane %v3138, 1
        %v3140 = vadd.f32 %v3138, %v3139
        %v3141 = vadd.f32 %v3122, %v3124
        %v3142 = vadd.f32 %v3141, %v3126
        %v3143 = vadd.f32 %v3142, %v3128
        %v3144 = vadd.f32 %v3143, %v3130
        %v3145 = vrot.slane %v3144, 4
        %v3146 = vadd.f32 %v3144, %v3145
        %v3147 = vrot.slane %v3146, 2
        %v3148 = vadd.f32 %v3146, %v3147
        %v3149 = vrot.slane %v3148, 1
        %v3150 = vadd.f32 %v3148, %v3149
        %v3151 = vmul.f32 %v3081, %v1730
        %v3152 = vmul.f32 %v3082, %v2244
        %v3153 = vmul.f32 %v3083, %v1733
        %v3154 = vmul.f32 %v3084, %v2247
        %v3155 = vmul.f32 %v3085, %v1736
        %v3156 = vmul.f32 %v3086, %v2250
        %v3157 = vmul.f32 %v3087, %v1739
        %v3158 = vmul.f32 %v3088, %v2253
        %v3159 = vmul.f32 %v3089, %v1742
        %v3160 = vmul.f32 %v3090, %v2256
        %v3161 = vadd.f32 %v3151, %v3153
        %v3162 = vadd.f32 %v3161, %v3155
        %v3163 = vadd.f32 %v3162, %v3157
        %v3164 = vadd.f32 %v3163, %v3159
        %v3165 = vrot.slane %v3164, 4
        %v3166 = vadd.f32 %v3164, %v3165
        %v3167 = vrot.slane %v3166, 2
        %v3168 = vadd.f32 %v3166, %v3167
        %v3169 = vrot.slane %v3168, 1
        %v3170 = vadd.f32 %v3168, %v3169
        %v3171 = vadd.f32 %v3152, %v3154
        %v3172 = vadd.f32 %v3171, %v3156
        %v3173 = vadd.f32 %v3172, %v3158
        %v3174 = vadd.f32 %v3173, %v3160
        %v3175 = vrot.slane %v3174, 4
        %v3176 = vadd.f32 %v3174, %v3175
        %v3177 = vrot.slane %v3176, 2
        %v3178 = vadd.f32 %v3176, %v3177
        %v3179 = vrot.slane %v3178, 1
        %v3180 = vadd.f32 %v3178, %v3179
        %v3181 = vmul.f32 %v3081, %v1745
        %v3182 = vmul.f32 %v3082, %v2259
        %v3183 = vmul.f32 %v3083, %v1748
        %v3184 = vmul.f32 %v3084, %v2262
        %v3185 = vmul.f32 %v3085, %v1751
        %v3186 = vmul.f32 %v3086, %v2265
        %v3187 = vmul.f32 %v3087, %v1754
        %v3188 = vmul.f32 %v3088, %v2268
        %v3189 = vmul.f32 %v3089, %v1757
        %v3190 = vmul.f32 %v3090, %v2271
        %v3191 = vadd.f32 %v3181, %v3183
        %v3192 = vadd.f32 %v3191, %v3185
        %v3193 = vadd.f32 %v3192, %v3187
        %v3194 = vadd.f32 %v3193, %v3189
        %v3195 = vrot.slane %v3194, 4
        %v3196 = vadd.f32 %v3194, %v3195
        %v3197 = vrot.slane %v3196, 2
        %v3198 = vadd.f32 %v3196, %v3197
        %v3199 = vrot.slane %v3198, 1
        %v3200 = vadd.f32 %v3198, %v3199
        %v3201 = vadd.f32 %v3182, %v3184
        %v3202 = vadd.f32 %v3201, %v3186
        %v3203 = vadd.f32 %v3202, %v3188
        %v3204 = vadd.f32 %v3203, %v3190
        %v3205 = vrot.slane %v3204, 4
        %v3206 = vadd.f32 %v3204, %v3205
        %v3207 = vrot.slane %v3206, 2
        %v3208 = vadd.f32 %v3206, %v3207
        %v3209 = vrot.slane %v3208, 1
        %v3210 = vadd.f32 %v3208, %v3209
        %vm3211 = vcmask 1040384
        %v3212 = vsel %vm3211, %v2561, %v2731
        %v3213 = vsel %vm3211, %v2562, %v2732
        %vm3214 = vcmask 1041408
        %v3215 = vsel %vm3214, %v3212, %v2901
        %v3216 = vsel %vm3214, %v3213, %v2902
        %vm3217 = vcmask 1042432
        %v3218 = vsel %vm3217, %v3215, %v3071
        %v3219 = vsel %vm3217, %v3216, %v3072
        %v3222 = vrot.slane %v3219, 4
        %vm3223 = vcmask 1043456
        %v3224 = vsel %vm3223, %v3218, %v3222
        %3226 = vst [vmem:[%s385] sm:$0xff] %v3224
        %v3227 = vsel %vm3211, %v2600, %v2630
        %v3228 = vsel %vm3211, %v2610, %v2640
        %v3229 = vsel %vm3214, %v3227, %v2660
        %v3230 = vsel %vm3214, %v3228, %v2670
        %v3231 = vsel %vm3217, %v3229, %v2690
        %v3232 = vsel %vm3217, %v3230, %v2700
        %v3233 = vsel %vm3223, %v3231, %v2770
        %v3234 = vsel %vm3223, %v3232, %v2780
        %vm3235 = vcmask 1044480
        %v3236 = vsel %vm3235, %v3233, %v2800
        %v3237 = vsel %vm3235, %v3234, %v2810
        %vm3238 = vcmask 1045504
        %v3239 = vsel %vm3238, %v3236, %v2830
        %v3240 = vsel %vm3238, %v3237, %v2840
        %vm3241 = vcmask 1046528
        %v3242 = vsel %vm3241, %v3239, %v2860
        %v3243 = vsel %vm3241, %v3240, %v2870
        %v3244 = vsel %vm3211, %v2940, %v2970
        %v3245 = vsel %vm3211, %v2950, %v2980
        %v3246 = vsel %vm3214, %v3244, %v3000
        %v3247 = vsel %vm3214, %v3245, %v3010
        %v3248 = vsel %vm3217, %v3246, %v3030
        %v3249 = vsel %vm3217, %v3247, %v3040
        %v3250 = vsel %vm3223, %v3248, %v3110
        %v3251 = vsel %vm3223, %v3249, %v3120
        %v3252 = vsel %vm3235, %v3250, %v3140
        %v3253 = vsel %vm3235, %v3251, %v3150
        %v3254 = vsel %vm3238, %v3252, %v3170
        %v3255 = vsel %vm3238, %v3253, %v3180
        %v3256 = vsel %vm3241, %v3254, %v3200
        %v3257 = vsel %vm3241, %v3255, %v3210
        %3258 = vst [vmem:[%s378] sm:$0xff] %v3242
        %3259 = vst [vmem:[%s378 + $0x8] sm:$0xff] %v3243
        %3260 = vst [vmem:[%s378 + $0x10] sm:$0xff] %v3256
        %3261 = vst [vmem:[%s378 + $0x18] sm:$0xff] %v3257
        %s3262 = smul.u32 2, %s17
        %p3263 = scmp.lt.s32.totalorder %s3262, 3
        %s3264 = scalar_select %p3263, %s3262, 3
        %s3265 = smul.addr %s3264, 4
        %s3266 = scalar_lea.vmem %s4, %s3265
        %s3267 = sand.u32 %s145, 1
        %s3268 = sand.u32 %s145, 1
        %s3269 = smul.addr %s3268, 32
        %s3270 = scalar_lea.vmem [#allocation4], %s3269
        // Predicated region
        $region83: #{self_routing2d.1} parent=73 // pred_check
          %p3271 = pneg %p129
        $region84: #{self_routing2d.1} parent=73 // pred_check_branch
          %3273 = sbr.rel (%p3271) target = $region86
        $region85: #{self_routing2d.1} parent=73 // pred_region
          %s3274 = smul.u32 2, %s17
        $region86: #{self_routing2d.1} parent=73 // pred_fallthru
          _
        // Predicated region
        $region87: #{self_routing2d.1} parent=73 // pred_check
          %p3275 = pneg %p155
        $region88: #{self_routing2d.1} parent=73 // pred_check_branch
          %3277 = sbr.rel (%p3275) target = $region90
        $region89: #{self_routing2d.1} parent=73 // pred_region
          %s3278 = smul.u32 2, %s17
          %s3279 = smul.addr %s3278, 8
          %s3280 = scalar_lea.vmem %s5, %s3279
          // Predicated region
          $region91: #{self_routing2d.1} parent=89 // pred_check
            _
          $region92: #{self_routing2d.1} parent=89 // pred_check_branch
            %3282 = sbr.rel (0) target = $region94
          $region93: #{self_routing2d.1} parent=89 // pred_region
            // Predicated region
            $region95: #{self_routing2d.1} parent=93 // pred_check
              _
            $region96: #{self_routing2d.1} parent=93 // pred_check_branch
              %3284 = sbr.rel (0) target = $region98
            $region97: #{self_routing2d.1} parent=93 // pred_region
              loop: start=0, step=1, limit=1
              $region99: #{self_routing2d.1} parent=97 // loop_pre_header
                _
              $region100: #{self_routing2d.1} parent=97 // loop_header
                %s3286 = sphi 0, %s3290
                %p3287 = scmp.ge.s32.totalorder %s3286, 1
                %s3291 = sphi %s3270, %s3270
                %s3292 = sphi %s3280, %s3280
              $region101: #{self_routing2d.1} parent=97 // loop_header_branch
                %3289 = sbr.rel (%p3287) target = $region105
              $region102: #{self_routing2d.1} parent=97 // loop_body
                %v3293 = vld [vmem:[%s3291] sm:$0xff]
                %3294 = vst [vmem:[%s3292] sm:$0xff] %v3293
                %v3295 = vld [vmem:[%s3291 + $0x8] sm:$0xff]
                %3296 = vst [vmem:[%s3292 + $0x8] sm:$0xff] %v3295
                %v3297 = vld [vmem:[%s3291 + $0x10] sm:$0xff]
                %3298 = vst [vmem:[%s3292 + $0x20] sm:$0xff] %v3297
                %v3299 = vld [vmem:[%s3291 + $0x18] sm:$0xff]
                %3300 = vst [vmem:[%s3292 + $0x28] sm:$0xff] %v3299
              $region103: #{self_routing2d.1} parent=97 // loop_footer
                %s3290 = sadd.s32 1, %s3286
              $region104: #{self_routing2d.1} parent=97 // loop_footer_branch
                %3285 = sbr.rel target = $region100
              $region105: #{self_routing2d.1} parent=97 // loop_exit
                _
            $region98: #{self_routing2d.1} parent=93 // pred_fallthru
              _
            // Predicated region
            $region106: #{self_routing2d.1} parent=93 // pred_check
              _
            $region107: #{self_routing2d.1} parent=93 // pred_check_branch
              %3302 = sbr.rel target = $region109
            $region108: #{self_routing2d.1} parent=93 // pred_region
              _
            $region109: #{self_routing2d.1} parent=93 // pred_fallthru
              _
          $region94: #{self_routing2d.1} parent=89 // pred_fallthru
            _
          %3303 = vnop
        $region90: #{self_routing2d.1} parent=73 // pred_fallthru
          _
      $region74: #{self_routing2d.1} parent=5 // pred_fallthru
        _
      %p3304 = scmp.le.s32.totalorder 2, %s12
      // Predicated region
      $region110: #{self_routing2d.1} parent=5 // pred_check
        %p3305 = pneg %p3304
      $region111: #{self_routing2d.1} parent=5 // pred_check_branch
        %3307 = sbr.rel (%p3305) target = $region113
      $region112: #{self_routing2d.1} parent=5 // pred_region
        %s3308 = ssub.s32 %s12, 2
        // Predicated region
        $region114: #{self_routing2d.1} parent=112 // pred_check
          %p3309 = pneg %p135
        $region115: #{self_routing2d.1} parent=112 // pred_check_branch
          %3311 = sbr.rel (%p3309) target = $region117
        $region116: #{self_routing2d.1} parent=112 // pred_region
          %s3312 = smul.u32 2, %s18
          %p3313 = scmp.lt.s32.totalorder %s3312, 3
          %s3314 = scalar_select %p3313, %s3312, 3
          %s3315 = smul.addr %s3314, 4
          %s3316 = scalar_lea.vmem %s4, %s3315
        $region117: #{self_routing2d.1} parent=112 // pred_fallthru
          _
        // Predicated region
        $region118: #{self_routing2d.1} parent=112 // pred_check
          %p3317 = pneg %p161
        $region119: #{self_routing2d.1} parent=112 // pred_check_branch
          %3319 = sbr.rel (%p3317) target = $region121
        $region120: #{self_routing2d.1} parent=112 // pred_region
          %s3320 = sand.u32 %s146, 1
          %s3321 = sand.u32 %s146, 1
          %s3322 = smul.addr %s3321, 32
          %s3323 = scalar_lea.vmem [#allocation4], %s3322
        $region121: #{self_routing2d.1} parent=112 // pred_fallthru
          _
      $region113: #{self_routing2d.1} parent=5 // pred_fallthru
        _
    $region6: #{self_routing2d.1} parent=1 // loop_footer
      %s16 = sadd.s32 1, %s12
    $region7: #{self_routing2d.1} parent=1 // loop_footer_branch
      %11 = sbr.rel target = $region3
    $region8: #{self_routing2d.1} parent=1 // loop_exit
      _

</llo_original>
